<compile_context>
chip_gen: v7x
topology: tpu7x:2x2x1
jax: 0.10.0
libtpu: 0.0.40
codegen_flags: <defaults>
</compile_context>

<pallas_src>
import functools

import numpy as np
import jax
import jax.numpy as jnp
from jax.experimental import pallas as pl
from jax.experimental.pallas import tpu as pltpu


# ------------------------------ fused Block kernel ------------------------------

def _block_kernel(stride, H, W, Wp, Ho, Wo, *refs):
    (x_ref,
     dw1_ref, pw1_w, pw1_b,
     dw2_ref, pw2_w, pw2_b,
     dw3_ref, pw3_w, pw3_b,
     proj_w,
     o_ref,
     xp_ref, t1_ref, t2_ref, a3s_ref) = refs

    f32 = jnp.float32

    def zero_borders(scr):
        """Zero only the halo strips the depthwise taps read but the interior store
        never writes (top/bottom row + right zero columns).  Done every grid step:
        scratch persists across steps and, with the batch axis marked "parallel",
        a core's first step may not be program_id(0) == 0."""
        Hp, _, C = scr.shape
        scr[:, W:, :] = jnp.zeros((Hp, Wp - W, C), f32)          # right zero strip
        zrow = jnp.zeros((1, W, C), f32)
        scr[0:1, 0:W, :] = zrow                                  # top halo row
        scr[Hp - 1:Hp, 0:W, :] = zrow                            # bottom halo row

    def dw3x3(src_ref, dwp_ref, s, ho):
        """Depthwise 3x3 + bias.  src_ref is a zero-extended scratch with the valid
        plane at [1:H+1, 0:W]; row stride `s` is folded into the slab reads, and the
        W-direction halo taps come from pltpu.roll (the trailing zero columns wrap in
        as padding), so all loads/stores stay sublane-aligned."""
        C = src_ref.shape[2]
        wk = dwp_ref[...]                                        # (10, C): 9 taps + bias
        acc = None
        for ky in range(3):
            if s == 1:
                slab = src_ref[ky:ky + ho, :, :]                 # (ho, Wp, C)
            else:                                                # fold stride along rows
                slab = src_ref[pl.ds(ky, ho, s), :, :]           # rows ky, ky+s, ...
            center = slab[:, 0:W, :]                             # in[j]
            left = pltpu.roll(slab, 1, axis=1)[:, 0:W, :]        # in[j-1], zero col wraps in
            right = pltpu.roll(slab, Wp - 1, axis=1)[:, 0:W, :]  # in[j+1], zero col at j=W-1
            for kx, tap in ((0, left), (1, center), (2, right)):
                t = ky * 3 + kx
                contrib = tap * wk[t:t + 1, :].reshape(1, 1, C)
                acc = contrib if acc is None else acc + contrib
        return acc + wk[9:10, :].reshape(1, 1, C)                # (ho, W, C)

    def pointwise(y2d, w_ref, b_ref):
        """ReLU(y2d @ w + b); BN scale folded into w, shift into b.
        MXU operands in bf16, f32 accumulation."""
        z = jnp.dot(y2d.astype(jnp.bfloat16), w_ref[...],
                    preferred_element_type=f32)
        return jnp.maximum(z + b_ref[...], 0.0)

    cin = x_ref.shape[-1]
    cmid = pw1_w.shape[1]
    cout = o_ref.shape[-1]

    zero_borders(xp_ref)
    zero_borders(t1_ref)
    zero_borders(t2_ref)

    # stage the input into the zero-extended scratch (aligned, offset-0 column writes)
    xp_ref[1:H + 1, 0:W, :] = x_ref[...]

    # conv1: SeparableConv2d(Cin, Cmid) + BN + ReLU
    a1 = dw3x3(xp_ref, dw1_ref, 1, H)                            # (H, W, Cin)
    y1 = pointwise(a1.reshape(H * W, cin), pw1_w, pw1_b)
    t1_ref[1:H + 1, 0:W, :] = y1.reshape(H, W, cmid)

    # conv2: SeparableConv2d(Cmid, Cmid) + BN + ReLU
    a2 = dw3x3(t1_ref, dw2_ref, 1, H)
    y2 = pointwise(a2.reshape(H * W, cmid), pw2_w, pw2_b)
    t2_ref[1:H + 1, 0:W, :] = y2.reshape(H, W, cmid)

    # conv3: SeparableConv2d(Cmid, Cout, stride) + BN + ReLU
    # (row stride folded into the depthwise reads; columns subsampled before the matmul)
    a3_full = dw3x3(t2_ref, dw3_ref, stride, Ho)                 # (Ho, W, Cmid)
    if stride == 1:
        a3 = a3_full
    else:
        a3s_ref[...] = a3_full                                   # bounce to VMEM
        a3 = a3s_ref[:, pl.ds(0, Wo, stride), :]                 # strided column read
    y3 = pointwise(a3.reshape(Ho * Wo, cmid), pw3_w, pw3_b)      # (Ho*Wo, Cout)

    # projection (1x1 conv, stride, no bias) + residual add
    if stride == 1:
        xs = xp_ref[1:H + 1, 0:W, :]                             # (H, W, Cin)
    else:
        xs = xp_ref[1:H + 1, pl.ds(0, Wo, stride), :]            # strided columns
        xs = xs.reshape(Ho, stride, Wo, cin)[:, 0]               # strided rows (major dim)
    ident = jnp.dot(xs.reshape(Ho * Wo, cin).astype(jnp.bfloat16), proj_w[...],
                    preferred_element_type=f32)
    o_ref[...] = (y3 + ident).reshape(Ho, Wo, cout).astype(o_ref.dtype)


# ------------------------------ weight packing / wrapper ------------------------------

def _prep_weights(params):
    """Pack 19 tensors into 10: dw weight+bias -> (10, C); BN scale folded into the
    pointwise weight (then cast bf16 for the MXU); BN shift folded into the bias (f32)."""
    def sep_pack(sp, bn):
        dwp = jnp.concatenate([sp['dw_w'], sp['dw_b']], axis=0).astype(jnp.float32)
        s, t = bn
        pw_w = (sp['pw_w'] * s).astype(jnp.bfloat16)
        pw_b = (sp['pw_b'] * s + t).astype(jnp.float32)
        return [dwp, pw_w, pw_b]

    weights = []
    weights += sep_pack(params['sep1'], params['bn1'])
    weights += sep_pack(params['sep2'], params['bn2'])
    weights += sep_pack(params['sep3'], params['bn3'])
    weights.append(params['proj_w'].astype(jnp.bfloat16))
    return weights


def block_forward(x_nchw, params):
    """DFANet Block forward.  x_nchw: (N, Cin, H, W) f32 -> (N, Cout, Ho, Wo) f32."""
    stride = int(params['stride'])
    n, cin, h, w = x_nchw.shape
    cmid = params['sep1']['pw_w'].shape[1]
    cout = params['sep3']['pw_w'].shape[1]
    assert w % 8 == 0 and h % 8 == 0, "spatial dims must be multiples of 8"
    assert stride == 1 or (h % stride == 0 and w % stride == 0), \
        "TODO(synk): odd spatial extents with stride>1 not handled"
    ho, wo = h // stride, w // stride
    wp = w + 8  # zero-extended scratch width: trailing zero columns feed the roll halo

    x = jnp.transpose(x_nchw, (0, 2, 3, 1)).astype(jnp.float32)  # NCHW -> NHWC

    weights = _prep_weights(params)
    w_specs = [pl.BlockSpec(wt.shape, lambda b: (0, 0)) for wt in weights]

    kernel = functools.partial(_block_kernel, stride, h, w, wp, ho, wo)
    out = pl.pallas_call(
        kernel,
        out_shape=jax.ShapeDtypeStruct((n, ho, wo, cout), jnp.float32),
        grid=(n,),
        in_specs=[pl.BlockSpec((None, h, w, cin), lambda b: (b, 0, 0, 0))] + w_specs,
        out_specs=pl.BlockSpec((None, ho, wo, cout), lambda b: (b, 0, 0, 0)),
        scratch_shapes=[pltpu.VMEM((h + 2, wp, cin), jnp.float32),   # padded input
                        pltpu.VMEM((h + 2, wp, cmid), jnp.float32),  # padded conv1 out
                        pltpu.VMEM((h + 2, wp, cmid), jnp.float32),  # padded conv2 out
                        pltpu.VMEM((ho, w, cmid), jnp.float32)],     # conv3 subsample bounce
        compiler_params=pltpu.CompilerParams(
            dimension_semantics=("parallel",),
            # plenty for 16x16 planes; raise toward ~96 MiB on v5e/v6e (cap ~48 MiB on
            # v7x) before scaling H*W, or switch to the row-slab grid axis (see TODO).
            vmem_limit_bytes=32 * 1024 * 1024),
    )(x, *weights)
    return jnp.transpose(out, (0, 3, 1, 2))                          # NHWC -> NCHW


# ------------------------------ deterministic parameters ------------------------------

def init_block_params(key, cin, cout, stride, eps=1e-5):
    """Deterministic params.  BatchNorm folded to (scale, shift) [inference mode]."""
    mid = cout // 4
    ks = jax.random.split(key, 7)

    def sep(k, ci, co):
        kk = jax.random.split(k, 4)
        return dict(
            dw_w=jax.random.normal(kk[0], (9, ci), jnp.float32) / 3.0,
            dw_b=0.01 * jax.random.normal(kk[1], (1, ci), jnp.float32),
            pw_w=jax.random.normal(kk[2], (ci, co), jnp.float32) / float(np.sqrt(ci)),
            pw_b=0.01 * jax.random.normal(kk[3], (1, co), jnp.float32),
        )

    def bn(k, c):
        kk = jax.random.split(k, 4)
        gamma = 1.0 + 0.1 * jax.random.normal(kk[0], (1, c), jnp.float32)
        beta = 0.1 * jax.random.normal(kk[1], (1, c), jnp.float32)
        mean = 0.1 * jax.random.normal(kk[2], (1, c), jnp.float32)
        var = 0.5 + jax.random.uniform(kk[3], (1, c), jnp.float32)
        scale = gamma / jnp.sqrt(var + eps)
        return scale, beta - mean * scale

    return dict(
        stride=stride,
        sep1=sep(ks[0], cin, mid), bn1=bn(ks[1], mid),
        sep2=sep(ks[2], mid, mid), bn2=bn(ks[3], mid),
        sep3=sep(ks[4], mid, cout), bn3=bn(ks[5], cout),
        proj_w=jax.random.normal(ks[6], (cin, cout), jnp.float32) / float(np.sqrt(cin)),
    )


# ------------------------------ pure-JAX reference (for validation) ------------------------------

def _conv_ref(x, w, stride, pad, groups=1):
    return jax.lax.conv_general_dilated(
        x, w, window_strides=(stride, stride),
        padding=[(pad, pad), (pad, pad)],
        dimension_numbers=('NCHW', 'OIHW', 'NCHW'),
        feature_group_count=groups)


def block_reference(x, p):
    """XLA reference mirroring the PyTorch Block forward (NCHW, f32)."""
    def sepconv(x, sp, bn, stride):
        ci = x.shape[1]
        dw = jnp.transpose(sp['dw_w'].reshape(3, 3, ci), (2, 0, 1))[:, None, :, :]
        y = _conv_ref(x, dw, stride, 1, groups=ci) + sp['dw_b'].reshape(1, ci, 1, 1)
        pw = jnp.transpose(sp['pw_w'], (1, 0))[:, :, None, None]
        y = _conv_ref(y, pw, 1, 0) + sp['pw_b'].reshape(1, -1, 1, 1)
        s, t = bn
        y = y * s.reshape(1, -1, 1, 1) + t.reshape(1, -1, 1, 1)
        return jnp.maximum(y, 0.0)

    o = sepconv(x, p['sep1'], p['bn1'], 1)
    o = sepconv(o, p['sep2'], p['bn2'], 1)
    o = sepconv(o, p['sep3'], p['bn3'], p['stride'])
    pw = jnp.transpose(p['proj_w'], (1, 0))[:, :, None, None]
    return o + _conv_ref(x, pw, p['stride'], 0)


# ------------------------------ main ------------------------------

if __name__ == "__main__":
    key = jax.random.PRNGKey(0)
    kp1, kx1, kp2, kx2 = jax.random.split(key, 4)

    # Block with stride=2 (down-sampling), lane-dense channels: 128 -> 256.
    p2 = init_block_params(kp1, 128, 256, stride=2)
    x2 = jax.random.normal(kx1, (2, 128, 16, 16), jnp.float32)

    # Block with stride=1 (residual stage): 64 -> 64.
    p1 = init_block_params(kp2, 64, 64, stride=1)
    x1 = jax.random.normal(kx2, (2, 64, 16, 16), jnp.float32)

    fwd2 = jax.jit(lambda inp: block_forward(inp, p2))
    fwd1 = jax.jit(lambda inp: block_forward(inp, p1))

    out2 = jax.block_until_ready(fwd2(x2))
    out1 = jax.block_until_ready(fwd1(x1))

    assert out2.shape == (2, 256, 8, 8), out2.shape
    assert out1.shape == (2, 64, 16, 16), out1.shape
    assert bool(jnp.all(jnp.isfinite(out2))) and bool(jnp.all(jnp.isfinite(out1)))

    # correctness vs. the pure-JAX f32 (XLA conv) reference.
    # Expected error scale: the kernel uses bf16 MXU operands (f32 accumulation),
    # giving ~1e-2 of the output range in the worst case; 3e-2 keeps margin.
    for out, ref in ((out2, block_reference(x2, p2)), (out1, block_reference(x1, p1))):
        err = float(jnp.max(jnp.abs(out - ref)))
        scale = float(jnp.max(jnp.abs(ref))) + 1e-6
        assert err / scale < 3e-2, ("mismatch vs reference", err, scale)

    print("KERNEL_OK")
</pallas_src>

<mosaic_0001>
module attributes {stable_mosaic.version = 11 : i64} {
  func.func @_block_kernel(%arg0: i32, %arg1: memref<1x16x16x128xf32, #tpu.memory_space<vmem>>, %arg2: memref<10x128xf32, #tpu.memory_space<vmem>>, %arg3: memref<128x64xbf16, #tpu.memory_space<vmem>>, %arg4: memref<1x64xf32, #tpu.memory_space<vmem>>, %arg5: memref<10x64xf32, #tpu.memory_space<vmem>>, %arg6: memref<64x64xbf16, #tpu.memory_space<vmem>>, %arg7: memref<1x64xf32, #tpu.memory_space<vmem>>, %arg8: memref<10x64xf32, #tpu.memory_space<vmem>>, %arg9: memref<64x256xbf16, #tpu.memory_space<vmem>>, %arg10: memref<1x256xf32, #tpu.memory_space<vmem>>, %arg11: memref<128x256xbf16, #tpu.memory_space<vmem>>, %arg12: memref<1x8x8x256xf32, #tpu.memory_space<vmem>>, %arg13: memref<18x24x128xf32, #tpu.memory_space<vmem>>, %arg14: memref<18x24x64xf32, #tpu.memory_space<vmem>>, %arg15: memref<18x24x64xf32, #tpu.memory_space<vmem>>, %arg16: memref<8x16x64xf32, #tpu.memory_space<vmem>>) attributes {dimension_semantics = [#tpu.dimension_semantics<parallel>], iteration_bounds = array<i64: 2>, scalar_prefetch = 0 : i64, scratch_operands = 4 : i64, tpu.core_type = #tpu.core_type<tc>, window_params = [{transform_indices = @transform_0, window_bounds = array<i64: 1, 16, 16, 128>}, {pipeline_mode = #tpu.pipeline_mode<synchronous>, transform_indices = @transform_1, window_bounds = array<i64: 10, 128>}, {pipeline_mode = #tpu.pipeline_mode<synchronous>, transform_indices = @transform_2, window_bounds = array<i64: 128, 64>}, {pipeline_mode = #tpu.pipeline_mode<synchronous>, transform_indices = @transform_3, window_bounds = array<i64: 1, 64>}, {pipeline_mode = #tpu.pipeline_mode<synchronous>, transform_indices = @transform_4, window_bounds = array<i64: 10, 64>}, {pipeline_mode = #tpu.pipeline_mode<synchronous>, transform_indices = @transform_5, window_bounds = array<i64: 64, 64>}, {pipeline_mode = #tpu.pipeline_mode<synchronous>, transform_indices = @transform_6, window_bounds = array<i64: 1, 64>}, {pipeline_mode = #tpu.pipeline_mode<synchronous>, transform_indices = @transform_7, window_bounds = array<i64: 10, 64>}, {pipeline_mode = #tpu.pipeline_mode<synchronous>, transform_indices = @transform_8, window_bounds = array<i64: 64, 256>}, {pipeline_mode = #tpu.pipeline_mode<synchronous>, transform_indices = @transform_9, window_bounds = array<i64: 1, 256>}, {pipeline_mode = #tpu.pipeline_mode<synchronous>, transform_indices = @transform_10, window_bounds = array<i64: 128, 256>}, {transform_indices = @transform_11, window_bounds = array<i64: 1, 8, 8, 256>}]} {
    %cst = arith.constant 0.000000e+00 : f32
    %0 = vector.broadcast %cst : f32 to vector<18x8x128xf32>
    %c0 = arith.constant 0 : index
    %c16 = arith.constant 16 : index
    %c0_0 = arith.constant 0 : index
    %1 = vector.load %arg13[%c0, %c16, %c0_0] : memref<18x24x128xf32, #tpu.memory_space<vmem>>, vector<18x8x128xf32>
    tpu.vector_store %arg13[%c0, %c16, %c0_0], %0 {strides = array<i32>} : memref<18x24x128xf32, #tpu.memory_space<vmem>>, vector<18x8x128xf32>,
    %cst_1 = arith.constant 0.000000e+00 : f32
    %2 = vector.broadcast %cst_1 : f32 to vector<1x16x128xf32>
    %c0_2 = arith.constant 0 : index
    %c0_3 = arith.constant 0 : index
    %c0_4 = arith.constant 0 : index
    %3 = vector.load %arg13[%c0_2, %c0_3, %c0_4] : memref<18x24x128xf32, #tpu.memory_space<vmem>>, vector<1x16x128xf32>
    tpu.vector_store %arg13[%c0_2, %c0_3, %c0_4], %2 {strides = array<i32>} : memref<18x24x128xf32, #tpu.memory_space<vmem>>, vector<1x16x128xf32>,
    %c17 = arith.constant 17 : index
    %c0_5 = arith.constant 0 : index
    %c0_6 = arith.constant 0 : index
    %4 = vector.load %arg13[%c17, %c0_5, %c0_6] : memref<18x24x128xf32, #tpu.memory_space<vmem>>, vector<1x16x128xf32>
    tpu.vector_store %arg13[%c17, %c0_5, %c0_6], %2 {strides = array<i32>} : memref<18x24x128xf32, #tpu.memory_space<vmem>>, vector<1x16x128xf32>,
    %cst_7 = arith.constant 0.000000e+00 : f32
    %5 = vector.broadcast %cst_7 : f32 to vector<18x8x64xf32>
    %c0_8 = arith.constant 0 : index
    %c16_9 = arith.constant 16 : index
    %c0_10 = arith.constant 0 : index
    %6 = vector.load %arg14[%c0_8, %c16_9, %c0_10] : memref<18x24x64xf32, #tpu.memory_space<vmem>>, vector<18x8x64xf32>
    tpu.vector_store %arg14[%c0_8, %c16_9, %c0_10], %5 {strides = array<i32>} : memref<18x24x64xf32, #tpu.memory_space<vmem>>, vector<18x8x64xf32>,
    %cst_11 = arith.constant 0.000000e+00 : f32
    %7 = vector.broadcast %cst_11 : f32 to vector<1x16x64xf32>
    %c0_12 = arith.constant 0 : index
    %c0_13 = arith.constant 0 : index
    %c0_14 = arith.constant 0 : index
    %8 = vector.load %arg14[%c0_12, %c0_13, %c0_14] : memref<18x24x64xf32, #tpu.memory_space<vmem>>, vector<1x16x64xf32>
    tpu.vector_store %arg14[%c0_12, %c0_13, %c0_14], %7 {strides = array<i32>} : memref<18x24x64xf32, #tpu.memory_space<vmem>>, vector<1x16x64xf32>,
    %c17_15 = arith.constant 17 : index
    %c0_16 = arith.constant 0 : index
    %c0_17 = arith.constant 0 : index
    %9 = vector.load %arg14[%c17_15, %c0_16, %c0_17] : memref<18x24x64xf32, #tpu.memory_space<vmem>>, vector<1x16x64xf32>
    tpu.vector_store %arg14[%c17_15, %c0_16, %c0_17], %7 {strides = array<i32>} : memref<18x24x64xf32, #tpu.memory_space<vmem>>, vector<1x16x64xf32>,
    %cst_18 = arith.constant 0.000000e+00 : f32
    %10 = vector.broadcast %cst_18 : f32 to vector<18x8x64xf32>
    %c0_19 = arith.constant 0 : index
    %c16_20 = arith.constant 16 : index
    %c0_21 = arith.constant 0 : index
    %11 = vector.load %arg15[%c0_19, %c16_20, %c0_21] : memref<18x24x64xf32, #tpu.memory_space<vmem>>, vector<18x8x64xf32>
    tpu.vector_store %arg15[%c0_19, %c16_20, %c0_21], %10 {strides = array<i32>} : memref<18x24x64xf32, #tpu.memory_space<vmem>>, vector<18x8x64xf32>,
    %cst_22 = arith.constant 0.000000e+00 : f32
    %12 = vector.broadcast %cst_22 : f32 to vector<1x16x64xf32>
    %c0_23 = arith.constant 0 : index
    %c0_24 = arith.constant 0 : index
    %c0_25 = arith.constant 0 : index
    %13 = vector.load %arg15[%c0_23, %c0_24, %c0_25] : memref<18x24x64xf32, #tpu.memory_space<vmem>>, vector<1x16x64xf32>
    tpu.vector_store %arg15[%c0_23, %c0_24, %c0_25], %12 {strides = array<i32>} : memref<18x24x64xf32, #tpu.memory_space<vmem>>, vector<1x16x64xf32>,
    %c17_26 = arith.constant 17 : index
    %c0_27 = arith.constant 0 : index
    %c0_28 = arith.constant 0 : index
    %14 = vector.load %arg15[%c17_26, %c0_27, %c0_28] : memref<18x24x64xf32, #tpu.memory_space<vmem>>, vector<1x16x64xf32>
    tpu.vector_store %arg15[%c17_26, %c0_27, %c0_28], %12 {strides = array<i32>} : memref<18x24x64xf32, #tpu.memory_space<vmem>>, vector<1x16x64xf32>,
    %c0_29 = arith.constant 0 : index
    %c0_30 = arith.constant 0 : index
    %c0_31 = arith.constant 0 : index
    %c0_32 = arith.constant 0 : index
    %15 = vector.load %arg1[%c0_29, %c0_30, %c0_31, %c0_32] : memref<1x16x16x128xf32, #tpu.memory_space<vmem>>, vector<1x16x16x128xf32>
    %16 = vector.shape_cast %15 : vector<1x16x16x128xf32> to vector<16x16x128xf32>
    %c1 = arith.constant 1 : index
    %c0_33 = arith.constant 0 : index
    %c0_34 = arith.constant 0 : index
    %17 = vector.load %arg13[%c1, %c0_33, %c0_34] : memref<18x24x128xf32, #tpu.memory_space<vmem>>, vector<16x16x128xf32>
    tpu.vector_store %arg13[%c1, %c0_33, %c0_34], %16 {strides = array<i32>} : memref<18x24x128xf32, #tpu.memory_space<vmem>>, vector<16x16x128xf32>,
    %c0_35 = arith.constant 0 : index
    %c0_36 = arith.constant 0 : index
    %18 = vector.load %arg2[%c0_35, %c0_36] : memref<10x128xf32, #tpu.memory_space<vmem>>, vector<10x128xf32>
    %c0_37 = arith.constant 0 : index
    %c0_38 = arith.constant 0 : index
    %c0_39 = arith.constant 0 : index
    %19 = vector.load %arg13[%c0_37, %c0_38, %c0_39] : memref<18x24x128xf32, #tpu.memory_space<vmem>>, vector<16x24x128xf32>
    %20 = vector.extract_strided_slice %19 {offsets = [0, 0, 0], sizes = [16, 16, 128], strides = [1, 1, 1]} : vector<16x24x128xf32> to vector<16x16x128xf32>
    %c1_i32 = arith.constant 1 : i32
    %21 = tpu.dynamic_rotate %19 by %c1_i32 dim 1 : vector<16x24x128xf32>, i32 -> vector<16x24x128xf32>
    %22 = vector.extract_strided_slice %21 {offsets = [0, 0, 0], sizes = [16, 16, 128], strides = [1, 1, 1]} : vector<16x24x128xf32> to vector<16x16x128xf32>
    %c23_i32 = arith.constant 23 : i32
    %23 = tpu.dynamic_rotate %19 by %c23_i32 dim 1 : vector<16x24x128xf32>, i32 -> vector<16x24x128xf32>
    %24 = vector.extract_strided_slice %23 {offsets = [0, 0, 0], sizes = [16, 16, 128], strides = [1, 1, 1]} : vector<16x24x128xf32> to vector<16x16x128xf32>
    %25 = vector.extract_strided_slice %18 {offsets = [0, 0], sizes = [1, 128], strides = [1, 1]} : vector<10x128xf32> to vector<1x128xf32>
    %26 = vector.shape_cast %25 : vector<1x128xf32> to vector<1x1x128xf32>
    %27 = vector.broadcast %26 : vector<1x1x128xf32> to vector<16x16x128xf32>
    %28 = arith.mulf %22, %27 : vector<16x16x128xf32>
    %29 = vector.extract_strided_slice %18 {offsets = [1, 0], sizes = [1, 128], strides = [1, 1]} : vector<10x128xf32> to vector<1x128xf32>
    %30 = vector.shape_cast %29 : vector<1x128xf32> to vector<1x1x128xf32>
    %31 = vector.broadcast %30 : vector<1x1x128xf32> to vector<16x16x128xf32>
    %32 = arith.mulf %20, %31 : vector<16x16x128xf32>
    %33 = arith.addf %28, %32 : vector<16x16x128xf32>
    %34 = vector.extract_strided_slice %18 {offsets = [2, 0], sizes = [1, 128], strides = [1, 1]} : vector<10x128xf32> to vector<1x128xf32>
    %35 = vector.shape_cast %34 : vector<1x128xf32> to vector<1x1x128xf32>
    %36 = vector.broadcast %35 : vector<1x1x128xf32> to vector<16x16x128xf32>
    %37 = arith.mulf %24, %36 : vector<16x16x128xf32>
    %38 = arith.addf %33, %37 : vector<16x16x128xf32>
    %c1_40 = arith.constant 1 : index
    %c0_41 = arith.constant 0 : index
    %c0_42 = arith.constant 0 : index
    %39 = vector.load %arg13[%c1_40, %c0_41, %c0_42] : memref<18x24x128xf32, #tpu.memory_space<vmem>>, vector<16x24x128xf32>
    %40 = vector.extract_strided_slice %39 {offsets = [0, 0, 0], sizes = [16, 16, 128], strides = [1, 1, 1]} : vector<16x24x128xf32> to vector<16x16x128xf32>
    %c1_i32_43 = arith.constant 1 : i32
    %41 = tpu.dynamic_rotate %39 by %c1_i32_43 dim 1 : vector<16x24x128xf32>, i32 -> vector<16x24x128xf32>
    %42 = vector.extract_strided_slice %41 {offsets = [0, 0, 0], sizes = [16, 16, 128], strides = [1, 1, 1]} : vector<16x24x128xf32> to vector<16x16x128xf32>
    %c23_i32_44 = arith.constant 23 : i32
    %43 = tpu.dynamic_rotate %39 by %c23_i32_44 dim 1 : vector<16x24x128xf32>, i32 -> vector<16x24x128xf32>
    %44 = vector.extract_strided_slice %43 {offsets = [0, 0, 0], sizes = [16, 16, 128], strides = [1, 1, 1]} : vector<16x24x128xf32> to vector<16x16x128xf32>
    %45 = vector.extract_strided_slice %18 {offsets = [3, 0], sizes = [1, 128], strides = [1, 1]} : vector<10x128xf32> to vector<1x128xf32>
    %46 = vector.shape_cast %45 : vector<1x128xf32> to vector<1x1x128xf32>
    %47 = vector.broadcast %46 : vector<1x1x128xf32> to vector<16x16x128xf32>
    %48 = arith.mulf %42, %47 : vector<16x16x128xf32>
    %49 = arith.addf %38, %48 : vector<16x16x128xf32>
    %50 = vector.extract_strided_slice %18 {offsets = [4, 0], sizes = [1, 128], strides = [1, 1]} : vector<10x128xf32> to vector<1x128xf32>
    %51 = vector.shape_cast %50 : vector<1x128xf32> to vector<1x1x128xf32>
    %52 = vector.broadcast %51 : vector<1x1x128xf32> to vector<16x16x128xf32>
    %53 = arith.mulf %40, %52 : vector<16x16x128xf32>
    %54 = arith.addf %49, %53 : vector<16x16x128xf32>
    %55 = vector.extract_strided_slice %18 {offsets = [5, 0], sizes = [1, 128], strides = [1, 1]} : vector<10x128xf32> to vector<1x128xf32>
    %56 = vector.shape_cast %55 : vector<1x128xf32> to vector<1x1x128xf32>
    %57 = vector.broadcast %56 : vector<1x1x128xf32> to vector<16x16x128xf32>
    %58 = arith.mulf %44, %57 : vector<16x16x128xf32>
    %59 = arith.addf %54, %58 : vector<16x16x128xf32>
    %c2 = arith.constant 2 : index
    %c0_45 = arith.constant 0 : index
    %c0_46 = arith.constant 0 : index
    %60 = vector.load %arg13[%c2, %c0_45, %c0_46] : memref<18x24x128xf32, #tpu.memory_space<vmem>>, vector<16x24x128xf32>
    %61 = vector.extract_strided_slice %60 {offsets = [0, 0, 0], sizes = [16, 16, 128], strides = [1, 1, 1]} : vector<16x24x128xf32> to vector<16x16x128xf32>
    %c1_i32_47 = arith.constant 1 : i32
    %62 = tpu.dynamic_rotate %60 by %c1_i32_47 dim 1 : vector<16x24x128xf32>, i32 -> vector<16x24x128xf32>
    %63 = vector.extract_strided_slice %62 {offsets = [0, 0, 0], sizes = [16, 16, 128], strides = [1, 1, 1]} : vector<16x24x128xf32> to vector<16x16x128xf32>
    %c23_i32_48 = arith.constant 23 : i32
    %64 = tpu.dynamic_rotate %60 by %c23_i32_48 dim 1 : vector<16x24x128xf32>, i32 -> vector<16x24x128xf32>
    %65 = vector.extract_strided_slice %64 {offsets = [0, 0, 0], sizes = [16, 16, 128], strides = [1, 1, 1]} : vector<16x24x128xf32> to vector<16x16x128xf32>
    %66 = vector.extract_strided_slice %18 {offsets = [6, 0], sizes = [1, 128], strides = [1, 1]} : vector<10x128xf32> to vector<1x128xf32>
    %67 = vector.shape_cast %66 : vector<1x128xf32> to vector<1x1x128xf32>
    %68 = vector.broadcast %67 : vector<1x1x128xf32> to vector<16x16x128xf32>
    %69 = arith.mulf %63, %68 : vector<16x16x128xf32>
    %70 = arith.addf %59, %69 : vector<16x16x128xf32>
    %71 = vector.extract_strided_slice %18 {offsets = [7, 0], sizes = [1, 128], strides = [1, 1]} : vector<10x128xf32> to vector<1x128xf32>
    %72 = vector.shape_cast %71 : vector<1x128xf32> to vector<1x1x128xf32>
    %73 = vector.broadcast %72 : vector<1x1x128xf32> to vector<16x16x128xf32>
    %74 = arith.mulf %61, %73 : vector<16x16x128xf32>
    %75 = arith.addf %70, %74 : vector<16x16x128xf32>
    %76 = vector.extract_strided_slice %18 {offsets = [8, 0], sizes = [1, 128], strides = [1, 1]} : vector<10x128xf32> to vector<1x128xf32>
    %77 = vector.shape_cast %76 : vector<1x128xf32> to vector<1x1x128xf32>
    %78 = vector.broadcast %77 : vector<1x1x128xf32> to vector<16x16x128xf32>
    %79 = arith.mulf %65, %78 : vector<16x16x128xf32>
    %80 = arith.addf %75, %79 : vector<16x16x128xf32>
    %81 = vector.extract_strided_slice %18 {offsets = [9, 0], sizes = [1, 128], strides = [1, 1]} : vector<10x128xf32> to vector<1x128xf32>
    %82 = vector.shape_cast %81 : vector<1x128xf32> to vector<1x1x128xf32>
    %83 = vector.broadcast %82 : vector<1x1x128xf32> to vector<16x16x128xf32>
    %84 = arith.addf %80, %83 : vector<16x16x128xf32>
    %85 = vector.shape_cast %84 : vector<16x16x128xf32> to vector<256x128xf32>
    %86 = arith.truncf %85 : vector<256x128xf32> to vector<256x128xbf16>
    %c0_49 = arith.constant 0 : index
    %c0_50 = arith.constant 0 : index
    %87 = vector.load %arg3[%c0_49, %c0_50] : memref<128x64xbf16, #tpu.memory_space<vmem>>, vector<128x64xbf16>
    %cst_51 = arith.constant dense<0.000000e+00> : vector<256x64xf32>
    %88 = tpu.matmul %86, %87, %cst_51 {dimension_numbers = #tpu.dot_dimension_numbers<[1], [0], [0], [1], [0, 0, 1, 1], [], []>} : vector<256x128xbf16>, vector<128x64xbf16>, vector<256x64xf32> -> vector<256x64xf32>
    %c0_52 = arith.constant 0 : index
    %c0_53 = arith.constant 0 : index
    %89 = vector.load %arg4[%c0_52, %c0_53] : memref<1x64xf32, #tpu.memory_space<vmem>>, vector<1x64xf32>
    %90 = vector.broadcast %89 : vector<1x64xf32> to vector<256x64xf32>
    %91 = arith.addf %88, %90 : vector<256x64xf32>
    %cst_54 = arith.constant 0.000000e+00 : f32
    %92 = vector.broadcast %cst_54 : f32 to vector<256x64xf32>
    %93 = arith.maximumf %91, %92 : vector<256x64xf32>
    %94 = vector.shape_cast %93 : vector<256x64xf32> to vector<16x16x64xf32>
    %c1_55 = arith.constant 1 : index
    %c0_56 = arith.constant 0 : index
    %c0_57 = arith.constant 0 : index
    %95 = vector.load %arg14[%c1_55, %c0_56, %c0_57] : memref<18x24x64xf32, #tpu.memory_space<vmem>>, vector<16x16x64xf32>
    tpu.vector_store %arg14[%c1_55, %c0_56, %c0_57], %94 {strides = array<i32>} : memref<18x24x64xf32, #tpu.memory_space<vmem>>, vector<16x16x64xf32>,
    %c0_58 = arith.constant 0 : index
    %c0_59 = arith.constant 0 : index
    %96 = vector.load %arg5[%c0_58, %c0_59] : memref<10x64xf32, #tpu.memory_space<vmem>>, vector<10x64xf32>
    %c0_60 = arith.constant 0 : index
    %c0_61 = arith.constant 0 : index
    %c0_62 = arith.constant 0 : index
    %97 = vector.load %arg14[%c0_60, %c0_61, %c0_62] : memref<18x24x64xf32, #tpu.memory_space<vmem>>, vector<16x24x64xf32>
    %98 = vector.extract_strided_slice %97 {offsets = [0, 0, 0], sizes = [16, 16, 64], strides = [1, 1, 1]} : vector<16x24x64xf32> to vector<16x16x64xf32>
    %c1_i32_63 = arith.constant 1 : i32
    %99 = tpu.dynamic_rotate %97 by %c1_i32_63 dim 1 : vector<16x24x64xf32>, i32 -> vector<16x24x64xf32>
    %100 = vector.extract_strided_slice %99 {offsets = [0, 0, 0], sizes = [16, 16, 64], strides = [1, 1, 1]} : vector<16x24x64xf32> to vector<16x16x64xf32>
    %c23_i32_64 = arith.constant 23 : i32
    %101 = tpu.dynamic_rotate %97 by %c23_i32_64 dim 1 : vector<16x24x64xf32>, i32 -> vector<16x24x64xf32>
    %102 = vector.extract_strided_slice %101 {offsets = [0, 0, 0], sizes = [16, 16, 64], strides = [1, 1, 1]} : vector<16x24x64xf32> to vector<16x16x64xf32>
    %103 = vector.extract_strided_slice %96 {offsets = [0, 0], sizes = [1, 64], strides = [1, 1]} : vector<10x64xf32> to vector<1x64xf32>
    %104 = vector.shape_cast %103 : vector<1x64xf32> to vector<1x1x64xf32>
    %105 = vector.broadcast %104 : vector<1x1x64xf32> to vector<16x16x64xf32>
    %106 = arith.mulf %100, %105 : vector<16x16x64xf32>
    %107 = vector.extract_strided_slice %96 {offsets = [1, 0], sizes = [1, 64], strides = [1, 1]} : vector<10x64xf32> to vector<1x64xf32>
    %108 = vector.shape_cast %107 : vector<1x64xf32> to vector<1x1x64xf32>
    %109 = vector.broadcast %108 : vector<1x1x64xf32> to vector<16x16x64xf32>
    %110 = arith.mulf %98, %109 : vector<16x16x64xf32>
    %111 = arith.addf %106, %110 : vector<16x16x64xf32>
    %112 = vector.extract_strided_slice %96 {offsets = [2, 0], sizes = [1, 64], strides = [1, 1]} : vector<10x64xf32> to vector<1x64xf32>
    %113 = vector.shape_cast %112 : vector<1x64xf32> to vector<1x1x64xf32>
    %114 = vector.broadcast %113 : vector<1x1x64xf32> to vector<16x16x64xf32>
    %115 = arith.mulf %102, %114 : vector<16x16x64xf32>
    %116 = arith.addf %111, %115 : vector<16x16x64xf32>
    %c1_65 = arith.constant 1 : index
    %c0_66 = arith.constant 0 : index
    %c0_67 = arith.constant 0 : index
    %117 = vector.load %arg14[%c1_65, %c0_66, %c0_67] : memref<18x24x64xf32, #tpu.memory_space<vmem>>, vector<16x24x64xf32>
    %118 = vector.extract_strided_slice %117 {offsets = [0, 0, 0], sizes = [16, 16, 64], strides = [1, 1, 1]} : vector<16x24x64xf32> to vector<16x16x64xf32>
    %c1_i32_68 = arith.constant 1 : i32
    %119 = tpu.dynamic_rotate %117 by %c1_i32_68 dim 1 : vector<16x24x64xf32>, i32 -> vector<16x24x64xf32>
    %120 = vector.extract_strided_slice %119 {offsets = [0, 0, 0], sizes = [16, 16, 64], strides = [1, 1, 1]} : vector<16x24x64xf32> to vector<16x16x64xf32>
    %c23_i32_69 = arith.constant 23 : i32
    %121 = tpu.dynamic_rotate %117 by %c23_i32_69 dim 1 : vector<16x24x64xf32>, i32 -> vector<16x24x64xf32>
    %122 = vector.extract_strided_slice %121 {offsets = [0, 0, 0], sizes = [16, 16, 64], strides = [1, 1, 1]} : vector<16x24x64xf32> to vector<16x16x64xf32>
    %123 = vector.extract_strided_slice %96 {offsets = [3, 0], sizes = [1, 64], strides = [1, 1]} : vector<10x64xf32> to vector<1x64xf32>
    %124 = vector.shape_cast %123 : vector<1x64xf32> to vector<1x1x64xf32>
    %125 = vector.broadcast %124 : vector<1x1x64xf32> to vector<16x16x64xf32>
    %126 = arith.mulf %120, %125 : vector<16x16x64xf32>
    %127 = arith.addf %116, %126 : vector<16x16x64xf32>
    %128 = vector.extract_strided_slice %96 {offsets = [4, 0], sizes = [1, 64], strides = [1, 1]} : vector<10x64xf32> to vector<1x64xf32>
    %129 = vector.shape_cast %128 : vector<1x64xf32> to vector<1x1x64xf32>
    %130 = vector.broadcast %129 : vector<1x1x64xf32> to vector<16x16x64xf32>
    %131 = arith.mulf %118, %130 : vector<16x16x64xf32>
    %132 = arith.addf %127, %131 : vector<16x16x64xf32>
    %133 = vector.extract_strided_slice %96 {offsets = [5, 0], sizes = [1, 64], strides = [1, 1]} : vector<10x64xf32> to vector<1x64xf32>
    %134 = vector.shape_cast %133 : vector<1x64xf32> to vector<1x1x64xf32>
    %135 = vector.broadcast %134 : vector<1x1x64xf32> to vector<16x16x64xf32>
    %136 = arith.mulf %122, %135 : vector<16x16x64xf32>
    %137 = arith.addf %132, %136 : vector<16x16x64xf32>
    %c2_70 = arith.constant 2 : index
    %c0_71 = arith.constant 0 : index
    %c0_72 = arith.constant 0 : index
    %138 = vector.load %arg14[%c2_70, %c0_71, %c0_72] : memref<18x24x64xf32, #tpu.memory_space<vmem>>, vector<16x24x64xf32>
    %139 = vector.extract_strided_slice %138 {offsets = [0, 0, 0], sizes = [16, 16, 64], strides = [1, 1, 1]} : vector<16x24x64xf32> to vector<16x16x64xf32>
    %c1_i32_73 = arith.constant 1 : i32
    %140 = tpu.dynamic_rotate %138 by %c1_i32_73 dim 1 : vector<16x24x64xf32>, i32 -> vector<16x24x64xf32>
    %141 = vector.extract_strided_slice %140 {offsets = [0, 0, 0], sizes = [16, 16, 64], strides = [1, 1, 1]} : vector<16x24x64xf32> to vector<16x16x64xf32>
    %c23_i32_74 = arith.constant 23 : i32
    %142 = tpu.dynamic_rotate %138 by %c23_i32_74 dim 1 : vector<16x24x64xf32>, i32 -> vector<16x24x64xf32>
    %143 = vector.extract_strided_slice %142 {offsets = [0, 0, 0], sizes = [16, 16, 64], strides = [1, 1, 1]} : vector<16x24x64xf32> to vector<16x16x64xf32>
    %144 = vector.extract_strided_slice %96 {offsets = [6, 0], sizes = [1, 64], strides = [1, 1]} : vector<10x64xf32> to vector<1x64xf32>
    %145 = vector.shape_cast %144 : vector<1x64xf32> to vector<1x1x64xf32>
    %146 = vector.broadcast %145 : vector<1x1x64xf32> to vector<16x16x64xf32>
    %147 = arith.mulf %141, %146 : vector<16x16x64xf32>
    %148 = arith.addf %137, %147 : vector<16x16x64xf32>
    %149 = vector.extract_strided_slice %96 {offsets = [7, 0], sizes = [1, 64], strides = [1, 1]} : vector<10x64xf32> to vector<1x64xf32>
    %150 = vector.shape_cast %149 : vector<1x64xf32> to vector<1x1x64xf32>
    %151 = vector.broadcast %150 : vector<1x1x64xf32> to vector<16x16x64xf32>
    %152 = arith.mulf %139, %151 : vector<16x16x64xf32>
    %153 = arith.addf %148, %152 : vector<16x16x64xf32>
    %154 = vector.extract_strided_slice %96 {offsets = [8, 0], sizes = [1, 64], strides = [1, 1]} : vector<10x64xf32> to vector<1x64xf32>
    %155 = vector.shape_cast %154 : vector<1x64xf32> to vector<1x1x64xf32>
    %156 = vector.broadcast %155 : vector<1x1x64xf32> to vector<16x16x64xf32>
    %157 = arith.mulf %143, %156 : vector<16x16x64xf32>
    %158 = arith.addf %153, %157 : vector<16x16x64xf32>
    %159 = vector.extract_strided_slice %96 {offsets = [9, 0], sizes = [1, 64], strides = [1, 1]} : vector<10x64xf32> to vector<1x64xf32>
    %160 = vector.shape_cast %159 : vector<1x64xf32> to vector<1x1x64xf32>
    %161 = vector.broadcast %160 : vector<1x1x64xf32> to vector<16x16x64xf32>
    %162 = arith.addf %158, %161 : vector<16x16x64xf32>
    %163 = vector.shape_cast %162 : vector<16x16x64xf32> to vector<256x64xf32>
    %164 = arith.truncf %163 : vector<256x64xf32> to vector<256x64xbf16>
    %c0_75 = arith.constant 0 : index
    %c0_76 = arith.constant 0 : index
    %165 = vector.load %arg6[%c0_75, %c0_76] : memref<64x64xbf16, #tpu.memory_space<vmem>>, vector<64x64xbf16>
    %cst_77 = arith.constant dense<0.000000e+00> : vector<256x64xf32>
    %166 = tpu.matmul %164, %165, %cst_77 {dimension_numbers = #tpu.dot_dimension_numbers<[1], [0], [0], [1], [0, 0, 1, 1], [], []>} : vector<256x64xbf16>, vector<64x64xbf16>, vector<256x64xf32> -> vector<256x64xf32>
    %c0_78 = arith.constant 0 : index
    %c0_79 = arith.constant 0 : index
    %167 = vector.load %arg7[%c0_78, %c0_79] : memref<1x64xf32, #tpu.memory_space<vmem>>, vector<1x64xf32>
    %168 = vector.broadcast %167 : vector<1x64xf32> to vector<256x64xf32>
    %169 = arith.addf %166, %168 : vector<256x64xf32>
    %cst_80 = arith.constant 0.000000e+00 : f32
    %170 = vector.broadcast %cst_80 : f32 to vector<256x64xf32>
    %171 = arith.maximumf %169, %170 : vector<256x64xf32>
    %172 = vector.shape_cast %171 : vector<256x64xf32> to vector<16x16x64xf32>
    %c1_81 = arith.constant 1 : index
    %c0_82 = arith.constant 0 : index
    %c0_83 = arith.constant 0 : index
    %173 = vector.load %arg15[%c1_81, %c0_82, %c0_83] : memref<18x24x64xf32, #tpu.memory_space<vmem>>, vector<16x16x64xf32>
    tpu.vector_store %arg15[%c1_81, %c0_82, %c0_83], %172 {strides = array<i32>} : memref<18x24x64xf32, #tpu.memory_space<vmem>>, vector<16x16x64xf32>,
    %c0_84 = arith.constant 0 : index
    %c0_85 = arith.constant 0 : index
    %174 = vector.load %arg8[%c0_84, %c0_85] : memref<10x64xf32, #tpu.memory_space<vmem>>, vector<10x64xf32>
    %c0_86 = arith.constant 0 : index
    %c0_87 = arith.constant 0 : index
    %c0_88 = arith.constant 0 : index
    %175 = tpu.strided_load %arg15[%c0_86, %c0_87, %c0_88] {strides = array<i32: 2, 1, 1>} : memref<18x24x64xf32, #tpu.memory_space<vmem>>, vector<8x24x64xf32>
    %176 = vector.extract_strided_slice %175 {offsets = [0, 0, 0], sizes = [8, 16, 64], strides = [1, 1, 1]} : vector<8x24x64xf32> to vector<8x16x64xf32>
    %c1_i32_89 = arith.constant 1 : i32
    %177 = tpu.dynamic_rotate %175 by %c1_i32_89 dim 1 : vector<8x24x64xf32>, i32 -> vector<8x24x64xf32>
    %178 = vector.extract_strided_slice %177 {offsets = [0, 0, 0], sizes = [8, 16, 64], strides = [1, 1, 1]} : vector<8x24x64xf32> to vector<8x16x64xf32>
    %c23_i32_90 = arith.constant 23 : i32
    %179 = tpu.dynamic_rotate %175 by %c23_i32_90 dim 1 : vector<8x24x64xf32>, i32 -> vector<8x24x64xf32>
    %180 = vector.extract_strided_slice %179 {offsets = [0, 0, 0], sizes = [8, 16, 64], strides = [1, 1, 1]} : vector<8x24x64xf32> to vector<8x16x64xf32>
    %181 = vector.extract_strided_slice %174 {offsets = [0, 0], sizes = [1, 64], strides = [1, 1]} : vector<10x64xf32> to vector<1x64xf32>
    %182 = vector.shape_cast %181 : vector<1x64xf32> to vector<1x1x64xf32>
    %183 = vector.broadcast %182 : vector<1x1x64xf32> to vector<8x16x64xf32>
    %184 = arith.mulf %178, %183 : vector<8x16x64xf32>
    %185 = vector.extract_strided_slice %174 {offsets = [1, 0], sizes = [1, 64], strides = [1, 1]} : vector<10x64xf32> to vector<1x64xf32>
    %186 = vector.shape_cast %185 : vector<1x64xf32> to vector<1x1x64xf32>
    %187 = vector.broadcast %186 : vector<1x1x64xf32> to vector<8x16x64xf32>
    %188 = arith.mulf %176, %187 : vector<8x16x64xf32>
    %189 = arith.addf %184, %188 : vector<8x16x64xf32>
    %190 = vector.extract_strided_slice %174 {offsets = [2, 0], sizes = [1, 64], strides = [1, 1]} : vector<10x64xf32> to vector<1x64xf32>
    %191 = vector.shape_cast %190 : vector<1x64xf32> to vector<1x1x64xf32>
    %192 = vector.broadcast %191 : vector<1x1x64xf32> to vector<8x16x64xf32>
    %193 = arith.mulf %180, %192 : vector<8x16x64xf32>
    %194 = arith.addf %189, %193 : vector<8x16x64xf32>
    %c1_91 = arith.constant 1 : index
    %c0_92 = arith.constant 0 : index
    %c0_93 = arith.constant 0 : index
    %195 = tpu.strided_load %arg15[%c1_91, %c0_92, %c0_93] {strides = array<i32: 2, 1, 1>} : memref<18x24x64xf32, #tpu.memory_space<vmem>>, vector<8x24x64xf32>
    %196 = vector.extract_strided_slice %195 {offsets = [0, 0, 0], sizes = [8, 16, 64], strides = [1, 1, 1]} : vector<8x24x64xf32> to vector<8x16x64xf32>
    %c1_i32_94 = arith.constant 1 : i32
    %197 = tpu.dynamic_rotate %195 by %c1_i32_94 dim 1 : vector<8x24x64xf32>, i32 -> vector<8x24x64xf32>
    %198 = vector.extract_strided_slice %197 {offsets = [0, 0, 0], sizes = [8, 16, 64], strides = [1, 1, 1]} : vector<8x24x64xf32> to vector<8x16x64xf32>
    %c23_i32_95 = arith.constant 23 : i32
    %199 = tpu.dynamic_rotate %195 by %c23_i32_95 dim 1 : vector<8x24x64xf32>, i32 -> vector<8x24x64xf32>
    %200 = vector.extract_strided_slice %199 {offsets = [0, 0, 0], sizes = [8, 16, 64], strides = [1, 1, 1]} : vector<8x24x64xf32> to vector<8x16x64xf32>
    %201 = vector.extract_strided_slice %174 {offsets = [3, 0], sizes = [1, 64], strides = [1, 1]} : vector<10x64xf32> to vector<1x64xf32>
    %202 = vector.shape_cast %201 : vector<1x64xf32> to vector<1x1x64xf32>
    %203 = vector.broadcast %202 : vector<1x1x64xf32> to vector<8x16x64xf32>
    %204 = arith.mulf %198, %203 : vector<8x16x64xf32>
    %205 = arith.addf %194, %204 : vector<8x16x64xf32>
    %206 = vector.extract_strided_slice %174 {offsets = [4, 0], sizes = [1, 64], strides = [1, 1]} : vector<10x64xf32> to vector<1x64xf32>
    %207 = vector.shape_cast %206 : vector<1x64xf32> to vector<1x1x64xf32>
    %208 = vector.broadcast %207 : vector<1x1x64xf32> to vector<8x16x64xf32>
    %209 = arith.mulf %196, %208 : vector<8x16x64xf32>
    %210 = arith.addf %205, %209 : vector<8x16x64xf32>
    %211 = vector.extract_strided_slice %174 {offsets = [5, 0], sizes = [1, 64], strides = [1, 1]} : vector<10x64xf32> to vector<1x64xf32>
    %212 = vector.shape_cast %211 : vector<1x64xf32> to vector<1x1x64xf32>
    %213 = vector.broadcast %212 : vector<1x1x64xf32> to vector<8x16x64xf32>
    %214 = arith.mulf %200, %213 : vector<8x16x64xf32>
    %215 = arith.addf %210, %214 : vector<8x16x64xf32>
    %c2_96 = arith.constant 2 : index
    %c0_97 = arith.constant 0 : index
    %c0_98 = arith.constant 0 : index
    %216 = tpu.strided_load %arg15[%c2_96, %c0_97, %c0_98] {strides = array<i32: 2, 1, 1>} : memref<18x24x64xf32, #tpu.memory_space<vmem>>, vector<8x24x64xf32>
    %217 = vector.extract_strided_slice %216 {offsets = [0, 0, 0], sizes = [8, 16, 64], strides = [1, 1, 1]} : vector<8x24x64xf32> to vector<8x16x64xf32>
    %c1_i32_99 = arith.constant 1 : i32
    %218 = tpu.dynamic_rotate %216 by %c1_i32_99 dim 1 : vector<8x24x64xf32>, i32 -> vector<8x24x64xf32>
    %219 = vector.extract_strided_slice %218 {offsets = [0, 0, 0], sizes = [8, 16, 64], strides = [1, 1, 1]} : vector<8x24x64xf32> to vector<8x16x64xf32>
    %c23_i32_100 = arith.constant 23 : i32
    %220 = tpu.dynamic_rotate %216 by %c23_i32_100 dim 1 : vector<8x24x64xf32>, i32 -> vector<8x24x64xf32>
    %221 = vector.extract_strided_slice %220 {offsets = [0, 0, 0], sizes = [8, 16, 64], strides = [1, 1, 1]} : vector<8x24x64xf32> to vector<8x16x64xf32>
    %222 = vector.extract_strided_slice %174 {offsets = [6, 0], sizes = [1, 64], strides = [1, 1]} : vector<10x64xf32> to vector<1x64xf32>
    %223 = vector.shape_cast %222 : vector<1x64xf32> to vector<1x1x64xf32>
    %224 = vector.broadcast %223 : vector<1x1x64xf32> to vector<8x16x64xf32>
    %225 = arith.mulf %219, %224 : vector<8x16x64xf32>
    %226 = arith.addf %215, %225 : vector<8x16x64xf32>
    %227 = vector.extract_strided_slice %174 {offsets = [7, 0], sizes = [1, 64], strides = [1, 1]} : vector<10x64xf32> to vector<1x64xf32>
    %228 = vector.shape_cast %227 : vector<1x64xf32> to vector<1x1x64xf32>
    %229 = vector.broadcast %228 : vector<1x1x64xf32> to vector<8x16x64xf32>
    %230 = arith.mulf %217, %229 : vector<8x16x64xf32>
    %231 = arith.addf %226, %230 : vector<8x16x64xf32>
    %232 = vector.extract_strided_slice %174 {offsets = [8, 0], sizes = [1, 64], strides = [1, 1]} : vector<10x64xf32> to vector<1x64xf32>
    %233 = vector.shape_cast %232 : vector<1x64xf32> to vector<1x1x64xf32>
    %234 = vector.broadcast %233 : vector<1x1x64xf32> to vector<8x16x64xf32>
    %235 = arith.mulf %221, %234 : vector<8x16x64xf32>
    %236 = arith.addf %231, %235 : vector<8x16x64xf32>
    %237 = vector.extract_strided_slice %174 {offsets = [9, 0], sizes = [1, 64], strides = [1, 1]} : vector<10x64xf32> to vector<1x64xf32>
    %238 = vector.shape_cast %237 : vector<1x64xf32> to vector<1x1x64xf32>
    %239 = vector.broadcast %238 : vector<1x1x64xf32> to vector<8x16x64xf32>
    %240 = arith.addf %236, %239 : vector<8x16x64xf32>
    %c0_101 = arith.constant 0 : index
    %c0_102 = arith.constant 0 : index
    %c0_103 = arith.constant 0 : index
    %241 = vector.load %arg16[%c0_101, %c0_102, %c0_103] : memref<8x16x64xf32, #tpu.memory_space<vmem>>, vector<8x16x64xf32>
    tpu.vector_store %arg16[%c0_101, %c0_102, %c0_103], %240 {strides = array<i32>} : memref<8x16x64xf32, #tpu.memory_space<vmem>>, vector<8x16x64xf32>,
    %c0_104 = arith.constant 0 : index
    %c0_105 = arith.constant 0 : index
    %c0_106 = arith.constant 0 : index
    %242 = tpu.strided_load %arg16[%c0_104, %c0_105, %c0_106] {strides = array<i32: 1, 2, 1>} : memref<8x16x64xf32, #tpu.memory_space<vmem>>, vector<8x8x64xf32>
    %243 = vector.shape_cast %242 : vector<8x8x64xf32> to vector<64x64xf32>
    %244 = arith.truncf %243 : vector<64x64xf32> to vector<64x64xbf16>
    %c0_107 = arith.constant 0 : index
    %c0_108 = arith.constant 0 : index
    %245 = vector.load %arg9[%c0_107, %c0_108] : memref<64x256xbf16, #tpu.memory_space<vmem>>, vector<64x256xbf16>
    %cst_109 = arith.constant dense<0.000000e+00> : vector<64x256xf32>
    %246 = tpu.matmul %244, %245, %cst_109 {dimension_numbers = #tpu.dot_dimension_numbers<[1], [0], [0], [1], [0, 0, 1, 1], [], []>} : vector<64x64xbf16>, vector<64x256xbf16>, vector<64x256xf32> -> vector<64x256xf32>
    %c0_110 = arith.constant 0 : index
    %c0_111 = arith.constant 0 : index
    %247 = vector.load %arg10[%c0_110, %c0_111] : memref<1x256xf32, #tpu.memory_space<vmem>>, vector<1x256xf32>
    %248 = vector.broadcast %247 : vector<1x256xf32> to vector<64x256xf32>
    %249 = arith.addf %246, %248 : vector<64x256xf32>
    %cst_112 = arith.constant 0.000000e+00 : f32
    %250 = vector.broadcast %cst_112 : f32 to vector<64x256xf32>
    %251 = arith.maximumf %249, %250 : vector<64x256xf32>
    %c1_113 = arith.constant 1 : index
    %c0_114 = arith.constant 0 : index
    %c0_115 = arith.constant 0 : index
    %252 = tpu.strided_load %arg13[%c1_113, %c0_114, %c0_115] {strides = array<i32: 1, 2, 1>} : memref<18x24x128xf32, #tpu.memory_space<vmem>>, vector<16x8x128xf32>
    %253 = vector.shape_cast %252 : vector<16x8x128xf32> to vector<8x2x8x128xf32>
    %254 = vector.extract_strided_slice %253 {offsets = [0, 0, 0, 0], sizes = [8, 1, 8, 128], strides = [1, 1, 1, 1]} : vector<8x2x8x128xf32> to vector<8x1x8x128xf32>
    %255 = vector.shape_cast %254 : vector<8x1x8x128xf32> to vector<8x8x128xf32>
    %256 = vector.shape_cast %255 : vector<8x8x128xf32> to vector<64x128xf32>
    %257 = arith.truncf %256 : vector<64x128xf32> to vector<64x128xbf16>
    %c0_116 = arith.constant 0 : index
    %c0_117 = arith.constant 0 : index
    %258 = vector.load %arg11[%c0_116, %c0_117] : memref<128x256xbf16, #tpu.memory_space<vmem>>, vector<128x256xbf16>
    %cst_118 = arith.constant dense<0.000000e+00> : vector<64x256xf32>
    %259 = tpu.matmul %257, %258, %cst_118 {dimension_numbers = #tpu.dot_dimension_numbers<[1], [0], [0], [1], [0, 0, 1, 1], [], []>} : vector<64x128xbf16>, vector<128x256xbf16>, vector<64x256xf32> -> vector<64x256xf32>
    %260 = arith.addf %251, %259 : vector<64x256xf32>
    %261 = vector.shape_cast %260 : vector<64x256xf32> to vector<8x8x256xf32>
    %c0_119 = arith.constant 0 : index
    %c0_120 = arith.constant 0 : index
    %c0_121 = arith.constant 0 : index
    %c0_122 = arith.constant 0 : index
    %262 = vector.load %arg12[%c0_119, %c0_120, %c0_121, %c0_122] : memref<1x8x8x256xf32, #tpu.memory_space<vmem>>, vector<1x8x8x256xf32>
    %263 = vector.shape_cast %262 : vector<1x8x8x256xf32> to vector<8x8x256xf32>
    %264 = vector.shape_cast %261 : vector<8x8x256xf32> to vector<1x8x8x256xf32>
    tpu.vector_store %arg12[%c0_119, %c0_120, %c0_121, %c0_122], %264 {strides = array<i32>} : memref<1x8x8x256xf32, #tpu.memory_space<vmem>>, vector<1x8x8x256xf32>,
    return
  }
  func.func @transform_0(%arg0: i32) -> (i32, i32, i32, i32) {
    %c0_i32 = arith.constant 0 : i32
    %c0_i32_0 = arith.constant 0 : i32
    %c0_i32_1 = arith.constant 0 : i32
    %c0_i32_2 = arith.constant 0 : i32
    return %arg0, %c0_i32, %c0_i32_0, %c0_i32_1 : i32, i32, i32, i32
  }
  func.func @transform_1(%arg0: i32) -> (i32, i32) {
    %c0_i32 = arith.constant 0 : i32
    %c0_i32_0 = arith.constant 0 : i32
    %c0_i32_1 = arith.constant 0 : i32
    return %c0_i32, %c0_i32_0 : i32, i32
  }
  func.func @transform_2(%arg0: i32) -> (i32, i32) {
    %c0_i32 = arith.constant 0 : i32
    %c0_i32_0 = arith.constant 0 : i32
    %c0_i32_1 = arith.constant 0 : i32
    return %c0_i32, %c0_i32_0 : i32, i32
  }
  func.func @transform_3(%arg0: i32) -> (i32, i32) {
    %c0_i32 = arith.constant 0 : i32
    %c0_i32_0 = arith.constant 0 : i32
    %c0_i32_1 = arith.constant 0 : i32
    return %c0_i32, %c0_i32_0 : i32, i32
  }
  func.func @transform_4(%arg0: i32) -> (i32, i32) {
    %c0_i32 = arith.constant 0 : i32
    %c0_i32_0 = arith.constant 0 : i32
    %c0_i32_1 = arith.constant 0 : i32
    return %c0_i32, %c0_i32_0 : i32, i32
  }
  func.func @transform_5(%arg0: i32) -> (i32, i32) {
    %c0_i32 = arith.constant 0 : i32
    %c0_i32_0 = arith.constant 0 : i32
    %c0_i32_1 = arith.constant 0 : i32
    return %c0_i32, %c0_i32_0 : i32, i32
  }
  func.func @transform_6(%arg0: i32) -> (i32, i32) {
    %c0_i32 = arith.constant 0 : i32
    %c0_i32_0 = arith.constant 0 : i32
    %c0_i32_1 = arith.constant 0 : i32
    return %c0_i32, %c0_i32_0 : i32, i32
  }
  func.func @transform_7(%arg0: i32) -> (i32, i32) {
    %c0_i32 = arith.constant 0 : i32
    %c0_i32_0 = arith.constant 0 : i32
    %c0_i32_1 = arith.constant 0 : i32
    return %c0_i32, %c0_i32_0 : i32, i32
  }
  func.func @transform_8(%arg0: i32) -> (i32, i32) {
    %c0_i32 = arith.constant 0 : i32
    %c0_i32_0 = arith.constant 0 : i32
    %c0_i32_1 = arith.constant 0 : i32
    return %c0_i32, %c0_i32_0 : i32, i32
  }
  func.func @transform_9(%arg0: i32) -> (i32, i32) {
    %c0_i32 = arith.constant 0 : i32
    %c0_i32_0 = arith.constant 0 : i32
    %c0_i32_1 = arith.constant 0 : i32
    return %c0_i32, %c0_i32_0 : i32, i32
  }
  func.func @transform_10(%arg0: i32) -> (i32, i32) {
    %c0_i32 = arith.constant 0 : i32
    %c0_i32_0 = arith.constant 0 : i32
    %c0_i32_1 = arith.constant 0 : i32
    return %c0_i32, %c0_i32_0 : i32, i32
  }
  func.func @transform_11(%arg0: i32) -> (i32, i32, i32, i32) {
    %c0_i32 = arith.constant 0 : i32
    %c0_i32_0 = arith.constant 0 : i32
    %c0_i32_1 = arith.constant 0 : i32
    %c0_i32_2 = arith.constant 0 : i32
    return %arg0, %c0_i32, %c0_i32_0, %c0_i32_1 : i32, i32, i32, i32
  }
}

</mosaic_0001>

<llo_original>
// kernel: _lambda_.1
$region0: #{_lambda_.1}
  #allocation0 [shape = 'u32[]', space=smem, size = 0x4, offset = 0x4, fixed_abs, tag = 'smem constant byte address 0x4 - core index']
  #allocation1 [shape = 'u32[144,128]{1,0:T(1,128)}', space=vmem, size = 0x12000, scoped, tag = 'internal scratch']
  #allocation2 [shape = 'f32[18,24,128]{2,1,0:T(8,128)}', space=vmem, size = 0x36000, scoped, tag = 'scratch operand']
  #allocation3 [shape = 'f32[18,24,64]{2,1,0:T(8,128)}', space=vmem, size = 0x36000, scoped, tag = 'scratch operand']
  #allocation4 [shape = 'f32[18,24,64]{2,1,0:T(8,128)}', space=vmem, size = 0x36000, scoped, tag = 'scratch operand']
  #allocation5 [shape = 'f32[8,16,64]{2,1,0:T(8,128)}', space=vmem, size = 0x10000, scoped, tag = 'scratch operand']
  %s0 = inlined_call_operand.hbm [shape: f32[2,16,16,128], index: 0, kind: input, shape index: {}]
  %s1 = inlined_call_operand.vmem [shape: f32[10,128], index: 1, kind: input, shape index: {}]
  %s2 = inlined_call_operand.vmem [shape: bf16[128,64], index: 2, kind: input, shape index: {}]
  %s3 = inlined_call_operand.vmem [shape: f32[1,64], index: 3, kind: input, shape index: {}]
  %s4 = inlined_call_operand.vmem [shape: f32[10,64], index: 4, kind: input, shape index: {}]
  %s5 = inlined_call_operand.vmem [shape: bf16[64,64], index: 5, kind: input, shape index: {}]
  %s6 = inlined_call_operand.vmem [shape: f32[1,64], index: 6, kind: input, shape index: {}]
  %s7 = inlined_call_operand.vmem [shape: f32[10,64], index: 7, kind: input, shape index: {}]
  %s8 = inlined_call_operand.vmem [shape: bf16[64,256], index: 8, kind: input, shape index: {}]
  %s9 = inlined_call_operand.vmem [shape: f32[1,256], index: 9, kind: input, shape index: {}]
  %s10 = inlined_call_operand.vmem [shape: bf16[128,256], index: 10, kind: input, shape index: {}]
  %s11 = inlined_call_operand.hbm [shape: f32[2,8,8,256], index: 11, kind: output, shape index: {}]
  %s12 = sld [smem:[#allocation0]]
  $region81: #{_lambda_.1} parent=0
    _
  %s14 = ssub.s32 1, %s12
  %s15 = scalar_select 0, %s14, %s12
  $region1: #{_lambda_.1} parent=0
    #allocation6 [shape = 'u8[262144]{0}', space=vmem, size = 0x40000, scoped, tag = 'input window, operand 0']
    #allocation7 [shape = 's32[2]{0}', space=sflag, size = 0x8, scoped, tag = 'scoped memory for _lambda_.1']
    #allocation8 [shape = 's32[2]{0}', space=sflag, size = 0x8, scoped, tag = 'scoped memory for _lambda_.1']
    #allocation9 [shape = 'u8[131072]{0}', space=vmem, size = 0x20000, scoped, tag = 'output window, operand 0']
    %16 = vsyncpa [#allocation7], 0
    %s17 = scalar_lea.sflag [#allocation7], 1
    %18 = vsyncpa %s17, 0
    %19 = vsyncpa [#allocation8], 0
    %s20 = scalar_lea.sflag [#allocation8], 1
    %21 = vsyncpa %s20, 0
    loop: start=0, step=1, limit=4
    $region2: #{_lambda_.1} parent=1 // loop_pre_header
      _
    $region3: #{_lambda_.1} parent=1 // loop_header
      %s23 = sphi 0, %s27
      %p24 = scmp.ge.s32.totalorder %s23, 4
      %s33 = sphi 0, %s35
      %s36 = sphi 0, %s33
      %s37 = sphi 0, %s36
      %s53 = sphi 0, %s37
      %s57 = sphi 0, %s57
      %s59 = sphi 0, %s57
      %s60 = sphi 0, %s59
      %s74 = sphi 0, %s60
      %s78 = sphi 0, %s78
      %s80 = sphi 0, %s78
      %s81 = sphi 0, %s80
      %s95 = sphi 0, %s81
      %s99 = sphi 0, %s99
      %s101 = sphi 0, %s99
      %s102 = sphi 0, %s101
      %s116 = sphi 0, %s102
      %s120 = sphi 0, %s120
      %s122 = sphi 0, %s120
      %s123 = sphi 0, %s122
      %s137 = sphi 0, %s123
      %s141 = sphi 0, %s141
      %s143 = sphi 0, %s141
      %s144 = sphi 0, %s143
      %s158 = sphi 0, %s144
      %s162 = sphi 0, %s162
      %s164 = sphi 0, %s162
      %s165 = sphi 0, %s164
      %s179 = sphi 0, %s165
      %s183 = sphi 0, %s183
      %s185 = sphi 0, %s183
      %s186 = sphi 0, %s185
      %s200 = sphi 0, %s186
      %s204 = sphi 0, %s204
      %s206 = sphi 0, %s204
      %s207 = sphi 0, %s206
      %s221 = sphi 0, %s207
      %s225 = sphi 0, %s225
      %s227 = sphi 0, %s225
      %s228 = sphi 0, %s227
      %s242 = sphi 0, %s228
      %s246 = sphi 0, %s246
      %s248 = sphi 0, %s246
      %s249 = sphi 0, %s248
      %s263 = sphi 0, %s249
      %s269 = sphi 0, %s271
      %s272 = sphi 0, %s269
      %s273 = sphi 0, %s272
      %s289 = sphi 0, %s273
    $region4: #{_lambda_.1} parent=1 // loop_header_branch
      %26 = sbr.rel (%p24) target = $region8
    $region5: #{_lambda_.1} parent=1 // loop_body
      %s28 = ssub.s32 %s23, 1
      %s29 = ssub.s32 %s23, 2
      %s30 = sadd.s32 %s23, 1
      %s31 = ssub.s32 %s23, %s30
      %p32 = scmp.eq.s32.totalorder %s31, 0
      %s34 = sadd.s32 %s33, 1
      %s35 = scalar_select %p32, %s33, %s34
      %p38 = pneg %p32
      %p39 = scmp.eq.s32.totalorder %s23, 1
      %p40 = por %p38, %p39
      %p41 = scmp.ne.s32.totalorder %s33, %s36
      %p42 = scmp.eq.s32.totalorder %s23, 0
      %p43 = por %p41, %p42
      %p44 = scmp.ne.s32.totalorder %s33, %s36
      %p45 = scmp.eq.s32.totalorder %s28, 1
      %p46 = por %p44, %p45
      %p47 = scmp.ne.s32.totalorder %s36, %s37
      %p48 = scmp.eq.s32.totalorder %s28, 0
      %p49 = por %p47, %p48
      %p50 = scmp.ne.s32.totalorder %s36, %s37
      %p51 = scmp.eq.s32.totalorder %s29, 1
      %p52 = por %p50, %p51
      %p54 = scmp.ne.s32.totalorder %s37, %s53
      %p55 = scmp.eq.s32.totalorder %s29, 0
      %p56 = por %p54, %p55
      %s58 = sadd.s32 %s57, 1
      %p61 = scmp.eq.s32.totalorder %s23, 1
      %p62 = scmp.ne.s32.totalorder %s57, %s59
      %p63 = scmp.eq.s32.totalorder %s23, 0
      %p64 = por %p62, %p63
      %p65 = scmp.ne.s32.totalorder %s57, %s59
      %p66 = scmp.eq.s32.totalorder %s28, 1
      %p67 = por %p65, %p66
      %p68 = scmp.ne.s32.totalorder %s59, %s60
      %p69 = scmp.eq.s32.totalorder %s28, 0
      %p70 = por %p68, %p69
      %p71 = scmp.ne.s32.totalorder %s59, %s60
      %p72 = scmp.eq.s32.totalorder %s29, 1
      %p73 = por %p71, %p72
      %p75 = scmp.ne.s32.totalorder %s60, %s74
      %p76 = scmp.eq.s32.totalorder %s29, 0
      %p77 = por %p75, %p76
      %s79 = sadd.s32 %s78, 1
      %p82 = scmp.eq.s32.totalorder %s23, 1
      %p83 = scmp.ne.s32.totalorder %s78, %s80
      %p84 = scmp.eq.s32.totalorder %s23, 0
      %p85 = por %p83, %p84
      %p86 = scmp.ne.s32.totalorder %s78, %s80
      %p87 = scmp.eq.s32.totalorder %s28, 1
      %p88 = por %p86, %p87
      %p89 = scmp.ne.s32.totalorder %s80, %s81
      %p90 = scmp.eq.s32.totalorder %s28, 0
      %p91 = por %p89, %p90
      %p92 = scmp.ne.s32.totalorder %s80, %s81
      %p93 = scmp.eq.s32.totalorder %s29, 1
      %p94 = por %p92, %p93
      %p96 = scmp.ne.s32.totalorder %s81, %s95
      %p97 = scmp.eq.s32.totalorder %s29, 0
      %p98 = por %p96, %p97
      %s100 = sadd.s32 %s99, 1
      %p103 = scmp.eq.s32.totalorder %s23, 1
      %p104 = scmp.ne.s32.totalorder %s99, %s101
      %p105 = scmp.eq.s32.totalorder %s23, 0
      %p106 = por %p104, %p105
      %p107 = scmp.ne.s32.totalorder %s99, %s101
      %p108 = scmp.eq.s32.totalorder %s28, 1
      %p109 = por %p107, %p108
      %p110 = scmp.ne.s32.totalorder %s101, %s102
      %p111 = scmp.eq.s32.totalorder %s28, 0
      %p112 = por %p110, %p111
      %p113 = scmp.ne.s32.totalorder %s101, %s102
      %p114 = scmp.eq.s32.totalorder %s29, 1
      %p115 = por %p113, %p114
      %p117 = scmp.ne.s32.totalorder %s102, %s116
      %p118 = scmp.eq.s32.totalorder %s29, 0
      %p119 = por %p117, %p118
      %s121 = sadd.s32 %s120, 1
      %p124 = scmp.eq.s32.totalorder %s23, 1
      %p125 = scmp.ne.s32.totalorder %s120, %s122
      %p126 = scmp.eq.s32.totalorder %s23, 0
      %p127 = por %p125, %p126
      %p128 = scmp.ne.s32.totalorder %s120, %s122
      %p129 = scmp.eq.s32.totalorder %s28, 1
      %p130 = por %p128, %p129
      %p131 = scmp.ne.s32.totalorder %s122, %s123
      %p132 = scmp.eq.s32.totalorder %s28, 0
      %p133 = por %p131, %p132
      %p134 = scmp.ne.s32.totalorder %s122, %s123
      %p135 = scmp.eq.s32.totalorder %s29, 1
      %p136 = por %p134, %p135
      %p138 = scmp.ne.s32.totalorder %s123, %s137
      %p139 = scmp.eq.s32.totalorder %s29, 0
      %p140 = por %p138, %p139
      %s142 = sadd.s32 %s141, 1
      %p145 = scmp.eq.s32.totalorder %s23, 1
      %p146 = scmp.ne.s32.totalorder %s141, %s143
      %p147 = scmp.eq.s32.totalorder %s23, 0
      %p148 = por %p146, %p147
      %p149 = scmp.ne.s32.totalorder %s141, %s143
      %p150 = scmp.eq.s32.totalorder %s28, 1
      %p151 = por %p149, %p150
      %p152 = scmp.ne.s32.totalorder %s143, %s144
      %p153 = scmp.eq.s32.totalorder %s28, 0
      %p154 = por %p152, %p153
      %p155 = scmp.ne.s32.totalorder %s143, %s144
      %p156 = scmp.eq.s32.totalorder %s29, 1
      %p157 = por %p155, %p156
      %p159 = scmp.ne.s32.totalorder %s144, %s158
      %p160 = scmp.eq.s32.totalorder %s29, 0
      %p161 = por %p159, %p160
      %s163 = sadd.s32 %s162, 1
      %p166 = scmp.eq.s32.totalorder %s23, 1
      %p167 = scmp.ne.s32.totalorder %s162, %s164
      %p168 = scmp.eq.s32.totalorder %s23, 0
      %p169 = por %p167, %p168
      %p170 = scmp.ne.s32.totalorder %s162, %s164
      %p171 = scmp.eq.s32.totalorder %s28, 1
      %p172 = por %p170, %p171
      %p173 = scmp.ne.s32.totalorder %s164, %s165
      %p174 = scmp.eq.s32.totalorder %s28, 0
      %p175 = por %p173, %p174
      %p176 = scmp.ne.s32.totalorder %s164, %s165
      %p177 = scmp.eq.s32.totalorder %s29, 1
      %p178 = por %p176, %p177
      %p180 = scmp.ne.s32.totalorder %s165, %s179
      %p181 = scmp.eq.s32.totalorder %s29, 0
      %p182 = por %p180, %p181
      %s184 = sadd.s32 %s183, 1
      %p187 = scmp.eq.s32.totalorder %s23, 1
      %p188 = scmp.ne.s32.totalorder %s183, %s185
      %p189 = scmp.eq.s32.totalorder %s23, 0
      %p190 = por %p188, %p189
      %p191 = scmp.ne.s32.totalorder %s183, %s185
      %p192 = scmp.eq.s32.totalorder %s28, 1
      %p193 = por %p191, %p192
      %p194 = scmp.ne.s32.totalorder %s185, %s186
      %p195 = scmp.eq.s32.totalorder %s28, 0
      %p196 = por %p194, %p195
      %p197 = scmp.ne.s32.totalorder %s185, %s186
      %p198 = scmp.eq.s32.totalorder %s29, 1
      %p199 = por %p197, %p198
      %p201 = scmp.ne.s32.totalorder %s186, %s200
      %p202 = scmp.eq.s32.totalorder %s29, 0
      %p203 = por %p201, %p202
      %s205 = sadd.s32 %s204, 1
      %p208 = scmp.eq.s32.totalorder %s23, 1
      %p209 = scmp.ne.s32.totalorder %s204, %s206
      %p210 = scmp.eq.s32.totalorder %s23, 0
      %p211 = por %p209, %p210
      %p212 = scmp.ne.s32.totalorder %s204, %s206
      %p213 = scmp.eq.s32.totalorder %s28, 1
      %p214 = por %p212, %p213
      %p215 = scmp.ne.s32.totalorder %s206, %s207
      %p216 = scmp.eq.s32.totalorder %s28, 0
      %p217 = por %p215, %p216
      %p218 = scmp.ne.s32.totalorder %s206, %s207
      %p219 = scmp.eq.s32.totalorder %s29, 1
      %p220 = por %p218, %p219
      %p222 = scmp.ne.s32.totalorder %s207, %s221
      %p223 = scmp.eq.s32.totalorder %s29, 0
      %p224 = por %p222, %p223
      %s226 = sadd.s32 %s225, 1
      %p229 = scmp.eq.s32.totalorder %s23, 1
      %p230 = scmp.ne.s32.totalorder %s225, %s227
      %p231 = scmp.eq.s32.totalorder %s23, 0
      %p232 = por %p230, %p231
      %p233 = scmp.ne.s32.totalorder %s225, %s227
      %p234 = scmp.eq.s32.totalorder %s28, 1
      %p235 = por %p233, %p234
      %p236 = scmp.ne.s32.totalorder %s227, %s228
      %p237 = scmp.eq.s32.totalorder %s28, 0
      %p238 = por %p236, %p237
      %p239 = scmp.ne.s32.totalorder %s227, %s228
      %p240 = scmp.eq.s32.totalorder %s29, 1
      %p241 = por %p239, %p240
      %p243 = scmp.ne.s32.totalorder %s228, %s242
      %p244 = scmp.eq.s32.totalorder %s29, 0
      %p245 = por %p243, %p244
      %s247 = sadd.s32 %s246, 1
      %p250 = scmp.eq.s32.totalorder %s23, 1
      %p251 = scmp.ne.s32.totalorder %s246, %s248
      %p252 = scmp.eq.s32.totalorder %s23, 0
      %p253 = por %p251, %p252
      %p254 = scmp.ne.s32.totalorder %s246, %s248
      %p255 = scmp.eq.s32.totalorder %s28, 1
      %p256 = por %p254, %p255
      %p257 = scmp.ne.s32.totalorder %s248, %s249
      %p258 = scmp.eq.s32.totalorder %s28, 0
      %p259 = por %p257, %p258
      %p260 = scmp.ne.s32.totalorder %s248, %s249
      %p261 = scmp.eq.s32.totalorder %s29, 1
      %p262 = por %p260, %p261
      %p264 = scmp.ne.s32.totalorder %s249, %s263
      %p265 = scmp.eq.s32.totalorder %s29, 0
      %p266 = por %p264, %p265
      %s267 = ssub.s32 %s23, %s30
      %p268 = scmp.eq.s32.totalorder %s267, 0
      %s270 = sadd.s32 %s269, 1
      %s271 = scalar_select %p268, %s269, %s270
      %p274 = pneg %p268
      %p275 = scmp.eq.s32.totalorder %s23, 1
      %p276 = por %p274, %p275
      %p277 = scmp.ne.s32.totalorder %s269, %s272
      %p278 = scmp.eq.s32.totalorder %s23, 0
      %p279 = por %p277, %p278
      %p280 = scmp.ne.s32.totalorder %s269, %s272
      %p281 = scmp.eq.s32.totalorder %s28, 1
      %p282 = por %p280, %p281
      %p283 = scmp.ne.s32.totalorder %s272, %s273
      %p284 = scmp.eq.s32.totalorder %s28, 0
      %p285 = por %p283, %p284
      %p286 = scmp.ne.s32.totalorder %s272, %s273
      %p287 = scmp.eq.s32.totalorder %s29, 1
      %p288 = por %p286, %p287
      %p290 = scmp.ne.s32.totalorder %s273, %s289
      %p291 = scmp.eq.s32.totalorder %s29, 0
      %p292 = por %p290, %p291
      %p293 = scmp.le.s32.totalorder 1, %s23
      %p294 = scmp.lt.s32.totalorder %s23, 3
      %p295 = pnand %p293, %p294
      %p296 = pneg %p295
      // Predicated region
      $region9: #{_lambda_.1} parent=5 // pred_check
        _
      $region10: #{_lambda_.1} parent=5 // pred_check_branch
        %298 = sbr.rel (%p295) target = $region12
      $region11: #{_lambda_.1} parent=5 // pred_region
        %s299 = ssub.s32 %s23, 1
        // Predicated region
        $region13: #{_lambda_.1} parent=11 // pred_check
          %p300 = pneg %p70
        $region14: #{_lambda_.1} parent=11 // pred_check_branch
          %302 = sbr.rel (%p300) target = $region16
        $region15: #{_lambda_.1} parent=11 // pred_region
          _
        $region16: #{_lambda_.1} parent=11 // pred_fallthru
          _
        // Predicated region
        $region17: #{_lambda_.1} parent=11 // pred_check
          %p303 = pneg %p91
        $region18: #{_lambda_.1} parent=11 // pred_check_branch
          %305 = sbr.rel (%p303) target = $region20
        $region19: #{_lambda_.1} parent=11 // pred_region
          _
        $region20: #{_lambda_.1} parent=11 // pred_fallthru
          _
        // Predicated region
        $region21: #{_lambda_.1} parent=11 // pred_check
          %p306 = pneg %p112
        $region22: #{_lambda_.1} parent=11 // pred_check_branch
          %308 = sbr.rel (%p306) target = $region24
        $region23: #{_lambda_.1} parent=11 // pred_region
          _
        $region24: #{_lambda_.1} parent=11 // pred_fallthru
          _
        // Predicated region
        $region25: #{_lambda_.1} parent=11 // pred_check
          %p309 = pneg %p133
        $region26: #{_lambda_.1} parent=11 // pred_check_branch
          %311 = sbr.rel (%p309) target = $region28
        $region27: #{_lambda_.1} parent=11 // pred_region
          _
        $region28: #{_lambda_.1} parent=11 // pred_fallthru
          _
        // Predicated region
        $region29: #{_lambda_.1} parent=11 // pred_check
          %p312 = pneg %p154
        $region30: #{_lambda_.1} parent=11 // pred_check_branch
          %314 = sbr.rel (%p312) target = $region32
        $region31: #{_lambda_.1} parent=11 // pred_region
          _
        $region32: #{_lambda_.1} parent=11 // pred_fallthru
          _
        // Predicated region
        $region33: #{_lambda_.1} parent=11 // pred_check
          %p315 = pneg %p175
        $region34: #{_lambda_.1} parent=11 // pred_check_branch
          %317 = sbr.rel (%p315) target = $region36
        $region35: #{_lambda_.1} parent=11 // pred_region
          _
        $region36: #{_lambda_.1} parent=11 // pred_fallthru
          _
        // Predicated region
        $region37: #{_lambda_.1} parent=11 // pred_check
          %p318 = pneg %p196
        $region38: #{_lambda_.1} parent=11 // pred_check_branch
          %320 = sbr.rel (%p318) target = $region40
        $region39: #{_lambda_.1} parent=11 // pred_region
          _
        $region40: #{_lambda_.1} parent=11 // pred_fallthru
          _
        // Predicated region
        $region41: #{_lambda_.1} parent=11 // pred_check
          %p321 = pneg %p217
        $region42: #{_lambda_.1} parent=11 // pred_check_branch
          %323 = sbr.rel (%p321) target = $region44
        $region43: #{_lambda_.1} parent=11 // pred_region
          _
        $region44: #{_lambda_.1} parent=11 // pred_fallthru
          _
        // Predicated region
        $region45: #{_lambda_.1} parent=11 // pred_check
          %p324 = pneg %p238
        $region46: #{_lambda_.1} parent=11 // pred_check_branch
          %326 = sbr.rel (%p324) target = $region48
        $region47: #{_lambda_.1} parent=11 // pred_region
          _
        $region48: #{_lambda_.1} parent=11 // pred_fallthru
          _
        // Predicated region
        $region49: #{_lambda_.1} parent=11 // pred_check
          %p327 = pneg %p259
        $region50: #{_lambda_.1} parent=11 // pred_check_branch
          %329 = sbr.rel (%p327) target = $region52
        $region51: #{_lambda_.1} parent=11 // pred_region
          _
        $region52: #{_lambda_.1} parent=11 // pred_fallthru
          _
      $region12: #{_lambda_.1} parent=5 // pred_fallthru
        _
      %p330 = scmp.lt.s32.totalorder %s23, 2
      // Predicated region
      $region53: #{_lambda_.1} parent=5 // pred_check
        %p331 = pneg %p330
      $region54: #{_lambda_.1} parent=5 // pred_check_branch
        %333 = sbr.rel (%p331) target = $region56
      $region55: #{_lambda_.1} parent=5 // pred_region
        // Predicated region
        $region57: #{_lambda_.1} parent=55 // pred_check
          %p334 = pneg %p43
        $region58: #{_lambda_.1} parent=55 // pred_check_branch
          %336 = sbr.rel (%p334) target = $region60
        $region59: #{_lambda_.1} parent=55 // pred_region
          %s337 = sand.u32 %s33, 1
          %s338 = scalar_lea.sflag [#allocation7], %s337
          %s339 = sand.u32 %s33, 1
          %s340 = smul.addr %s339, 256
          %s341 = scalar_lea.vmem [#allocation6], %s340
          %s343 = ssub.s32 4096, 4096
          %344 = vsyncadd %s338, %s343
          %s345 = smul.addr %s23, 32
          %s346 = smul.addr %s345, 128
          %s347 = scalar_lea.hbm %s0, %s346
          %s348 = sshll.u32 %s341, 4
          %s349 = int_to_ptr.vmem [resolvable:$true] %s348
          %354 = dma.hbm_to_vmem [thread:$0]  %s347, 4096, %s349, %s338, 128, 128, 8
        $region60: #{_lambda_.1} parent=55 // pred_fallthru
          _
      $region56: #{_lambda_.1} parent=5 // pred_fallthru
        _
      %p355 = scmp.le.s32.totalorder 1, %s23
      %p356 = scmp.lt.s32.totalorder %s23, 3
      %p357 = pnand %p355, %p356
      %p358 = pneg %p357
      // Predicated region
      $region61: #{_lambda_.1} parent=5 // pred_check
        _
      $region62: #{_lambda_.1} parent=5 // pred_check_branch
        %360 = sbr.rel (%p357) target = $region64
      $region63: #{_lambda_.1} parent=5 // pred_region
        %s361 = ssub.s32 %s23, 1
        %s362 = sand.u32 %s36, 1
        %s363 = scalar_lea.sflag [#allocation7], %s362
        %s364 = sand.u32 %s36, 1
        %s365 = smul.addr %s364, 256
        %s366 = scalar_lea.vmem [#allocation6], %s365
        // Predicated region
        $region65: #{_lambda_.1} parent=63 // pred_check
          %p367 = pneg %p49
        $region66: #{_lambda_.1} parent=63 // pred_check_branch
          %369 = sbr.rel (%p367) target = $region68
        $region67: #{_lambda_.1} parent=63 // pred_region
          %370 = dma.done %s363, 4096
        $region68: #{_lambda_.1} parent=63 // pred_fallthru
          _
        %s371 = sand.u32 %s36, 1
        %s372 = scalar_lea.sflag [#allocation7], %s371
        %s373 = sand.u32 %s36, 1
        %s374 = smul.addr %s373, 256
        %s375 = scalar_lea.vmem [#allocation6], %s374
        %p376 = pneg %p49
        %p377 = pneg %p46
        %p378 = pneg %p70
        %p379 = pneg %p67
        %p380 = pneg %p91
        %p381 = pneg %p88
        %p382 = pneg %p112
        %p383 = pneg %p109
        %p384 = pneg %p133
        %p385 = pneg %p130
        %p386 = pneg %p154
        %p387 = pneg %p151
        %p388 = pneg %p175
        %p389 = pneg %p172
        %p390 = pneg %p196
        %p391 = pneg %p193
        %p392 = pneg %p217
        %p393 = pneg %p214
        %p394 = pneg %p238
        %p395 = pneg %p235
        %p396 = pneg %p259
        %p397 = pneg %p256
        %p398 = pneg %p285
        %p399 = pneg %p282
        %s400 = sand.u32 %s272, 1
        %s401 = scalar_lea.sflag [#allocation8], %s400
        %s402 = sand.u32 %s272, 1
        %s403 = smul.addr %s402, 128
        %s404 = scalar_lea.vmem [#allocation9], %s403
        %406 = vst [vmem:[#allocation2 + $0x10] sm:$0xff] 0.0
        %407 = vst [vmem:[#allocation2 + $0x28] sm:$0xff] 0.0
        %408 = vst [vmem:[#allocation2 + $0x40] sm:$0xff] 0.0
        %409 = vst [vmem:[#allocation2 + $0x58] sm:$0xff] 0.0
        %410 = vst [vmem:[#allocation2 + $0x70] sm:$0xff] 0.0
        %411 = vst [vmem:[#allocation2 + $0x88] sm:$0xff] 0.0
        %412 = vst [vmem:[#allocation2 + $0xa0] sm:$0xff] 0.0
        %413 = vst [vmem:[#allocation2 + $0xb8] sm:$0xff] 0.0
        %414 = vst [vmem:[#allocation2 + $0xd0] sm:$0xff] 0.0
        %415 = vst [vmem:[#allocation2 + $0xe8] sm:$0xff] 0.0
        %416 = vst [vmem:[#allocation2 + $0x100] sm:$0xff] 0.0
        %417 = vst [vmem:[#allocation2 + $0x118] sm:$0xff] 0.0
        %418 = vst [vmem:[#allocation2 + $0x130] sm:$0xff] 0.0
        %419 = vst [vmem:[#allocation2 + $0x148] sm:$0xff] 0.0
        %420 = vst [vmem:[#allocation2 + $0x160] sm:$0xff] 0.0
        %421 = vst [vmem:[#allocation2 + $0x178] sm:$0xff] 0.0
        %422 = vst [vmem:[#allocation2 + $0x190] sm:$0xff] 0.0
        %423 = vst [vmem:[#allocation2 + $0x1a8] sm:$0xff] 0.0
        %424 = vst [vmem:[#allocation2] sm:$0xff] 0.0
        %425 = vst [vmem:[#allocation2 + $0x8] sm:$0xff] 0.0
        %s426 = scalar_lea.vmem [#allocation2], 408
        %427 = vst [vmem:[%s426] sm:$0xff] 0.0
        %428 = vst [vmem:[%s426 + $0x8] sm:$0xff] 0.0
        %vm429 = vcmask 523264
        %430 = vst.msk [vmem:[#allocation3 + $0x10] sm:$0xff] %vm429, 0.0
        %431 = vst.msk [vmem:[#allocation3 + $0x28] sm:$0xff] %vm429, 0.0
        %432 = vst.msk [vmem:[#allocation3 + $0x40] sm:$0xff] %vm429, 0.0
        %433 = vst.msk [vmem:[#allocation3 + $0x58] sm:$0xff] %vm429, 0.0
        %434 = vst.msk [vmem:[#allocation3 + $0x70] sm:$0xff] %vm429, 0.0
        %435 = vst.msk [vmem:[#allocation3 + $0x88] sm:$0xff] %vm429, 0.0
        %436 = vst.msk [vmem:[#allocation3 + $0xa0] sm:$0xff] %vm429, 0.0
        %437 = vst.msk [vmem:[#allocation3 + $0xb8] sm:$0xff] %vm429, 0.0
        %438 = vst.msk [vmem:[#allocation3 + $0xd0] sm:$0xff] %vm429, 0.0
        %439 = vst.msk [vmem:[#allocation3 + $0xe8] sm:$0xff] %vm429, 0.0
        %440 = vst.msk [vmem:[#allocation3 + $0x100] sm:$0xff] %vm429, 0.0
        %441 = vst.msk [vmem:[#allocation3 + $0x118] sm:$0xff] %vm429, 0.0
        %442 = vst.msk [vmem:[#allocation3 + $0x130] sm:$0xff] %vm429, 0.0
        %443 = vst.msk [vmem:[#allocation3 + $0x148] sm:$0xff] %vm429, 0.0
        %444 = vst.msk [vmem:[#allocation3 + $0x160] sm:$0xff] %vm429, 0.0
        %445 = vst.msk [vmem:[#allocation3 + $0x178] sm:$0xff] %vm429, 0.0
        %446 = vst.msk [vmem:[#allocation3 + $0x190] sm:$0xff] %vm429, 0.0
        %447 = vst.msk [vmem:[#allocation3 + $0x1a8] sm:$0xff] %vm429, 0.0
        %448 = vst.msk [vmem:[#allocation3] sm:$0xff] %vm429, 0.0
        %449 = vst.msk [vmem:[#allocation3 + $0x8] sm:$0xff] %vm429, 0.0
        %s450 = scalar_lea.vmem [#allocation3], 408
        %451 = vst.msk [vmem:[%s450] sm:$0xff] %vm429, 0.0
        %452 = vst.msk [vmem:[%s450 + $0x8] sm:$0xff] %vm429, 0.0
        %453 = vst.msk [vmem:[#allocation4 + $0x10] sm:$0xff] %vm429, 0.0
        %454 = vst.msk [vmem:[#allocation4 + $0x28] sm:$0xff] %vm429, 0.0
        %455 = vst.msk [vmem:[#allocation4 + $0x40] sm:$0xff] %vm429, 0.0
        %456 = vst.msk [vmem:[#allocation4 + $0x58] sm:$0xff] %vm429, 0.0
        %457 = vst.msk [vmem:[#allocation4 + $0x70] sm:$0xff] %vm429, 0.0
        %458 = vst.msk [vmem:[#allocation4 + $0x88] sm:$0xff] %vm429, 0.0
        %459 = vst.msk [vmem:[#allocation4 + $0xa0] sm:$0xff] %vm429, 0.0
        %460 = vst.msk [vmem:[#allocation4 + $0xb8] sm:$0xff] %vm429, 0.0
        %461 = vst.msk [vmem:[#allocation4 + $0xd0] sm:$0xff] %vm429, 0.0
        %462 = vst.msk [vmem:[#allocation4 + $0xe8] sm:$0xff] %vm429, 0.0
        %463 = vst.msk [vmem:[#allocation4 + $0x100] sm:$0xff] %vm429, 0.0
        %464 = vst.msk [vmem:[#allocation4 + $0x118] sm:$0xff] %vm429, 0.0
        %465 = vst.msk [vmem:[#allocation4 + $0x130] sm:$0xff] %vm429, 0.0
        %466 = vst.msk [vmem:[#allocation4 + $0x148] sm:$0xff] %vm429, 0.0
        %467 = vst.msk [vmem:[#allocation4 + $0x160] sm:$0xff] %vm429, 0.0
        %468 = vst.msk [vmem:[#allocation4 + $0x178] sm:$0xff] %vm429, 0.0
        %469 = vst.msk [vmem:[#allocation4 + $0x190] sm:$0xff] %vm429, 0.0
        %470 = vst.msk [vmem:[#allocation4 + $0x1a8] sm:$0xff] %vm429, 0.0
        %471 = vst.msk [vmem:[#allocation4] sm:$0xff] %vm429, 0.0
        %472 = vst.msk [vmem:[#allocation4 + $0x8] sm:$0xff] %vm429, 0.0
        %s473 = scalar_lea.vmem [#allocation4], 408
        %474 = vst.msk [vmem:[%s473] sm:$0xff] %vm429, 0.0
        %475 = vst.msk [vmem:[%s473 + $0x8] sm:$0xff] %vm429, 0.0
        %v476 = vld [vmem:[%s366] sm:$0xff]
        %v477 = vld [vmem:[%s366 + $0x8] sm:$0xff]
        %v478 = vld [vmem:[%s366 + $0x10] sm:$0xff]
        %v479 = vld [vmem:[%s366 + $0x18] sm:$0xff]
        %v480 = vld [vmem:[%s366 + $0x20] sm:$0xff]
        %v481 = vld [vmem:[%s366 + $0x28] sm:$0xff]
        %v482 = vld [vmem:[%s366 + $0x30] sm:$0xff]
        %v483 = vld [vmem:[%s366 + $0x38] sm:$0xff]
        %v484 = vld [vmem:[%s366 + $0x40] sm:$0xff]
        %v485 = vld [vmem:[%s366 + $0x48] sm:$0xff]
        %v486 = vld [vmem:[%s366 + $0x50] sm:$0xff]
        %v487 = vld [vmem:[%s366 + $0x58] sm:$0xff]
        %v488 = vld [vmem:[%s366 + $0x60] sm:$0xff]
        %v489 = vld [vmem:[%s366 + $0x68] sm:$0xff]
        %v490 = vld [vmem:[%s366 + $0x70] sm:$0xff]
        %v491 = vld [vmem:[%s366 + $0x78] sm:$0xff]
        %v492 = vld [vmem:[%s366 + $0x80] sm:$0xff]
        %v493 = vld [vmem:[%s366 + $0x88] sm:$0xff]
        %v494 = vld [vmem:[%s366 + $0x90] sm:$0xff]
        %v495 = vld [vmem:[%s366 + $0x98] sm:$0xff]
        %v496 = vld [vmem:[%s366 + $0xa0] sm:$0xff]
        %v497 = vld [vmem:[%s366 + $0xa8] sm:$0xff]
        %v498 = vld [vmem:[%s366 + $0xb0] sm:$0xff]
        %v499 = vld [vmem:[%s366 + $0xb8] sm:$0xff]
        %v500 = vld [vmem:[%s366 + $0xc0] sm:$0xff]
        %v501 = vld [vmem:[%s366 + $0xc8] sm:$0xff]
        %v502 = vld [vmem:[%s366 + $0xd0] sm:$0xff]
        %v503 = vld [vmem:[%s366 + $0xd8] sm:$0xff]
        %v504 = vld [vmem:[%s366 + $0xe0] sm:$0xff]
        %v505 = vld [vmem:[%s366 + $0xe8] sm:$0xff]
        %v506 = vld [vmem:[%s366 + $0xf0] sm:$0xff]
        %v507 = vld [vmem:[%s366 + $0xf8] sm:$0xff]
        %s508 = scalar_lea.vmem [#allocation2], 24
        %509 = vst [vmem:[%s508] sm:$0xff] %v476
        %510 = vst [vmem:[%s508 + $0x8] sm:$0xff] %v477
        %511 = vst [vmem:[%s508 + $0x18] sm:$0xff] %v478
        %512 = vst [vmem:[%s508 + $0x20] sm:$0xff] %v479
        %513 = vst [vmem:[%s508 + $0x30] sm:$0xff] %v480
        %514 = vst [vmem:[%s508 + $0x38] sm:$0xff] %v481
        %515 = vst [vmem:[%s508 + $0x48] sm:$0xff] %v482
        %516 = vst [vmem:[%s508 + $0x50] sm:$0xff] %v483
        %517 = vst [vmem:[%s508 + $0x60] sm:$0xff] %v484
        %518 = vst [vmem:[%s508 + $0x68] sm:$0xff] %v485
        %519 = vst [vmem:[%s508 + $0x78] sm:$0xff] %v486
        %520 = vst [vmem:[%s508 + $0x80] sm:$0xff] %v487
        %521 = vst [vmem:[%s508 + $0x90] sm:$0xff] %v488
        %522 = vst [vmem:[%s508 + $0x98] sm:$0xff] %v489
        %523 = vst [vmem:[%s508 + $0xa8] sm:$0xff] %v490
        %524 = vst [vmem:[%s508 + $0xb0] sm:$0xff] %v491
        %525 = vst [vmem:[%s508 + $0xc0] sm:$0xff] %v492
        %526 = vst [vmem:[%s508 + $0xc8] sm:$0xff] %v493
        %527 = vst [vmem:[%s508 + $0xd8] sm:$0xff] %v494
        %528 = vst [vmem:[%s508 + $0xe0] sm:$0xff] %v495
        %529 = vst [vmem:[%s508 + $0xf0] sm:$0xff] %v496
        %530 = vst [vmem:[%s508 + $0xf8] sm:$0xff] %v497
        %531 = vst [vmem:[%s508 + $0x108] sm:$0xff] %v498
        %532 = vst [vmem:[%s508 + $0x110] sm:$0xff] %v499
        %533 = vst [vmem:[%s508 + $0x120] sm:$0xff] %v500
        %534 = vst [vmem:[%s508 + $0x128] sm:$0xff] %v501
        %535 = vst [vmem:[%s508 + $0x138] sm:$0xff] %v502
        %536 = vst [vmem:[%s508 + $0x140] sm:$0xff] %v503
        %537 = vst [vmem:[%s508 + $0x150] sm:$0xff] %v504
        %538 = vst [vmem:[%s508 + $0x158] sm:$0xff] %v505
        %539 = vst [vmem:[%s508 + $0x168] sm:$0xff] %v506
        %540 = vst [vmem:[%s508 + $0x170] sm:$0xff] %v507
        %v541 = vld [vmem:[%s1] sm:$0xff]
        %v542 = vld [vmem:[%s1 + $0x8] sm:$0x3]
        %v543 = vld [vmem:[#allocation2] sm:$0xff]
        %v544 = vld [vmem:[#allocation2 + $0x8] sm:$0xff]
        %v545 = vld [vmem:[#allocation2 + $0x10] sm:$0xff]
        %v546 = vld [vmem:[#allocation2 + $0x18] sm:$0xff]
        %v547 = vld [vmem:[#allocation2 + $0x20] sm:$0xff]
        %v548 = vld [vmem:[#allocation2 + $0x28] sm:$0xff]
        %v549 = vld [vmem:[#allocation2 + $0x30] sm:$0xff]
        %v550 = vld [vmem:[#allocation2 + $0x38] sm:$0xff]
        %v551 = vld [vmem:[#allocation2 + $0x40] sm:$0xff]
        %v552 = vld [vmem:[#allocation2 + $0x48] sm:$0xff]
        %v553 = vld [vmem:[#allocation2 + $0x50] sm:$0xff]
        %v554 = vld [vmem:[#allocation2 + $0x58] sm:$0xff]
        %v555 = vld [vmem:[#allocation2 + $0x60] sm:$0xff]
        %v556 = vld [vmem:[#allocation2 + $0x68] sm:$0xff]
        %v557 = vld [vmem:[#allocation2 + $0x70] sm:$0xff]
        %v558 = vld [vmem:[#allocation2 + $0x78] sm:$0xff]
        %v559 = vld [vmem:[#allocation2 + $0x80] sm:$0xff]
        %v560 = vld [vmem:[#allocation2 + $0x88] sm:$0xff]
        %v561 = vld [vmem:[#allocation2 + $0x90] sm:$0xff]
        %v562 = vld [vmem:[#allocation2 + $0x98] sm:$0xff]
        %v563 = vld [vmem:[#allocation2 + $0xa0] sm:$0xff]
        %v564 = vld [vmem:[#allocation2 + $0xa8] sm:$0xff]
        %v565 = vld [vmem:[#allocation2 + $0xb0] sm:$0xff]
        %v566 = vld [vmem:[#allocation2 + $0xb8] sm:$0xff]
        %v567 = vld [vmem:[#allocation2 + $0xc0] sm:$0xff]
        %v568 = vld [vmem:[#allocation2 + $0xc8] sm:$0xff]
        %v569 = vld [vmem:[#allocation2 + $0xd0] sm:$0xff]
        %v570 = vld [vmem:[#allocation2 + $0xd8] sm:$0xff]
        %v571 = vld [vmem:[#allocation2 + $0xe0] sm:$0xff]
        %v572 = vld [vmem:[#allocation2 + $0xe8] sm:$0xff]
        %v573 = vld [vmem:[#allocation2 + $0xf0] sm:$0xff]
        %v574 = vld [vmem:[#allocation2 + $0xf8] sm:$0xff]
        %v575 = vld [vmem:[#allocation2 + $0x100] sm:$0xff]
        %v576 = vld [vmem:[#allocation2 + $0x108] sm:$0xff]
        %v577 = vld [vmem:[#allocation2 + $0x110] sm:$0xff]
        %v578 = vld [vmem:[#allocation2 + $0x118] sm:$0xff]
        %v579 = vld [vmem:[#allocation2 + $0x120] sm:$0xff]
        %v580 = vld [vmem:[#allocation2 + $0x128] sm:$0xff]
        %v581 = vld [vmem:[#allocation2 + $0x130] sm:$0xff]
        %v582 = vld [vmem:[#allocation2 + $0x138] sm:$0xff]
        %v583 = vld [vmem:[#allocation2 + $0x140] sm:$0xff]
        %v584 = vld [vmem:[#allocation2 + $0x148] sm:$0xff]
        %v585 = vld [vmem:[#allocation2 + $0x150] sm:$0xff]
        %v586 = vld [vmem:[#allocation2 + $0x158] sm:$0xff]
        %v587 = vld [vmem:[#allocation2 + $0x160] sm:$0xff]
        %v588 = vld [vmem:[#allocation2 + $0x168] sm:$0xff]
        %v589 = vld [vmem:[#allocation2 + $0x170] sm:$0xff]
        %v590 = vld [vmem:[#allocation2 + $0x178] sm:$0xff]
        %v591 = vrot.slane %v543, 7
        %v592 = vrot.slane %v546, 7
        %v593 = vrot.slane %v549, 7
        %v594 = vrot.slane %v552, 7
        %v595 = vrot.slane %v555, 7
        %v596 = vrot.slane %v558, 7
        %v597 = vrot.slane %v561, 7
        %v598 = vrot.slane %v564, 7
        %v599 = vrot.slane %v567, 7
        %v600 = vrot.slane %v570, 7
        %v601 = vrot.slane %v573, 7
        %v602 = vrot.slane %v576, 7
        %v603 = vrot.slane %v579, 7
        %v604 = vrot.slane %v582, 7
        %v605 = vrot.slane %v585, 7
        %v606 = vrot.slane %v588, 7
        %v607 = vrot.slane %v544, 7
        %v608 = vrot.slane %v547, 7
        %v609 = vrot.slane %v550, 7
        %v610 = vrot.slane %v553, 7
        %v611 = vrot.slane %v556, 7
        %v612 = vrot.slane %v559, 7
        %v613 = vrot.slane %v562, 7
        %v614 = vrot.slane %v565, 7
        %v615 = vrot.slane %v568, 7
        %v616 = vrot.slane %v571, 7
        %v617 = vrot.slane %v574, 7
        %v618 = vrot.slane %v577, 7
        %v619 = vrot.slane %v580, 7
        %v620 = vrot.slane %v583, 7
        %v621 = vrot.slane %v586, 7
        %v622 = vrot.slane %v589, 7
        %v623 = vrot.slane %v545, 7
        %v624 = vrot.slane %v548, 7
        %v625 = vrot.slane %v551, 7
        %v626 = vrot.slane %v554, 7
        %v627 = vrot.slane %v557, 7
        %v628 = vrot.slane %v560, 7
        %v629 = vrot.slane %v563, 7
        %v630 = vrot.slane %v566, 7
        %v631 = vrot.slane %v569, 7
        %v632 = vrot.slane %v572, 7
        %v633 = vrot.slane %v575, 7
        %v634 = vrot.slane %v578, 7
        %v635 = vrot.slane %v581, 7
        %v636 = vrot.slane %v584, 7
        %v637 = vrot.slane %v587, 7
        %v638 = vrot.slane %v590, 7
        %v639 = vlaneseq
        %v640 = vshrl.u32 %v639, 7
        %vm641 = vcmp.lt.s32.totalorder %v640, 1
        %v642 = vsel %vm641, %v591, %v607
        %v643 = vsel %vm641, %v592, %v608
        %v644 = vsel %vm641, %v593, %v609
        %v645 = vsel %vm641, %v594, %v610
        %v646 = vsel %vm641, %v595, %v611
        %v647 = vsel %vm641, %v596, %v612
        %v648 = vsel %vm641, %v597, %v613
        %v649 = vsel %vm641, %v598, %v614
        %v650 = vsel %vm641, %v599, %v615
        %v651 = vsel %vm641, %v600, %v616
        %v652 = vsel %vm641, %v601, %v617
        %v653 = vsel %vm641, %v602, %v618
        %v654 = vsel %vm641, %v603, %v619
        %v655 = vsel %vm641, %v604, %v620
        %v656 = vsel %vm641, %v605, %v621
        %v657 = vsel %vm641, %v606, %v622
        %v658 = vsel %vm641, %v623, %v591
        %v659 = vsel %vm641, %v624, %v592
        %v660 = vsel %vm641, %v625, %v593
        %v661 = vsel %vm641, %v626, %v594
        %v662 = vsel %vm641, %v627, %v595
        %v663 = vsel %vm641, %v628, %v596
        %v664 = vsel %vm641, %v629, %v597
        %v665 = vsel %vm641, %v630, %v598
        %v666 = vsel %vm641, %v631, %v599
        %v667 = vsel %vm641, %v632, %v600
        %v668 = vsel %vm641, %v633, %v601
        %v669 = vsel %vm641, %v634, %v602
        %v670 = vsel %vm641, %v635, %v603
        %v671 = vsel %vm641, %v636, %v604
        %v672 = vsel %vm641, %v637, %v605
        %v673 = vsel %vm641, %v638, %v606
        %v674 = vrot.slane %v543, 1
        %v675 = vrot.slane %v546, 1
        %v676 = vrot.slane %v549, 1
        %v677 = vrot.slane %v552, 1
        %v678 = vrot.slane %v555, 1
        %v679 = vrot.slane %v558, 1
        %v680 = vrot.slane %v561, 1
        %v681 = vrot.slane %v564, 1
        %v682 = vrot.slane %v567, 1
        %v683 = vrot.slane %v570, 1
        %v684 = vrot.slane %v573, 1
        %v685 = vrot.slane %v576, 1
        %v686 = vrot.slane %v579, 1
        %v687 = vrot.slane %v582, 1
        %v688 = vrot.slane %v585, 1
        %v689 = vrot.slane %v588, 1
        %v690 = vrot.slane %v544, 1
        %v691 = vrot.slane %v547, 1
        %v692 = vrot.slane %v550, 1
        %v693 = vrot.slane %v553, 1
        %v694 = vrot.slane %v556, 1
        %v695 = vrot.slane %v559, 1
        %v696 = vrot.slane %v562, 1
        %v697 = vrot.slane %v565, 1
        %v698 = vrot.slane %v568, 1
        %v699 = vrot.slane %v571, 1
        %v700 = vrot.slane %v574, 1
        %v701 = vrot.slane %v577, 1
        %v702 = vrot.slane %v580, 1
        %v703 = vrot.slane %v583, 1
        %v704 = vrot.slane %v586, 1
        %v705 = vrot.slane %v589, 1
        %v706 = vrot.slane %v545, 1
        %v707 = vrot.slane %v548, 1
        %v708 = vrot.slane %v551, 1
        %v709 = vrot.slane %v554, 1
        %v710 = vrot.slane %v557, 1
        %v711 = vrot.slane %v560, 1
        %v712 = vrot.slane %v563, 1
        %v713 = vrot.slane %v566, 1
        %v714 = vrot.slane %v569, 1
        %v715 = vrot.slane %v572, 1
        %v716 = vrot.slane %v575, 1
        %v717 = vrot.slane %v578, 1
        %v718 = vrot.slane %v581, 1
        %v719 = vrot.slane %v584, 1
        %v720 = vrot.slane %v587, 1
        %v721 = vrot.slane %v590, 1
        %vm722 = vcmp.lt.s32.totalorder %v640, 7
        %v723 = vsel %vm722, %v690, %v706
        %v724 = vsel %vm722, %v691, %v707
        %v725 = vsel %vm722, %v692, %v708
        %v726 = vsel %vm722, %v693, %v709
        %v727 = vsel %vm722, %v694, %v710
        %v728 = vsel %vm722, %v695, %v711
        %v729 = vsel %vm722, %v696, %v712
        %v730 = vsel %vm722, %v697, %v713
        %v731 = vsel %vm722, %v698, %v714
        %v732 = vsel %vm722, %v699, %v715
        %v733 = vsel %vm722, %v700, %v716
        %v734 = vsel %vm722, %v701, %v717
        %v735 = vsel %vm722, %v702, %v718
        %v736 = vsel %vm722, %v703, %v719
        %v737 = vsel %vm722, %v704, %v720
        %v738 = vsel %vm722, %v705, %v721
        %v739 = vsel %vm722, %v674, %v690
        %v740 = vsel %vm722, %v675, %v691
        %v741 = vsel %vm722, %v676, %v692
        %v742 = vsel %vm722, %v677, %v693
        %v743 = vsel %vm722, %v678, %v694
        %v744 = vsel %vm722, %v679, %v695
        %v745 = vsel %vm722, %v680, %v696
        %v746 = vsel %vm722, %v681, %v697
        %v747 = vsel %vm722, %v682, %v698
        %v748 = vsel %vm722, %v683, %v699
        %v749 = vsel %vm722, %v684, %v700
        %v750 = vsel %vm722, %v685, %v701
        %v751 = vsel %vm722, %v686, %v702
        %v752 = vsel %vm722, %v687, %v703
        %v753 = vsel %vm722, %v688, %v704
        %v754 = vsel %vm722, %v689, %v705
        %v755 = vlaneseq
        %v756 = vshrl.u32 %v755, 7
        %v757 = vsub.s32 0, %v756
        %v758 = vrot.slane %v541, %v757
        %v759 = vmul.f32 %v658, %v758
        %v760 = vmul.f32 %v642, %v758
        %v761 = vmul.f32 %v659, %v758
        %v762 = vmul.f32 %v643, %v758
        %v763 = vmul.f32 %v660, %v758
        %v764 = vmul.f32 %v644, %v758
        %v765 = vmul.f32 %v661, %v758
        %v766 = vmul.f32 %v645, %v758
        %v767 = vmul.f32 %v662, %v758
        %v768 = vmul.f32 %v646, %v758
        %v769 = vmul.f32 %v663, %v758
        %v770 = vmul.f32 %v647, %v758
        %v771 = vmul.f32 %v664, %v758
        %v772 = vmul.f32 %v648, %v758
        %v773 = vmul.f32 %v665, %v758
        %v774 = vmul.f32 %v649, %v758
        %v775 = vmul.f32 %v666, %v758
        %v776 = vmul.f32 %v650, %v758
        %v777 = vmul.f32 %v667, %v758
        %v778 = vmul.f32 %v651, %v758
        %v779 = vmul.f32 %v668, %v758
        %v780 = vmul.f32 %v652, %v758
        %v781 = vmul.f32 %v669, %v758
        %v782 = vmul.f32 %v653, %v758
        %v783 = vmul.f32 %v670, %v758
        %v784 = vmul.f32 %v654, %v758
        %v785 = vmul.f32 %v671, %v758
        %v786 = vmul.f32 %v655, %v758
        %v787 = vmul.f32 %v672, %v758
        %v788 = vmul.f32 %v656, %v758
        %v789 = vmul.f32 %v673, %v758
        %v790 = vmul.f32 %v657, %v758
        %v791 = vlaneseq
        %v792 = vshrl.u32 %v791, 7
        %v793 = vsub.s32 1, %v792
        %v794 = vrot.slane %v541, %v793
        %v795 = vmul.f32 %v543, %v794
        %v796 = vmul.f32 %v544, %v794
        %v797 = vmul.f32 %v546, %v794
        %v798 = vmul.f32 %v547, %v794
        %v799 = vmul.f32 %v549, %v794
        %v800 = vmul.f32 %v550, %v794
        %v801 = vmul.f32 %v552, %v794
        %v802 = vmul.f32 %v553, %v794
        %v803 = vmul.f32 %v555, %v794
        %v804 = vmul.f32 %v556, %v794
        %v805 = vmul.f32 %v558, %v794
        %v806 = vmul.f32 %v559, %v794
        %v807 = vmul.f32 %v561, %v794
        %v808 = vmul.f32 %v562, %v794
        %v809 = vmul.f32 %v564, %v794
        %v810 = vmul.f32 %v565, %v794
        %v811 = vmul.f32 %v567, %v794
        %v812 = vmul.f32 %v568, %v794
        %v813 = vmul.f32 %v570, %v794
        %v814 = vmul.f32 %v571, %v794
        %v815 = vmul.f32 %v573, %v794
        %v816 = vmul.f32 %v574, %v794
        %v817 = vmul.f32 %v576, %v794
        %v818 = vmul.f32 %v577, %v794
        %v819 = vmul.f32 %v579, %v794
        %v820 = vmul.f32 %v580, %v794
        %v821 = vmul.f32 %v582, %v794
        %v822 = vmul.f32 %v583, %v794
        %v823 = vmul.f32 %v585, %v794
        %v824 = vmul.f32 %v586, %v794
        %v825 = vmul.f32 %v588, %v794
        %v826 = vmul.f32 %v589, %v794
        %v827 = vadd.f32 %v759, %v795
        %v828 = vadd.f32 %v760, %v796
        %v829 = vadd.f32 %v761, %v797
        %v830 = vadd.f32 %v762, %v798
        %v831 = vadd.f32 %v763, %v799
        %v832 = vadd.f32 %v764, %v800
        %v833 = vadd.f32 %v765, %v801
        %v834 = vadd.f32 %v766, %v802
        %v835 = vadd.f32 %v767, %v803
        %v836 = vadd.f32 %v768, %v804
        %v837 = vadd.f32 %v769, %v805
        %v838 = vadd.f32 %v770, %v806
        %v839 = vadd.f32 %v771, %v807
        %v840 = vadd.f32 %v772, %v808
        %v841 = vadd.f32 %v773, %v809
        %v842 = vadd.f32 %v774, %v810
        %v843 = vadd.f32 %v775, %v811
        %v844 = vadd.f32 %v776, %v812
        %v845 = vadd.f32 %v777, %v813
        %v846 = vadd.f32 %v778, %v814
        %v847 = vadd.f32 %v779, %v815
        %v848 = vadd.f32 %v780, %v816
        %v849 = vadd.f32 %v781, %v817
        %v850 = vadd.f32 %v782, %v818
        %v851 = vadd.f32 %v783, %v819
        %v852 = vadd.f32 %v784, %v820
        %v853 = vadd.f32 %v785, %v821
        %v854 = vadd.f32 %v786, %v822
        %v855 = vadd.f32 %v787, %v823
        %v856 = vadd.f32 %v788, %v824
        %v857 = vadd.f32 %v789, %v825
        %v858 = vadd.f32 %v790, %v826
        %v859 = vlaneseq
        %v860 = vshrl.u32 %v859, 7
        %v861 = vsub.s32 2, %v860
        %v862 = vrot.slane %v541, %v861
        %v863 = vmul.f32 %v739, %v862
        %v864 = vmul.f32 %v723, %v862
        %v865 = vmul.f32 %v740, %v862
        %v866 = vmul.f32 %v724, %v862
        %v867 = vmul.f32 %v741, %v862
        %v868 = vmul.f32 %v725, %v862
        %v869 = vmul.f32 %v742, %v862
        %v870 = vmul.f32 %v726, %v862
        %v871 = vmul.f32 %v743, %v862
        %v872 = vmul.f32 %v727, %v862
        %v873 = vmul.f32 %v744, %v862
        %v874 = vmul.f32 %v728, %v862
        %v875 = vmul.f32 %v745, %v862
        %v876 = vmul.f32 %v729, %v862
        %v877 = vmul.f32 %v746, %v862
        %v878 = vmul.f32 %v730, %v862
        %v879 = vmul.f32 %v747, %v862
        %v880 = vmul.f32 %v731, %v862
        %v881 = vmul.f32 %v748, %v862
        %v882 = vmul.f32 %v732, %v862
        %v883 = vmul.f32 %v749, %v862
        %v884 = vmul.f32 %v733, %v862
        %v885 = vmul.f32 %v750, %v862
        %v886 = vmul.f32 %v734, %v862
        %v887 = vmul.f32 %v751, %v862
        %v888 = vmul.f32 %v735, %v862
        %v889 = vmul.f32 %v752, %v862
        %v890 = vmul.f32 %v736, %v862
        %v891 = vmul.f32 %v753, %v862
        %v892 = vmul.f32 %v737, %v862
        %v893 = vmul.f32 %v754, %v862
        %v894 = vmul.f32 %v738, %v862
        %v895 = vadd.f32 %v827, %v863
        %v896 = vadd.f32 %v828, %v864
        %v897 = vadd.f32 %v829, %v865
        %v898 = vadd.f32 %v830, %v866
        %v899 = vadd.f32 %v831, %v867
        %v900 = vadd.f32 %v832, %v868
        %v901 = vadd.f32 %v833, %v869
        %v902 = vadd.f32 %v834, %v870
        %v903 = vadd.f32 %v835, %v871
        %v904 = vadd.f32 %v836, %v872
        %v905 = vadd.f32 %v837, %v873
        %v906 = vadd.f32 %v838, %v874
        %v907 = vadd.f32 %v839, %v875
        %v908 = vadd.f32 %v840, %v876
        %v909 = vadd.f32 %v841, %v877
        %v910 = vadd.f32 %v842, %v878
        %v911 = vadd.f32 %v843, %v879
        %v912 = vadd.f32 %v844, %v880
        %v913 = vadd.f32 %v845, %v881
        %v914 = vadd.f32 %v846, %v882
        %v915 = vadd.f32 %v847, %v883
        %v916 = vadd.f32 %v848, %v884
        %v917 = vadd.f32 %v849, %v885
        %v918 = vadd.f32 %v850, %v886
        %v919 = vadd.f32 %v851, %v887
        %v920 = vadd.f32 %v852, %v888
        %v921 = vadd.f32 %v853, %v889
        %v922 = vadd.f32 %v854, %v890
        %v923 = vadd.f32 %v855, %v891
        %v924 = vadd.f32 %v856, %v892
        %v925 = vadd.f32 %v857, %v893
        %v926 = vadd.f32 %v858, %v894
        %v927 = vld [vmem:[%s508] sm:$0xff]
        %v928 = vld [vmem:[%s508 + $0x8] sm:$0xff]
        %v929 = vld [vmem:[%s508 + $0x10] sm:$0xff]
        %v930 = vld [vmem:[%s508 + $0x18] sm:$0xff]
        %v931 = vld [vmem:[%s508 + $0x20] sm:$0xff]
        %v932 = vld [vmem:[%s508 + $0x28] sm:$0xff]
        %v933 = vld [vmem:[%s508 + $0x30] sm:$0xff]
        %v934 = vld [vmem:[%s508 + $0x38] sm:$0xff]
        %v935 = vld [vmem:[%s508 + $0x40] sm:$0xff]
        %v936 = vld [vmem:[%s508 + $0x48] sm:$0xff]
        %v937 = vld [vmem:[%s508 + $0x50] sm:$0xff]
        %v938 = vld [vmem:[%s508 + $0x58] sm:$0xff]
        %v939 = vld [vmem:[%s508 + $0x60] sm:$0xff]
        %v940 = vld [vmem:[%s508 + $0x68] sm:$0xff]
        %v941 = vld [vmem:[%s508 + $0x70] sm:$0xff]
        %v942 = vld [vmem:[%s508 + $0x78] sm:$0xff]
        %v943 = vld [vmem:[%s508 + $0x80] sm:$0xff]
        %v944 = vld [vmem:[%s508 + $0x88] sm:$0xff]
        %v945 = vld [vmem:[%s508 + $0x90] sm:$0xff]
        %v946 = vld [vmem:[%s508 + $0x98] sm:$0xff]
        %v947 = vld [vmem:[%s508 + $0xa0] sm:$0xff]
        %v948 = vld [vmem:[%s508 + $0xa8] sm:$0xff]
        %v949 = vld [vmem:[%s508 + $0xb0] sm:$0xff]
        %v950 = vld [vmem:[%s508 + $0xb8] sm:$0xff]
        %v951 = vld [vmem:[%s508 + $0xc0] sm:$0xff]
        %v952 = vld [vmem:[%s508 + $0xc8] sm:$0xff]
        %v953 = vld [vmem:[%s508 + $0xd0] sm:$0xff]
        %v954 = vld [vmem:[%s508 + $0xd8] sm:$0xff]
        %v955 = vld [vmem:[%s508 + $0xe0] sm:$0xff]
        %v956 = vld [vmem:[%s508 + $0xe8] sm:$0xff]
        %v957 = vld [vmem:[%s508 + $0xf0] sm:$0xff]
        %v958 = vld [vmem:[%s508 + $0xf8] sm:$0xff]
        %v959 = vld [vmem:[%s508 + $0x100] sm:$0xff]
        %v960 = vld [vmem:[%s508 + $0x108] sm:$0xff]
        %v961 = vld [vmem:[%s508 + $0x110] sm:$0xff]
        %v962 = vld [vmem:[%s508 + $0x118] sm:$0xff]
        %v963 = vld [vmem:[%s508 + $0x120] sm:$0xff]
        %v964 = vld [vmem:[%s508 + $0x128] sm:$0xff]
        %v965 = vld [vmem:[%s508 + $0x130] sm:$0xff]
        %v966 = vld [vmem:[%s508 + $0x138] sm:$0xff]
        %v967 = vld [vmem:[%s508 + $0x140] sm:$0xff]
        %v968 = vld [vmem:[%s508 + $0x148] sm:$0xff]
        %v969 = vld [vmem:[%s508 + $0x150] sm:$0xff]
        %v970 = vld [vmem:[%s508 + $0x158] sm:$0xff]
        %v971 = vld [vmem:[%s508 + $0x160] sm:$0xff]
        %v972 = vld [vmem:[%s508 + $0x168] sm:$0xff]
        %v973 = vld [vmem:[%s508 + $0x170] sm:$0xff]
        %v974 = vld [vmem:[%s508 + $0x178] sm:$0xff]
        %v975 = vrot.slane %v927, 7
        %v976 = vrot.slane %v930, 7
        %v977 = vrot.slane %v933, 7
        %v978 = vrot.slane %v936, 7
        %v979 = vrot.slane %v939, 7
        %v980 = vrot.slane %v942, 7
        %v981 = vrot.slane %v945, 7
        %v982 = vrot.slane %v948, 7
        %v983 = vrot.slane %v951, 7
        %v984 = vrot.slane %v954, 7
        %v985 = vrot.slane %v957, 7
        %v986 = vrot.slane %v960, 7
        %v987 = vrot.slane %v963, 7
        %v988 = vrot.slane %v966, 7
        %v989 = vrot.slane %v969, 7
        %v990 = vrot.slane %v972, 7
        %v991 = vrot.slane %v928, 7
        %v992 = vrot.slane %v931, 7
        %v993 = vrot.slane %v934, 7
        %v994 = vrot.slane %v937, 7
        %v995 = vrot.slane %v940, 7
        %v996 = vrot.slane %v943, 7
        %v997 = vrot.slane %v946, 7
        %v998 = vrot.slane %v949, 7
        %v999 = vrot.slane %v952, 7
        %v1000 = vrot.slane %v955, 7
        %v1001 = vrot.slane %v958, 7
        %v1002 = vrot.slane %v961, 7
        %v1003 = vrot.slane %v964, 7
        %v1004 = vrot.slane %v967, 7
        %v1005 = vrot.slane %v970, 7
        %v1006 = vrot.slane %v973, 7
        %v1007 = vrot.slane %v929, 7
        %v1008 = vrot.slane %v932, 7
        %v1009 = vrot.slane %v935, 7
        %v1010 = vrot.slane %v938, 7
        %v1011 = vrot.slane %v941, 7
        %v1012 = vrot.slane %v944, 7
        %v1013 = vrot.slane %v947, 7
        %v1014 = vrot.slane %v950, 7
        %v1015 = vrot.slane %v953, 7
        %v1016 = vrot.slane %v956, 7
        %v1017 = vrot.slane %v959, 7
        %v1018 = vrot.slane %v962, 7
        %v1019 = vrot.slane %v965, 7
        %v1020 = vrot.slane %v968, 7
        %v1021 = vrot.slane %v971, 7
        %v1022 = vrot.slane %v974, 7
        %v1023 = vsel %vm641, %v975, %v991
        %v1024 = vsel %vm641, %v976, %v992
        %v1025 = vsel %vm641, %v977, %v993
        %v1026 = vsel %vm641, %v978, %v994
        %v1027 = vsel %vm641, %v979, %v995
        %v1028 = vsel %vm641, %v980, %v996
        %v1029 = vsel %vm641, %v981, %v997
        %v1030 = vsel %vm641, %v982, %v998
        %v1031 = vsel %vm641, %v983, %v999
        %v1032 = vsel %vm641, %v984, %v1000
        %v1033 = vsel %vm641, %v985, %v1001
        %v1034 = vsel %vm641, %v986, %v1002
        %v1035 = vsel %vm641, %v987, %v1003
        %v1036 = vsel %vm641, %v988, %v1004
        %v1037 = vsel %vm641, %v989, %v1005
        %v1038 = vsel %vm641, %v990, %v1006
        %v1039 = vsel %vm641, %v1007, %v975
        %v1040 = vsel %vm641, %v1008, %v976
        %v1041 = vsel %vm641, %v1009, %v977
        %v1042 = vsel %vm641, %v1010, %v978
        %v1043 = vsel %vm641, %v1011, %v979
        %v1044 = vsel %vm641, %v1012, %v980
        %v1045 = vsel %vm641, %v1013, %v981
        %v1046 = vsel %vm641, %v1014, %v982
        %v1047 = vsel %vm641, %v1015, %v983
        %v1048 = vsel %vm641, %v1016, %v984
        %v1049 = vsel %vm641, %v1017, %v985
        %v1050 = vsel %vm641, %v1018, %v986
        %v1051 = vsel %vm641, %v1019, %v987
        %v1052 = vsel %vm641, %v1020, %v988
        %v1053 = vsel %vm641, %v1021, %v989
        %v1054 = vsel %vm641, %v1022, %v990
        %v1055 = vrot.slane %v927, 1
        %v1056 = vrot.slane %v930, 1
        %v1057 = vrot.slane %v933, 1
        %v1058 = vrot.slane %v936, 1
        %v1059 = vrot.slane %v939, 1
        %v1060 = vrot.slane %v942, 1
        %v1061 = vrot.slane %v945, 1
        %v1062 = vrot.slane %v948, 1
        %v1063 = vrot.slane %v951, 1
        %v1064 = vrot.slane %v954, 1
        %v1065 = vrot.slane %v957, 1
        %v1066 = vrot.slane %v960, 1
        %v1067 = vrot.slane %v963, 1
        %v1068 = vrot.slane %v966, 1
        %v1069 = vrot.slane %v969, 1
        %v1070 = vrot.slane %v972, 1
        %v1071 = vrot.slane %v928, 1
        %v1072 = vrot.slane %v931, 1
        %v1073 = vrot.slane %v934, 1
        %v1074 = vrot.slane %v937, 1
        %v1075 = vrot.slane %v940, 1
        %v1076 = vrot.slane %v943, 1
        %v1077 = vrot.slane %v946, 1
        %v1078 = vrot.slane %v949, 1
        %v1079 = vrot.slane %v952, 1
        %v1080 = vrot.slane %v955, 1
        %v1081 = vrot.slane %v958, 1
        %v1082 = vrot.slane %v961, 1
        %v1083 = vrot.slane %v964, 1
        %v1084 = vrot.slane %v967, 1
        %v1085 = vrot.slane %v970, 1
        %v1086 = vrot.slane %v973, 1
        %v1087 = vrot.slane %v929, 1
        %v1088 = vrot.slane %v932, 1
        %v1089 = vrot.slane %v935, 1
        %v1090 = vrot.slane %v938, 1
        %v1091 = vrot.slane %v941, 1
        %v1092 = vrot.slane %v944, 1
        %v1093 = vrot.slane %v947, 1
        %v1094 = vrot.slane %v950, 1
        %v1095 = vrot.slane %v953, 1
        %v1096 = vrot.slane %v956, 1
        %v1097 = vrot.slane %v959, 1
        %v1098 = vrot.slane %v962, 1
        %v1099 = vrot.slane %v965, 1
        %v1100 = vrot.slane %v968, 1
        %v1101 = vrot.slane %v971, 1
        %v1102 = vrot.slane %v974, 1
        %v1103 = vsel %vm722, %v1071, %v1087
        %v1104 = vsel %vm722, %v1072, %v1088
        %v1105 = vsel %vm722, %v1073, %v1089
        %v1106 = vsel %vm722, %v1074, %v1090
        %v1107 = vsel %vm722, %v1075, %v1091
        %v1108 = vsel %vm722, %v1076, %v1092
        %v1109 = vsel %vm722, %v1077, %v1093
        %v1110 = vsel %vm722, %v1078, %v1094
        %v1111 = vsel %vm722, %v1079, %v1095
        %v1112 = vsel %vm722, %v1080, %v1096
        %v1113 = vsel %vm722, %v1081, %v1097
        %v1114 = vsel %vm722, %v1082, %v1098
        %v1115 = vsel %vm722, %v1083, %v1099
        %v1116 = vsel %vm722, %v1084, %v1100
        %v1117 = vsel %vm722, %v1085, %v1101
        %v1118 = vsel %vm722, %v1086, %v1102
        %v1119 = vsel %vm722, %v1055, %v1071
        %v1120 = vsel %vm722, %v1056, %v1072
        %v1121 = vsel %vm722, %v1057, %v1073
        %v1122 = vsel %vm722, %v1058, %v1074
        %v1123 = vsel %vm722, %v1059, %v1075
        %v1124 = vsel %vm722, %v1060, %v1076
        %v1125 = vsel %vm722, %v1061, %v1077
        %v1126 = vsel %vm722, %v1062, %v1078
        %v1127 = vsel %vm722, %v1063, %v1079
        %v1128 = vsel %vm722, %v1064, %v1080
        %v1129 = vsel %vm722, %v1065, %v1081
        %v1130 = vsel %vm722, %v1066, %v1082
        %v1131 = vsel %vm722, %v1067, %v1083
        %v1132 = vsel %vm722, %v1068, %v1084
        %v1133 = vsel %vm722, %v1069, %v1085
        %v1134 = vsel %vm722, %v1070, %v1086
        %v1135 = vlaneseq
        %v1136 = vshrl.u32 %v1135, 7
        %v1137 = vsub.s32 3, %v1136
        %v1138 = vrot.slane %v541, %v1137
        %v1139 = vmul.f32 %v1039, %v1138
        %v1140 = vmul.f32 %v1023, %v1138
        %v1141 = vmul.f32 %v1040, %v1138
        %v1142 = vmul.f32 %v1024, %v1138
        %v1143 = vmul.f32 %v1041, %v1138
        %v1144 = vmul.f32 %v1025, %v1138
        %v1145 = vmul.f32 %v1042, %v1138
        %v1146 = vmul.f32 %v1026, %v1138
        %v1147 = vmul.f32 %v1043, %v1138
        %v1148 = vmul.f32 %v1027, %v1138
        %v1149 = vmul.f32 %v1044, %v1138
        %v1150 = vmul.f32 %v1028, %v1138
        %v1151 = vmul.f32 %v1045, %v1138
        %v1152 = vmul.f32 %v1029, %v1138
        %v1153 = vmul.f32 %v1046, %v1138
        %v1154 = vmul.f32 %v1030, %v1138
        %v1155 = vmul.f32 %v1047, %v1138
        %v1156 = vmul.f32 %v1031, %v1138
        %v1157 = vmul.f32 %v1048, %v1138
        %v1158 = vmul.f32 %v1032, %v1138
        %v1159 = vmul.f32 %v1049, %v1138
        %v1160 = vmul.f32 %v1033, %v1138
        %v1161 = vmul.f32 %v1050, %v1138
        %v1162 = vmul.f32 %v1034, %v1138
        %v1163 = vmul.f32 %v1051, %v1138
        %v1164 = vmul.f32 %v1035, %v1138
        %v1165 = vmul.f32 %v1052, %v1138
        %v1166 = vmul.f32 %v1036, %v1138
        %v1167 = vmul.f32 %v1053, %v1138
        %v1168 = vmul.f32 %v1037, %v1138
        %v1169 = vmul.f32 %v1054, %v1138
        %v1170 = vmul.f32 %v1038, %v1138
        %v1171 = vadd.f32 %v895, %v1139
        %v1172 = vadd.f32 %v896, %v1140
        %v1173 = vadd.f32 %v897, %v1141
        %v1174 = vadd.f32 %v898, %v1142
        %v1175 = vadd.f32 %v899, %v1143
        %v1176 = vadd.f32 %v900, %v1144
        %v1177 = vadd.f32 %v901, %v1145
        %v1178 = vadd.f32 %v902, %v1146
        %v1179 = vadd.f32 %v903, %v1147
        %v1180 = vadd.f32 %v904, %v1148
        %v1181 = vadd.f32 %v905, %v1149
        %v1182 = vadd.f32 %v906, %v1150
        %v1183 = vadd.f32 %v907, %v1151
        %v1184 = vadd.f32 %v908, %v1152
        %v1185 = vadd.f32 %v909, %v1153
        %v1186 = vadd.f32 %v910, %v1154
        %v1187 = vadd.f32 %v911, %v1155
        %v1188 = vadd.f32 %v912, %v1156
        %v1189 = vadd.f32 %v913, %v1157
        %v1190 = vadd.f32 %v914, %v1158
        %v1191 = vadd.f32 %v915, %v1159
        %v1192 = vadd.f32 %v916, %v1160
        %v1193 = vadd.f32 %v917, %v1161
        %v1194 = vadd.f32 %v918, %v1162
        %v1195 = vadd.f32 %v919, %v1163
        %v1196 = vadd.f32 %v920, %v1164
        %v1197 = vadd.f32 %v921, %v1165
        %v1198 = vadd.f32 %v922, %v1166
        %v1199 = vadd.f32 %v923, %v1167
        %v1200 = vadd.f32 %v924, %v1168
        %v1201 = vadd.f32 %v925, %v1169
        %v1202 = vadd.f32 %v926, %v1170
        %v1203 = vlaneseq
        %v1204 = vshrl.u32 %v1203, 7
        %v1205 = vsub.s32 4, %v1204
        %v1206 = vrot.slane %v541, %v1205
        %v1207 = vmul.f32 %v927, %v1206
        %v1208 = vmul.f32 %v928, %v1206
        %v1209 = vmul.f32 %v930, %v1206
        %v1210 = vmul.f32 %v931, %v1206
        %v1211 = vmul.f32 %v933, %v1206
        %v1212 = vmul.f32 %v934, %v1206
        %v1213 = vmul.f32 %v936, %v1206
        %v1214 = vmul.f32 %v937, %v1206
        %v1215 = vmul.f32 %v939, %v1206
        %v1216 = vmul.f32 %v940, %v1206
        %v1217 = vmul.f32 %v942, %v1206
        %v1218 = vmul.f32 %v943, %v1206
        %v1219 = vmul.f32 %v945, %v1206
        %v1220 = vmul.f32 %v946, %v1206
        %v1221 = vmul.f32 %v948, %v1206
        %v1222 = vmul.f32 %v949, %v1206
        %v1223 = vmul.f32 %v951, %v1206
        %v1224 = vmul.f32 %v952, %v1206
        %v1225 = vmul.f32 %v954, %v1206
        %v1226 = vmul.f32 %v955, %v1206
        %v1227 = vmul.f32 %v957, %v1206
        %v1228 = vmul.f32 %v958, %v1206
        %v1229 = vmul.f32 %v960, %v1206
        %v1230 = vmul.f32 %v961, %v1206
        %v1231 = vmul.f32 %v963, %v1206
        %v1232 = vmul.f32 %v964, %v1206
        %v1233 = vmul.f32 %v966, %v1206
        %v1234 = vmul.f32 %v967, %v1206
        %v1235 = vmul.f32 %v969, %v1206
        %v1236 = vmul.f32 %v970, %v1206
        %v1237 = vmul.f32 %v972, %v1206
        %v1238 = vmul.f32 %v973, %v1206
        %v1239 = vadd.f32 %v1171, %v1207
        %v1240 = vadd.f32 %v1172, %v1208
        %v1241 = vadd.f32 %v1173, %v1209
        %v1242 = vadd.f32 %v1174, %v1210
        %v1243 = vadd.f32 %v1175, %v1211
        %v1244 = vadd.f32 %v1176, %v1212
        %v1245 = vadd.f32 %v1177, %v1213
        %v1246 = vadd.f32 %v1178, %v1214
        %v1247 = vadd.f32 %v1179, %v1215
        %v1248 = vadd.f32 %v1180, %v1216
        %v1249 = vadd.f32 %v1181, %v1217
        %v1250 = vadd.f32 %v1182, %v1218
        %v1251 = vadd.f32 %v1183, %v1219
        %v1252 = vadd.f32 %v1184, %v1220
        %v1253 = vadd.f32 %v1185, %v1221
        %v1254 = vadd.f32 %v1186, %v1222
        %v1255 = vadd.f32 %v1187, %v1223
        %v1256 = vadd.f32 %v1188, %v1224
        %v1257 = vadd.f32 %v1189, %v1225
        %v1258 = vadd.f32 %v1190, %v1226
        %v1259 = vadd.f32 %v1191, %v1227
        %v1260 = vadd.f32 %v1192, %v1228
        %v1261 = vadd.f32 %v1193, %v1229
        %v1262 = vadd.f32 %v1194, %v1230
        %v1263 = vadd.f32 %v1195, %v1231
        %v1264 = vadd.f32 %v1196, %v1232
        %v1265 = vadd.f32 %v1197, %v1233
        %v1266 = vadd.f32 %v1198, %v1234
        %v1267 = vadd.f32 %v1199, %v1235
        %v1268 = vadd.f32 %v1200, %v1236
        %v1269 = vadd.f32 %v1201, %v1237
        %v1270 = vadd.f32 %v1202, %v1238
        %v1271 = vlaneseq
        %v1272 = vshrl.u32 %v1271, 7
        %v1273 = vsub.s32 5, %v1272
        %v1274 = vrot.slane %v541, %v1273
        %v1275 = vmul.f32 %v1119, %v1274
        %v1276 = vmul.f32 %v1103, %v1274
        %v1277 = vmul.f32 %v1120, %v1274
        %v1278 = vmul.f32 %v1104, %v1274
        %v1279 = vmul.f32 %v1121, %v1274
        %v1280 = vmul.f32 %v1105, %v1274
        %v1281 = vmul.f32 %v1122, %v1274
        %v1282 = vmul.f32 %v1106, %v1274
        %v1283 = vmul.f32 %v1123, %v1274
        %v1284 = vmul.f32 %v1107, %v1274
        %v1285 = vmul.f32 %v1124, %v1274
        %v1286 = vmul.f32 %v1108, %v1274
        %v1287 = vmul.f32 %v1125, %v1274
        %v1288 = vmul.f32 %v1109, %v1274
        %v1289 = vmul.f32 %v1126, %v1274
        %v1290 = vmul.f32 %v1110, %v1274
        %v1291 = vmul.f32 %v1127, %v1274
        %v1292 = vmul.f32 %v1111, %v1274
        %v1293 = vmul.f32 %v1128, %v1274
        %v1294 = vmul.f32 %v1112, %v1274
        %v1295 = vmul.f32 %v1129, %v1274
        %v1296 = vmul.f32 %v1113, %v1274
        %v1297 = vmul.f32 %v1130, %v1274
        %v1298 = vmul.f32 %v1114, %v1274
        %v1299 = vmul.f32 %v1131, %v1274
        %v1300 = vmul.f32 %v1115, %v1274
        %v1301 = vmul.f32 %v1132, %v1274
        %v1302 = vmul.f32 %v1116, %v1274
        %v1303 = vmul.f32 %v1133, %v1274
        %v1304 = vmul.f32 %v1117, %v1274
        %v1305 = vmul.f32 %v1134, %v1274
        %v1306 = vmul.f32 %v1118, %v1274
        %v1307 = vadd.f32 %v1239, %v1275
        %v1308 = vadd.f32 %v1240, %v1276
        %v1309 = vadd.f32 %v1241, %v1277
        %v1310 = vadd.f32 %v1242, %v1278
        %v1311 = vadd.f32 %v1243, %v1279
        %v1312 = vadd.f32 %v1244, %v1280
        %v1313 = vadd.f32 %v1245, %v1281
        %v1314 = vadd.f32 %v1246, %v1282
        %v1315 = vadd.f32 %v1247, %v1283
        %v1316 = vadd.f32 %v1248, %v1284
        %v1317 = vadd.f32 %v1249, %v1285
        %v1318 = vadd.f32 %v1250, %v1286
        %v1319 = vadd.f32 %v1251, %v1287
        %v1320 = vadd.f32 %v1252, %v1288
        %v1321 = vadd.f32 %v1253, %v1289
        %v1322 = vadd.f32 %v1254, %v1290
        %v1323 = vadd.f32 %v1255, %v1291
        %v1324 = vadd.f32 %v1256, %v1292
        %v1325 = vadd.f32 %v1257, %v1293
        %v1326 = vadd.f32 %v1258, %v1294
        %v1327 = vadd.f32 %v1259, %v1295
        %v1328 = vadd.f32 %v1260, %v1296
        %v1329 = vadd.f32 %v1261, %v1297
        %v1330 = vadd.f32 %v1262, %v1298
        %v1331 = vadd.f32 %v1263, %v1299
        %v1332 = vadd.f32 %v1264, %v1300
        %v1333 = vadd.f32 %v1265, %v1301
        %v1334 = vadd.f32 %v1266, %v1302
        %v1335 = vadd.f32 %v1267, %v1303
        %v1336 = vadd.f32 %v1268, %v1304
        %v1337 = vadd.f32 %v1269, %v1305
        %v1338 = vadd.f32 %v1270, %v1306
        %s1339 = scalar_lea.vmem [#allocation2], 48
        %v1340 = vld [vmem:[%s1339] sm:$0xff]
        %v1341 = vld [vmem:[%s1339 + $0x8] sm:$0xff]
        %v1342 = vld [vmem:[%s1339 + $0x10] sm:$0xff]
        %v1343 = vld [vmem:[%s1339 + $0x18] sm:$0xff]
        %v1344 = vld [vmem:[%s1339 + $0x20] sm:$0xff]
        %v1345 = vld [vmem:[%s1339 + $0x28] sm:$0xff]
        %v1346 = vld [vmem:[%s1339 + $0x30] sm:$0xff]
        %v1347 = vld [vmem:[%s1339 + $0x38] sm:$0xff]
        %v1348 = vld [vmem:[%s1339 + $0x40] sm:$0xff]
        %v1349 = vld [vmem:[%s1339 + $0x48] sm:$0xff]
        %v1350 = vld [vmem:[%s1339 + $0x50] sm:$0xff]
        %v1351 = vld [vmem:[%s1339 + $0x58] sm:$0xff]
        %v1352 = vld [vmem:[%s1339 + $0x60] sm:$0xff]
        %v1353 = vld [vmem:[%s1339 + $0x68] sm:$0xff]
        %v1354 = vld [vmem:[%s1339 + $0x70] sm:$0xff]
        %v1355 = vld [vmem:[%s1339 + $0x78] sm:$0xff]
        %v1356 = vld [vmem:[%s1339 + $0x80] sm:$0xff]
        %v1357 = vld [vmem:[%s1339 + $0x88] sm:$0xff]
        %v1358 = vld [vmem:[%s1339 + $0x90] sm:$0xff]
        %v1359 = vld [vmem:[%s1339 + $0x98] sm:$0xff]
        %v1360 = vld [vmem:[%s1339 + $0xa0] sm:$0xff]
        %v1361 = vld [vmem:[%s1339 + $0xa8] sm:$0xff]
        %v1362 = vld [vmem:[%s1339 + $0xb0] sm:$0xff]
        %v1363 = vld [vmem:[%s1339 + $0xb8] sm:$0xff]
        %v1364 = vld [vmem:[%s1339 + $0xc0] sm:$0xff]
        %v1365 = vld [vmem:[%s1339 + $0xc8] sm:$0xff]
        %v1366 = vld [vmem:[%s1339 + $0xd0] sm:$0xff]
        %v1367 = vld [vmem:[%s1339 + $0xd8] sm:$0xff]
        %v1368 = vld [vmem:[%s1339 + $0xe0] sm:$0xff]
        %v1369 = vld [vmem:[%s1339 + $0xe8] sm:$0xff]
        %v1370 = vld [vmem:[%s1339 + $0xf0] sm:$0xff]
        %v1371 = vld [vmem:[%s1339 + $0xf8] sm:$0xff]
        %v1372 = vld [vmem:[%s1339 + $0x100] sm:$0xff]
        %v1373 = vld [vmem:[%s1339 + $0x108] sm:$0xff]
        %v1374 = vld [vmem:[%s1339 + $0x110] sm:$0xff]
        %v1375 = vld [vmem:[%s1339 + $0x118] sm:$0xff]
        %v1376 = vld [vmem:[%s1339 + $0x120] sm:$0xff]
        %v1377 = vld [vmem:[%s1339 + $0x128] sm:$0xff]
        %v1378 = vld [vmem:[%s1339 + $0x130] sm:$0xff]
        %v1379 = vld [vmem:[%s1339 + $0x138] sm:$0xff]
        %v1380 = vld [vmem:[%s1339 + $0x140] sm:$0xff]
        %v1381 = vld [vmem:[%s1339 + $0x148] sm:$0xff]
        %v1382 = vld [vmem:[%s1339 + $0x150] sm:$0xff]
        %v1383 = vld [vmem:[%s1339 + $0x158] sm:$0xff]
        %v1384 = vld [vmem:[%s1339 + $0x160] sm:$0xff]
        %v1385 = vld [vmem:[%s1339 + $0x168] sm:$0xff]
        %v1386 = vld [vmem:[%s1339 + $0x170] sm:$0xff]
        %v1387 = vld [vmem:[%s1339 + $0x178] sm:$0xff]
        %v1388 = vrot.slane %v1340, 7
        %v1389 = vrot.slane %v1343, 7
        %v1390 = vrot.slane %v1346, 7
        %v1391 = vrot.slane %v1349, 7
        %v1392 = vrot.slane %v1352, 7
        %v1393 = vrot.slane %v1355, 7
        %v1394 = vrot.slane %v1358, 7
        %v1395 = vrot.slane %v1361, 7
        %v1396 = vrot.slane %v1364, 7
        %v1397 = vrot.slane %v1367, 7
        %v1398 = vrot.slane %v1370, 7
        %v1399 = vrot.slane %v1373, 7
        %v1400 = vrot.slane %v1376, 7
        %v1401 = vrot.slane %v1379, 7
        %v1402 = vrot.slane %v1382, 7
        %v1403 = vrot.slane %v1385, 7
        %v1404 = vrot.slane %v1341, 7
        %v1405 = vrot.slane %v1344, 7
        %v1406 = vrot.slane %v1347, 7
        %v1407 = vrot.slane %v1350, 7
        %v1408 = vrot.slane %v1353, 7
        %v1409 = vrot.slane %v1356, 7
        %v1410 = vrot.slane %v1359, 7
        %v1411 = vrot.slane %v1362, 7
        %v1412 = vrot.slane %v1365, 7
        %v1413 = vrot.slane %v1368, 7
        %v1414 = vrot.slane %v1371, 7
        %v1415 = vrot.slane %v1374, 7
        %v1416 = vrot.slane %v1377, 7
        %v1417 = vrot.slane %v1380, 7
        %v1418 = vrot.slane %v1383, 7
        %v1419 = vrot.slane %v1386, 7
        %v1420 = vrot.slane %v1342, 7
        %v1421 = vrot.slane %v1345, 7
        %v1422 = vrot.slane %v1348, 7
        %v1423 = vrot.slane %v1351, 7
        %v1424 = vrot.slane %v1354, 7
        %v1425 = vrot.slane %v1357, 7
        %v1426 = vrot.slane %v1360, 7
        %v1427 = vrot.slane %v1363, 7
        %v1428 = vrot.slane %v1366, 7
        %v1429 = vrot.slane %v1369, 7
        %v1430 = vrot.slane %v1372, 7
        %v1431 = vrot.slane %v1375, 7
        %v1432 = vrot.slane %v1378, 7
        %v1433 = vrot.slane %v1381, 7
        %v1434 = vrot.slane %v1384, 7
        %v1435 = vrot.slane %v1387, 7
        %v1436 = vsel %vm641, %v1388, %v1404
        %v1437 = vsel %vm641, %v1389, %v1405
        %v1438 = vsel %vm641, %v1390, %v1406
        %v1439 = vsel %vm641, %v1391, %v1407
        %v1440 = vsel %vm641, %v1392, %v1408
        %v1441 = vsel %vm641, %v1393, %v1409
        %v1442 = vsel %vm641, %v1394, %v1410
        %v1443 = vsel %vm641, %v1395, %v1411
        %v1444 = vsel %vm641, %v1396, %v1412
        %v1445 = vsel %vm641, %v1397, %v1413
        %v1446 = vsel %vm641, %v1398, %v1414
        %v1447 = vsel %vm641, %v1399, %v1415
        %v1448 = vsel %vm641, %v1400, %v1416
        %v1449 = vsel %vm641, %v1401, %v1417
        %v1450 = vsel %vm641, %v1402, %v1418
        %v1451 = vsel %vm641, %v1403, %v1419
        %v1452 = vsel %vm641, %v1420, %v1388
        %v1453 = vsel %vm641, %v1421, %v1389
        %v1454 = vsel %vm641, %v1422, %v1390
        %v1455 = vsel %vm641, %v1423, %v1391
        %v1456 = vsel %vm641, %v1424, %v1392
        %v1457 = vsel %vm641, %v1425, %v1393
        %v1458 = vsel %vm641, %v1426, %v1394
        %v1459 = vsel %vm641, %v1427, %v1395
        %v1460 = vsel %vm641, %v1428, %v1396
        %v1461 = vsel %vm641, %v1429, %v1397
        %v1462 = vsel %vm641, %v1430, %v1398
        %v1463 = vsel %vm641, %v1431, %v1399
        %v1464 = vsel %vm641, %v1432, %v1400
        %v1465 = vsel %vm641, %v1433, %v1401
        %v1466 = vsel %vm641, %v1434, %v1402
        %v1467 = vsel %vm641, %v1435, %v1403
        %v1468 = vrot.slane %v1340, 1
        %v1469 = vrot.slane %v1343, 1
        %v1470 = vrot.slane %v1346, 1
        %v1471 = vrot.slane %v1349, 1
        %v1472 = vrot.slane %v1352, 1
        %v1473 = vrot.slane %v1355, 1
        %v1474 = vrot.slane %v1358, 1
        %v1475 = vrot.slane %v1361, 1
        %v1476 = vrot.slane %v1364, 1
        %v1477 = vrot.slane %v1367, 1
        %v1478 = vrot.slane %v1370, 1
        %v1479 = vrot.slane %v1373, 1
        %v1480 = vrot.slane %v1376, 1
        %v1481 = vrot.slane %v1379, 1
        %v1482 = vrot.slane %v1382, 1
        %v1483 = vrot.slane %v1385, 1
        %v1484 = vrot.slane %v1341, 1
        %v1485 = vrot.slane %v1344, 1
        %v1486 = vrot.slane %v1347, 1
        %v1487 = vrot.slane %v1350, 1
        %v1488 = vrot.slane %v1353, 1
        %v1489 = vrot.slane %v1356, 1
        %v1490 = vrot.slane %v1359, 1
        %v1491 = vrot.slane %v1362, 1
        %v1492 = vrot.slane %v1365, 1
        %v1493 = vrot.slane %v1368, 1
        %v1494 = vrot.slane %v1371, 1
        %v1495 = vrot.slane %v1374, 1
        %v1496 = vrot.slane %v1377, 1
        %v1497 = vrot.slane %v1380, 1
        %v1498 = vrot.slane %v1383, 1
        %v1499 = vrot.slane %v1386, 1
        %v1500 = vrot.slane %v1342, 1
        %v1501 = vrot.slane %v1345, 1
        %v1502 = vrot.slane %v1348, 1
        %v1503 = vrot.slane %v1351, 1
        %v1504 = vrot.slane %v1354, 1
        %v1505 = vrot.slane %v1357, 1
        %v1506 = vrot.slane %v1360, 1
        %v1507 = vrot.slane %v1363, 1
        %v1508 = vrot.slane %v1366, 1
        %v1509 = vrot.slane %v1369, 1
        %v1510 = vrot.slane %v1372, 1
        %v1511 = vrot.slane %v1375, 1
        %v1512 = vrot.slane %v1378, 1
        %v1513 = vrot.slane %v1381, 1
        %v1514 = vrot.slane %v1384, 1
        %v1515 = vrot.slane %v1387, 1
        %v1516 = vsel %vm722, %v1484, %v1500
        %v1517 = vsel %vm722, %v1485, %v1501
        %v1518 = vsel %vm722, %v1486, %v1502
        %v1519 = vsel %vm722, %v1487, %v1503
        %v1520 = vsel %vm722, %v1488, %v1504
        %v1521 = vsel %vm722, %v1489, %v1505
        %v1522 = vsel %vm722, %v1490, %v1506
        %v1523 = vsel %vm722, %v1491, %v1507
        %v1524 = vsel %vm722, %v1492, %v1508
        %v1525 = vsel %vm722, %v1493, %v1509
        %v1526 = vsel %vm722, %v1494, %v1510
        %v1527 = vsel %vm722, %v1495, %v1511
        %v1528 = vsel %vm722, %v1496, %v1512
        %v1529 = vsel %vm722, %v1497, %v1513
        %v1530 = vsel %vm722, %v1498, %v1514
        %v1531 = vsel %vm722, %v1499, %v1515
        %v1532 = vsel %vm722, %v1468, %v1484
        %v1533 = vsel %vm722, %v1469, %v1485
        %v1534 = vsel %vm722, %v1470, %v1486
        %v1535 = vsel %vm722, %v1471, %v1487
        %v1536 = vsel %vm722, %v1472, %v1488
        %v1537 = vsel %vm722, %v1473, %v1489
        %v1538 = vsel %vm722, %v1474, %v1490
        %v1539 = vsel %vm722, %v1475, %v1491
        %v1540 = vsel %vm722, %v1476, %v1492
        %v1541 = vsel %vm722, %v1477, %v1493
        %v1542 = vsel %vm722, %v1478, %v1494
        %v1543 = vsel %vm722, %v1479, %v1495
        %v1544 = vsel %vm722, %v1480, %v1496
        %v1545 = vsel %vm722, %v1481, %v1497
        %v1546 = vsel %vm722, %v1482, %v1498
        %v1547 = vsel %vm722, %v1483, %v1499
        %v1548 = vlaneseq
        %v1549 = vshrl.u32 %v1548, 7
        %v1550 = vsub.s32 6, %v1549
        %v1551 = vrot.slane %v541, %v1550
        %v1552 = vmul.f32 %v1452, %v1551
        %v1553 = vmul.f32 %v1436, %v1551
        %v1554 = vmul.f32 %v1453, %v1551
        %v1555 = vmul.f32 %v1437, %v1551
        %v1556 = vmul.f32 %v1454, %v1551
        %v1557 = vmul.f32 %v1438, %v1551
        %v1558 = vmul.f32 %v1455, %v1551
        %v1559 = vmul.f32 %v1439, %v1551
        %v1560 = vmul.f32 %v1456, %v1551
        %v1561 = vmul.f32 %v1440, %v1551
        %v1562 = vmul.f32 %v1457, %v1551
        %v1563 = vmul.f32 %v1441, %v1551
        %v1564 = vmul.f32 %v1458, %v1551
        %v1565 = vmul.f32 %v1442, %v1551
        %v1566 = vmul.f32 %v1459, %v1551
        %v1567 = vmul.f32 %v1443, %v1551
        %v1568 = vmul.f32 %v1460, %v1551
        %v1569 = vmul.f32 %v1444, %v1551
        %v1570 = vmul.f32 %v1461, %v1551
        %v1571 = vmul.f32 %v1445, %v1551
        %v1572 = vmul.f32 %v1462, %v1551
        %v1573 = vmul.f32 %v1446, %v1551
        %v1574 = vmul.f32 %v1463, %v1551
        %v1575 = vmul.f32 %v1447, %v1551
        %v1576 = vmul.f32 %v1464, %v1551
        %v1577 = vmul.f32 %v1448, %v1551
        %v1578 = vmul.f32 %v1465, %v1551
        %v1579 = vmul.f32 %v1449, %v1551
        %v1580 = vmul.f32 %v1466, %v1551
        %v1581 = vmul.f32 %v1450, %v1551
        %v1582 = vmul.f32 %v1467, %v1551
        %v1583 = vmul.f32 %v1451, %v1551
        %v1584 = vadd.f32 %v1307, %v1552
        %v1585 = vadd.f32 %v1308, %v1553
        %v1586 = vadd.f32 %v1309, %v1554
        %v1587 = vadd.f32 %v1310, %v1555
        %v1588 = vadd.f32 %v1311, %v1556
        %v1589 = vadd.f32 %v1312, %v1557
        %v1590 = vadd.f32 %v1313, %v1558
        %v1591 = vadd.f32 %v1314, %v1559
        %v1592 = vadd.f32 %v1315, %v1560
        %v1593 = vadd.f32 %v1316, %v1561
        %v1594 = vadd.f32 %v1317, %v1562
        %v1595 = vadd.f32 %v1318, %v1563
        %v1596 = vadd.f32 %v1319, %v1564
        %v1597 = vadd.f32 %v1320, %v1565
        %v1598 = vadd.f32 %v1321, %v1566
        %v1599 = vadd.f32 %v1322, %v1567
        %v1600 = vadd.f32 %v1323, %v1568
        %v1601 = vadd.f32 %v1324, %v1569
        %v1602 = vadd.f32 %v1325, %v1570
        %v1603 = vadd.f32 %v1326, %v1571
        %v1604 = vadd.f32 %v1327, %v1572
        %v1605 = vadd.f32 %v1328, %v1573
        %v1606 = vadd.f32 %v1329, %v1574
        %v1607 = vadd.f32 %v1330, %v1575
        %v1608 = vadd.f32 %v1331, %v1576
        %v1609 = vadd.f32 %v1332, %v1577
        %v1610 = vadd.f32 %v1333, %v1578
        %v1611 = vadd.f32 %v1334, %v1579
        %v1612 = vadd.f32 %v1335, %v1580
        %v1613 = vadd.f32 %v1336, %v1581
        %v1614 = vadd.f32 %v1337, %v1582
        %v1615 = vadd.f32 %v1338, %v1583
        %v1616 = vlaneseq
        %v1617 = vshrl.u32 %v1616, 7
        %v1618 = vsub.s32 7, %v1617
        %v1619 = vrot.slane %v541, %v1618
        %v1620 = vmul.f32 %v1340, %v1619
        %v1621 = vmul.f32 %v1341, %v1619
        %v1622 = vmul.f32 %v1343, %v1619
        %v1623 = vmul.f32 %v1344, %v1619
        %v1624 = vmul.f32 %v1346, %v1619
        %v1625 = vmul.f32 %v1347, %v1619
        %v1626 = vmul.f32 %v1349, %v1619
        %v1627 = vmul.f32 %v1350, %v1619
        %v1628 = vmul.f32 %v1352, %v1619
        %v1629 = vmul.f32 %v1353, %v1619
        %v1630 = vmul.f32 %v1355, %v1619
        %v1631 = vmul.f32 %v1356, %v1619
        %v1632 = vmul.f32 %v1358, %v1619
        %v1633 = vmul.f32 %v1359, %v1619
        %v1634 = vmul.f32 %v1361, %v1619
        %v1635 = vmul.f32 %v1362, %v1619
        %v1636 = vmul.f32 %v1364, %v1619
        %v1637 = vmul.f32 %v1365, %v1619
        %v1638 = vmul.f32 %v1367, %v1619
        %v1639 = vmul.f32 %v1368, %v1619
        %v1640 = vmul.f32 %v1370, %v1619
        %v1641 = vmul.f32 %v1371, %v1619
        %v1642 = vmul.f32 %v1373, %v1619
        %v1643 = vmul.f32 %v1374, %v1619
        %v1644 = vmul.f32 %v1376, %v1619
        %v1645 = vmul.f32 %v1377, %v1619
        %v1646 = vmul.f32 %v1379, %v1619
        %v1647 = vmul.f32 %v1380, %v1619
        %v1648 = vmul.f32 %v1382, %v1619
        %v1649 = vmul.f32 %v1383, %v1619
        %v1650 = vmul.f32 %v1385, %v1619
        %v1651 = vmul.f32 %v1386, %v1619
        %v1652 = vadd.f32 %v1584, %v1620
        %v1653 = vadd.f32 %v1585, %v1621
        %v1654 = vadd.f32 %v1586, %v1622
        %v1655 = vadd.f32 %v1587, %v1623
        %v1656 = vadd.f32 %v1588, %v1624
        %v1657 = vadd.f32 %v1589, %v1625
        %v1658 = vadd.f32 %v1590, %v1626
        %v1659 = vadd.f32 %v1591, %v1627
        %v1660 = vadd.f32 %v1592, %v1628
        %v1661 = vadd.f32 %v1593, %v1629
        %v1662 = vadd.f32 %v1594, %v1630
        %v1663 = vadd.f32 %v1595, %v1631
        %v1664 = vadd.f32 %v1596, %v1632
        %v1665 = vadd.f32 %v1597, %v1633
        %v1666 = vadd.f32 %v1598, %v1634
        %v1667 = vadd.f32 %v1599, %v1635
        %v1668 = vadd.f32 %v1600, %v1636
        %v1669 = vadd.f32 %v1601, %v1637
        %v1670 = vadd.f32 %v1602, %v1638
        %v1671 = vadd.f32 %v1603, %v1639
        %v1672 = vadd.f32 %v1604, %v1640
        %v1673 = vadd.f32 %v1605, %v1641
        %v1674 = vadd.f32 %v1606, %v1642
        %v1675 = vadd.f32 %v1607, %v1643
        %v1676 = vadd.f32 %v1608, %v1644
        %v1677 = vadd.f32 %v1609, %v1645
        %v1678 = vadd.f32 %v1610, %v1646
        %v1679 = vadd.f32 %v1611, %v1647
        %v1680 = vadd.f32 %v1612, %v1648
        %v1681 = vadd.f32 %v1613, %v1649
        %v1682 = vadd.f32 %v1614, %v1650
        %v1683 = vadd.f32 %v1615, %v1651
        %v1684 = vlaneseq
        %v1685 = vshrl.u32 %v1684, 7
        %v1686 = vsub.s32 0, %v1685
        %v1687 = vrot.slane %v542, %v1686
        %v1688 = vmul.f32 %v1532, %v1687
        %v1689 = vmul.f32 %v1516, %v1687
        %v1690 = vmul.f32 %v1533, %v1687
        %v1691 = vmul.f32 %v1517, %v1687
        %v1692 = vmul.f32 %v1534, %v1687
        %v1693 = vmul.f32 %v1518, %v1687
        %v1694 = vmul.f32 %v1535, %v1687
        %v1695 = vmul.f32 %v1519, %v1687
        %v1696 = vmul.f32 %v1536, %v1687
        %v1697 = vmul.f32 %v1520, %v1687
        %v1698 = vmul.f32 %v1537, %v1687
        %v1699 = vmul.f32 %v1521, %v1687
        %v1700 = vmul.f32 %v1538, %v1687
        %v1701 = vmul.f32 %v1522, %v1687
        %v1702 = vmul.f32 %v1539, %v1687
        %v1703 = vmul.f32 %v1523, %v1687
        %v1704 = vmul.f32 %v1540, %v1687
        %v1705 = vmul.f32 %v1524, %v1687
        %v1706 = vmul.f32 %v1541, %v1687
        %v1707 = vmul.f32 %v1525, %v1687
        %v1708 = vmul.f32 %v1542, %v1687
        %v1709 = vmul.f32 %v1526, %v1687
        %v1710 = vmul.f32 %v1543, %v1687
        %v1711 = vmul.f32 %v1527, %v1687
        %v1712 = vmul.f32 %v1544, %v1687
        %v1713 = vmul.f32 %v1528, %v1687
        %v1714 = vmul.f32 %v1545, %v1687
        %v1715 = vmul.f32 %v1529, %v1687
        %v1716 = vmul.f32 %v1546, %v1687
        %v1717 = vmul.f32 %v1530, %v1687
        %v1718 = vmul.f32 %v1547, %v1687
        %v1719 = vmul.f32 %v1531, %v1687
        %v1720 = vadd.f32 %v1652, %v1688
        %v1721 = vadd.f32 %v1653, %v1689
        %v1722 = vadd.f32 %v1654, %v1690
        %v1723 = vadd.f32 %v1655, %v1691
        %v1724 = vadd.f32 %v1656, %v1692
        %v1725 = vadd.f32 %v1657, %v1693
        %v1726 = vadd.f32 %v1658, %v1694
        %v1727 = vadd.f32 %v1659, %v1695
        %v1728 = vadd.f32 %v1660, %v1696
        %v1729 = vadd.f32 %v1661, %v1697
        %v1730 = vadd.f32 %v1662, %v1698
        %v1731 = vadd.f32 %v1663, %v1699
        %v1732 = vadd.f32 %v1664, %v1700
        %v1733 = vadd.f32 %v1665, %v1701
        %v1734 = vadd.f32 %v1666, %v1702
        %v1735 = vadd.f32 %v1667, %v1703
        %v1736 = vadd.f32 %v1668, %v1704
        %v1737 = vadd.f32 %v1669, %v1705
        %v1738 = vadd.f32 %v1670, %v1706
        %v1739 = vadd.f32 %v1671, %v1707
        %v1740 = vadd.f32 %v1672, %v1708
        %v1741 = vadd.f32 %v1673, %v1709
        %v1742 = vadd.f32 %v1674, %v1710
        %v1743 = vadd.f32 %v1675, %v1711
        %v1744 = vadd.f32 %v1676, %v1712
        %v1745 = vadd.f32 %v1677, %v1713
        %v1746 = vadd.f32 %v1678, %v1714
        %v1747 = vadd.f32 %v1679, %v1715
        %v1748 = vadd.f32 %v1680, %v1716
        %v1749 = vadd.f32 %v1681, %v1717
        %v1750 = vadd.f32 %v1682, %v1718
        %v1751 = vadd.f32 %v1683, %v1719
        %v1752 = vlaneseq
        %v1753 = vshrl.u32 %v1752, 7
        %v1754 = vsub.s32 1, %v1753
        %v1755 = vrot.slane %v542, %v1754
        %v1756 = vadd.f32 %v1720, %v1755
        %v1757 = vadd.f32 %v1721, %v1755
        %v1758 = vadd.f32 %v1722, %v1755
        %v1759 = vadd.f32 %v1723, %v1755
        %v1760 = vadd.f32 %v1724, %v1755
        %v1761 = vadd.f32 %v1725, %v1755
        %v1762 = vadd.f32 %v1726, %v1755
        %v1763 = vadd.f32 %v1727, %v1755
        %v1764 = vadd.f32 %v1728, %v1755
        %v1765 = vadd.f32 %v1729, %v1755
        %v1766 = vadd.f32 %v1730, %v1755
        %v1767 = vadd.f32 %v1731, %v1755
        %v1768 = vadd.f32 %v1732, %v1755
        %v1769 = vadd.f32 %v1733, %v1755
        %v1770 = vadd.f32 %v1734, %v1755
        %v1771 = vadd.f32 %v1735, %v1755
        %v1772 = vadd.f32 %v1736, %v1755
        %v1773 = vadd.f32 %v1737, %v1755
        %v1774 = vadd.f32 %v1738, %v1755
        %v1775 = vadd.f32 %v1739, %v1755
        %v1776 = vadd.f32 %v1740, %v1755
        %v1777 = vadd.f32 %v1741, %v1755
        %v1778 = vadd.f32 %v1742, %v1755
        %v1779 = vadd.f32 %v1743, %v1755
        %v1780 = vadd.f32 %v1744, %v1755
        %v1781 = vadd.f32 %v1745, %v1755
        %v1782 = vadd.f32 %v1746, %v1755
        %v1783 = vadd.f32 %v1747, %v1755
        %v1784 = vadd.f32 %v1748, %v1755
        %v1785 = vadd.f32 %v1749, %v1755
        %v1786 = vadd.f32 %v1750, %v1755
        %v1787 = vadd.f32 %v1751, %v1755
        %v1788 = vpack.c.bf16 %v1757, %v1756
        %v1789 = vpack.c.bf16 %v1759, %v1758
        %v1790 = vpack.c.bf16 %v1761, %v1760
        %v1791 = vpack.c.bf16 %v1763, %v1762
        %v1792 = vpack.c.bf16 %v1765, %v1764
        %v1793 = vpack.c.bf16 %v1767, %v1766
        %v1794 = vpack.c.bf16 %v1769, %v1768
        %v1795 = vpack.c.bf16 %v1771, %v1770
        %v1796 = vpack.c.bf16 %v1773, %v1772
        %v1797 = vpack.c.bf16 %v1775, %v1774
        %v1798 = vpack.c.bf16 %v1777, %v1776
        %v1799 = vpack.c.bf16 %v1779, %v1778
        %v1800 = vpack.c.bf16 %v1781, %v1780
        %v1801 = vpack.c.bf16 %v1783, %v1782
        %v1802 = vpack.c.bf16 %v1785, %v1784
        %v1803 = vpack.c.bf16 %v1787, %v1786
        %v1804 = vld [vmem:[%s2] sm:$0xf]
        %v1805 = vld [vmem:[%s2 + $0x4] sm:$0xf]
        %v1806 = vld [vmem:[%s2 + $0x8] sm:$0xf]
        %v1807 = vld [vmem:[%s2 + $0xc] sm:$0xf]
        %v1808 = vld [vmem:[%s2 + $0x10] sm:$0xf]
        %v1809 = vld [vmem:[%s2 + $0x14] sm:$0xf]
        %v1810 = vld [vmem:[%s2 + $0x18] sm:$0xf]
        %v1811 = vld [vmem:[%s2 + $0x1c] sm:$0xf]
        %v1812 = vld [vmem:[%s2 + $0x20] sm:$0xf]
        %v1813 = vld [vmem:[%s2 + $0x24] sm:$0xf]
        %v1814 = vld [vmem:[%s2 + $0x28] sm:$0xf]
        %v1815 = vld [vmem:[%s2 + $0x2c] sm:$0xf]
        %v1816 = vld [vmem:[%s2 + $0x30] sm:$0xf]
        %v1817 = vld [vmem:[%s2 + $0x34] sm:$0xf]
        %v1818 = vld [vmem:[%s2 + $0x38] sm:$0xf]
        %v1819 = vld [vmem:[%s2 + $0x3c] sm:$0xf]
        %v1820 = vld [vmem:[%s3] sm:$0x1]
        %v1822 = vlaneseq
        %v1823 = vshrl.u32 %v1822, 7
        %v1824 = vsub.s32 0, %v1823
        %v1825 = vrot.slane %v1820, %v1824
        %v1843 = vunpack.c.l.b16 %v1804
        %v1844 = vunpack.c.l.b16 %v1805
        %v1845 = vunpack.c.l.b16 %v1806
        %v1846 = vunpack.c.l.b16 %v1807
        %v1847 = vunpack.c.l.b16 %v1808
        %v1848 = vunpack.c.l.b16 %v1809
        %v1849 = vunpack.c.l.b16 %v1810
        %v1850 = vunpack.c.l.b16 %v1811
        %v1851 = vunpack.c.l.b16 %v1812
        %v1852 = vunpack.c.l.b16 %v1813
        %v1853 = vunpack.c.l.b16 %v1814
        %v1854 = vunpack.c.l.b16 %v1815
        %v1855 = vunpack.c.l.b16 %v1816
        %v1856 = vunpack.c.l.b16 %v1817
        %v1857 = vunpack.c.l.b16 %v1818
        %v1858 = vunpack.c.l.b16 %v1819
        %v1859 = vpack.c.b16 %v1844, %v1843
        %v1860 = vpack.c.b16 %v1846, %v1845
        %v1861 = vpack.c.b16 %v1848, %v1847
        %v1862 = vpack.c.b16 %v1850, %v1849
        %v1863 = vpack.c.b16 %v1852, %v1851
        %v1864 = vpack.c.b16 %v1854, %v1853
        %v1865 = vpack.c.b16 %v1856, %v1855
        %v1866 = vpack.c.b16 %v1858, %v1857
        %1875 = vmatprep.subr.bf16.mxu0 0
        %1876 = vmatpush1.bf16.msra.mxu0 %v1859
        %1877 = vmatprep.subr.bf16.mxu0 0
        %1878 = vmatpush1.bf16.msra.mxu0 %v1860
        %1879 = vmatprep.subr.bf16.mxu0 0
        %1880 = vmatpush1.bf16.msra.mxu0 %v1861
        %1881 = vmatprep.subr.bf16.mxu0 0
        %1882 = vmatpush1.bf16.msra.mxu0 %v1862
        %1883 = vmatprep.subr.bf16.mxu0 0
        %1884 = vmatpush1.bf16.msra.mxu0 %v1863
        %1885 = vmatprep.subr.bf16.mxu0 0
        %1886 = vmatpush1.bf16.msra.mxu0 %v1864
        %1887 = vmatprep.subr.bf16.mxu0 0
        %1888 = vmatpush1.bf16.msra.mxu0 %v1865
        %1889 = vmatprep.subr.bf16.mxu0 0
        %1890 = vmatpush1.bf16.msra.mxu0 %v1866
        %1891 = vmatprep.subr.bf16.mxu0 0
        %1892 = vmatpush1.bf16.msra.mxu0 0
        %1893 = vmatprep.subr.bf16.mxu0 0
        %1894 = vmatpush1.bf16.msra.mxu0 0
        %1895 = vmatprep.subr.bf16.mxu0 0
        %1896 = vmatpush1.bf16.msra.mxu0 0
        %1897 = vmatprep.subr.bf16.mxu0 0
        %1898 = vmatpush1.bf16.msra.mxu0 0
        %1899 = vmatprep.subr.bf16.mxu0 0
        %1900 = vmatpush1.bf16.msra.mxu0 0
        %1901 = vmatprep.subr.bf16.mxu0 0
        %1902 = vmatpush1.bf16.msra.mxu0 0
        %1903 = vmatprep.subr.bf16.mxu0 0
        %1904 = vmatpush1.bf16.msra.mxu0 0
        %1905 = vmatprep.subr.bf16.mxu0 0
        %1906 = vmatpush1.bf16.msra.mxu0 0
        %1907 = vmatprep.mubr.bf16.mxu0 0
        %1908 = vmatmul.mubr.bf16.gmra.mrb[0].mxu0 %v1788
        %v1909 = vpop.f32.mrb[0].mxu0
        %v1910 = vadd.f32 %v1825, %v1909
        %v1911 = vpop.f32.mrb[0].mxu0
        %v1912 = vpop.f32.mrb[0].mxu0
        %v1913 = vadd.f32 %v1825, %v1912
        %v1914 = vpop.f32.mrb[0].mxu0
        %1915 = vmatprep.mubr.bf16.mxu0 0
        %1916 = vmatmul.mubr.bf16.gmra.mrb[0].mxu0 %v1789
        %v1917 = vpop.f32.mrb[0].mxu0
        %v1918 = vadd.f32 %v1825, %v1917
        %v1919 = vpop.f32.mrb[0].mxu0
        %v1920 = vpop.f32.mrb[0].mxu0
        %v1921 = vadd.f32 %v1825, %v1920
        %v1922 = vpop.f32.mrb[0].mxu0
        %1923 = vmatprep.mubr.bf16.mxu0 0
        %1924 = vmatmul.mubr.bf16.gmra.mrb[0].mxu0 %v1790
        %v1925 = vpop.f32.mrb[0].mxu0
        %v1926 = vadd.f32 %v1825, %v1925
        %v1927 = vpop.f32.mrb[0].mxu0
        %v1928 = vpop.f32.mrb[0].mxu0
        %v1929 = vadd.f32 %v1825, %v1928
        %v1930 = vpop.f32.mrb[0].mxu0
        %1931 = vmatprep.mubr.bf16.mxu0 0
        %1932 = vmatmul.mubr.bf16.gmra.mrb[0].mxu0 %v1791
        %v1933 = vpop.f32.mrb[0].mxu0
        %v1934 = vadd.f32 %v1825, %v1933
        %v1935 = vpop.f32.mrb[0].mxu0
        %v1936 = vpop.f32.mrb[0].mxu0
        %v1937 = vadd.f32 %v1825, %v1936
        %v1938 = vpop.f32.mrb[0].mxu0
        %1939 = vmatprep.mubr.bf16.mxu0 0
        %1940 = vmatmul.mubr.bf16.gmra.mrb[0].mxu0 %v1792
        %v1941 = vpop.f32.mrb[0].mxu0
        %v1942 = vadd.f32 %v1825, %v1941
        %v1943 = vpop.f32.mrb[0].mxu0
        %v1944 = vpop.f32.mrb[0].mxu0
        %v1945 = vadd.f32 %v1825, %v1944
        %v1946 = vpop.f32.mrb[0].mxu0
        %1947 = vmatprep.mubr.bf16.mxu0 0
        %1948 = vmatmul.mubr.bf16.gmra.mrb[0].mxu0 %v1793
        %v1949 = vpop.f32.mrb[0].mxu0
        %v1950 = vadd.f32 %v1825, %v1949
        %v1951 = vpop.f32.mrb[0].mxu0
        %v1952 = vpop.f32.mrb[0].mxu0
        %v1953 = vadd.f32 %v1825, %v1952
        %v1954 = vpop.f32.mrb[0].mxu0
        %1955 = vmatprep.mubr.bf16.mxu0 0
        %1956 = vmatmul.mubr.bf16.gmra.mrb[0].mxu0 %v1794
        %v1957 = vpop.f32.mrb[0].mxu0
        %v1958 = vadd.f32 %v1825, %v1957
        %v1959 = vpop.f32.mrb[0].mxu0
        %v1960 = vpop.f32.mrb[0].mxu0
        %v1961 = vadd.f32 %v1825, %v1960
        %v1962 = vpop.f32.mrb[0].mxu0
        %1963 = vmatprep.mubr.bf16.mxu0 0
        %1964 = vmatmul.mubr.bf16.gmra.mrb[0].mxu0 %v1795
        %v1965 = vpop.f32.mrb[0].mxu0
        %v1966 = vadd.f32 %v1825, %v1965
        %v1967 = vpop.f32.mrb[0].mxu0
        %v1968 = vpop.f32.mrb[0].mxu0
        %v1969 = vadd.f32 %v1825, %v1968
        %v1970 = vpop.f32.mrb[0].mxu0
        %1971 = vmatprep.mubr.bf16.mxu0 0
        %1972 = vmatmul.mubr.bf16.gmra.mrb[0].mxu0 %v1796
        %v1973 = vpop.f32.mrb[0].mxu0
        %v1974 = vadd.f32 %v1825, %v1973
        %v1975 = vpop.f32.mrb[0].mxu0
        %v1976 = vpop.f32.mrb[0].mxu0
        %v1977 = vadd.f32 %v1825, %v1976
        %v1978 = vpop.f32.mrb[0].mxu0
        %1979 = vmatprep.mubr.bf16.mxu0 0
        %1980 = vmatmul.mubr.bf16.gmra.mrb[0].mxu0 %v1797
        %v1981 = vpop.f32.mrb[0].mxu0
        %v1982 = vadd.f32 %v1825, %v1981
        %v1983 = vpop.f32.mrb[0].mxu0
        %v1984 = vpop.f32.mrb[0].mxu0
        %v1985 = vadd.f32 %v1825, %v1984
        %v1986 = vpop.f32.mrb[0].mxu0
        %1987 = vmatprep.mubr.bf16.mxu0 0
        %1988 = vmatmul.mubr.bf16.gmra.mrb[0].mxu0 %v1798
        %v1989 = vpop.f32.mrb[0].mxu0
        %v1990 = vadd.f32 %v1825, %v1989
        %v1991 = vpop.f32.mrb[0].mxu0
        %v1992 = vpop.f32.mrb[0].mxu0
        %v1993 = vadd.f32 %v1825, %v1992
        %v1994 = vpop.f32.mrb[0].mxu0
        %1995 = vmatprep.mubr.bf16.mxu0 0
        %1996 = vmatmul.mubr.bf16.gmra.mrb[0].mxu0 %v1799
        %v1997 = vpop.f32.mrb[0].mxu0
        %v1998 = vadd.f32 %v1825, %v1997
        %v1999 = vpop.f32.mrb[0].mxu0
        %v2000 = vpop.f32.mrb[0].mxu0
        %v2001 = vadd.f32 %v1825, %v2000
        %v2002 = vpop.f32.mrb[0].mxu0
        %2003 = vmatprep.mubr.bf16.mxu0 0
        %2004 = vmatmul.mubr.bf16.gmra.mrb[0].mxu0 %v1800
        %v2005 = vpop.f32.mrb[0].mxu0
        %v2006 = vadd.f32 %v1825, %v2005
        %v2007 = vpop.f32.mrb[0].mxu0
        %v2008 = vpop.f32.mrb[0].mxu0
        %v2009 = vadd.f32 %v1825, %v2008
        %v2010 = vpop.f32.mrb[0].mxu0
        %2011 = vmatprep.mubr.bf16.mxu0 0
        %2012 = vmatmul.mubr.bf16.gmra.mrb[0].mxu0 %v1801
        %v2013 = vpop.f32.mrb[0].mxu0
        %v2014 = vadd.f32 %v1825, %v2013
        %v2015 = vpop.f32.mrb[0].mxu0
        %v2016 = vpop.f32.mrb[0].mxu0
        %v2017 = vadd.f32 %v1825, %v2016
        %v2018 = vpop.f32.mrb[0].mxu0
        %2019 = vmatprep.mubr.bf16.mxu0 0
        %2020 = vmatmul.mubr.bf16.gmra.mrb[0].mxu0 %v1802
        %v2021 = vpop.f32.mrb[0].mxu0
        %v2022 = vadd.f32 %v1825, %v2021
        %v2023 = vpop.f32.mrb[0].mxu0
        %v2024 = vpop.f32.mrb[0].mxu0
        %v2025 = vadd.f32 %v1825, %v2024
        %v2026 = vpop.f32.mrb[0].mxu0
        %2027 = vmatprep.mubr.bf16.mxu0 0
        %2028 = vmatmul.mubr.bf16.gmra.mrb[0].mxu0 %v1803
        %v2029 = vpop.f32.mrb[0].mxu0
        %v2030 = vadd.f32 %v1825, %v2029
        %v2031 = vpop.f32.mrb[0].mxu0
        %v2032 = vpop.f32.mrb[0].mxu0
        %v2033 = vadd.f32 %v1825, %v2032
        %v2034 = vpop.f32.mrb[0].mxu0
        %2035 = vdwg.mxu0
        %v2036 = vmax.f32 %v1910, 0.0
        %v2037 = vmax.f32 %v1913, 0.0
        %v2038 = vmax.f32 %v1918, 0.0
        %v2039 = vmax.f32 %v1921, 0.0
        %v2040 = vmax.f32 %v1926, 0.0
        %v2041 = vmax.f32 %v1929, 0.0
        %v2042 = vmax.f32 %v1934, 0.0
        %v2043 = vmax.f32 %v1937, 0.0
        %v2044 = vmax.f32 %v1942, 0.0
        %v2045 = vmax.f32 %v1945, 0.0
        %v2046 = vmax.f32 %v1950, 0.0
        %v2047 = vmax.f32 %v1953, 0.0
        %v2048 = vmax.f32 %v1958, 0.0
        %v2049 = vmax.f32 %v1961, 0.0
        %v2050 = vmax.f32 %v1966, 0.0
        %v2051 = vmax.f32 %v1969, 0.0
        %v2052 = vmax.f32 %v1974, 0.0
        %v2053 = vmax.f32 %v1977, 0.0
        %v2054 = vmax.f32 %v1982, 0.0
        %v2055 = vmax.f32 %v1985, 0.0
        %v2056 = vmax.f32 %v1990, 0.0
        %v2057 = vmax.f32 %v1993, 0.0
        %v2058 = vmax.f32 %v1998, 0.0
        %v2059 = vmax.f32 %v2001, 0.0
        %v2060 = vmax.f32 %v2006, 0.0
        %v2061 = vmax.f32 %v2009, 0.0
        %v2062 = vmax.f32 %v2014, 0.0
        %v2063 = vmax.f32 %v2017, 0.0
        %v2064 = vmax.f32 %v2022, 0.0
        %v2065 = vmax.f32 %v2025, 0.0
        %v2066 = vmax.f32 %v2030, 0.0
        %v2067 = vmax.f32 %v2033, 0.0
        %s2068 = scalar_lea.vmem [#allocation3], 24
        %2069 = vst.msk [vmem:[%s2068] sm:$0xff] %vm429, %v2036
        %2070 = vst.msk [vmem:[%s2068 + $0x8] sm:$0xff] %vm429, %v2037
        %2071 = vst.msk [vmem:[%s2068 + $0x18] sm:$0xff] %vm429, %v2038
        %2072 = vst.msk [vmem:[%s2068 + $0x20] sm:$0xff] %vm429, %v2039
        %2073 = vst.msk [vmem:[%s2068 + $0x30] sm:$0xff] %vm429, %v2040
        %2074 = vst.msk [vmem:[%s2068 + $0x38] sm:$0xff] %vm429, %v2041
        %2075 = vst.msk [vmem:[%s2068 + $0x48] sm:$0xff] %vm429, %v2042
        %2076 = vst.msk [vmem:[%s2068 + $0x50] sm:$0xff] %vm429, %v2043
        %2077 = vst.msk [vmem:[%s2068 + $0x60] sm:$0xff] %vm429, %v2044
        %2078 = vst.msk [vmem:[%s2068 + $0x68] sm:$0xff] %vm429, %v2045
        %2079 = vst.msk [vmem:[%s2068 + $0x78] sm:$0xff] %vm429, %v2046
        %2080 = vst.msk [vmem:[%s2068 + $0x80] sm:$0xff] %vm429, %v2047
        %2081 = vst.msk [vmem:[%s2068 + $0x90] sm:$0xff] %vm429, %v2048
        %2082 = vst.msk [vmem:[%s2068 + $0x98] sm:$0xff] %vm429, %v2049
        %2083 = vst.msk [vmem:[%s2068 + $0xa8] sm:$0xff] %vm429, %v2050
        %2084 = vst.msk [vmem:[%s2068 + $0xb0] sm:$0xff] %vm429, %v2051
        %2085 = vst.msk [vmem:[%s2068 + $0xc0] sm:$0xff] %vm429, %v2052
        %2086 = vst.msk [vmem:[%s2068 + $0xc8] sm:$0xff] %vm429, %v2053
        %2087 = vst.msk [vmem:[%s2068 + $0xd8] sm:$0xff] %vm429, %v2054
        %2088 = vst.msk [vmem:[%s2068 + $0xe0] sm:$0xff] %vm429, %v2055
        %2089 = vst.msk [vmem:[%s2068 + $0xf0] sm:$0xff] %vm429, %v2056
        %2090 = vst.msk [vmem:[%s2068 + $0xf8] sm:$0xff] %vm429, %v2057
        %2091 = vst.msk [vmem:[%s2068 + $0x108] sm:$0xff] %vm429, %v2058
        %2092 = vst.msk [vmem:[%s2068 + $0x110] sm:$0xff] %vm429, %v2059
        %2093 = vst.msk [vmem:[%s2068 + $0x120] sm:$0xff] %vm429, %v2060
        %2094 = vst.msk [vmem:[%s2068 + $0x128] sm:$0xff] %vm429, %v2061
        %2095 = vst.msk [vmem:[%s2068 + $0x138] sm:$0xff] %vm429, %v2062
        %2096 = vst.msk [vmem:[%s2068 + $0x140] sm:$0xff] %vm429, %v2063
        %2097 = vst.msk [vmem:[%s2068 + $0x150] sm:$0xff] %vm429, %v2064
        %2098 = vst.msk [vmem:[%s2068 + $0x158] sm:$0xff] %vm429, %v2065
        %2099 = vst.msk [vmem:[%s2068 + $0x168] sm:$0xff] %vm429, %v2066
        %2100 = vst.msk [vmem:[%s2068 + $0x170] sm:$0xff] %vm429, %v2067
        %v2101 = vld [vmem:[%s4] sm:$0xff]
        %v2102 = vld [vmem:[%s4 + $0x8] sm:$0x3]
        %v2103 = vld [vmem:[#allocation3] sm:$0xff]
        %v2104 = vld [vmem:[#allocation3 + $0x8] sm:$0xff]
        %v2105 = vld [vmem:[#allocation3 + $0x10] sm:$0xff]
        %v2106 = vld [vmem:[#allocation3 + $0x18] sm:$0xff]
        %v2107 = vld [vmem:[#allocation3 + $0x20] sm:$0xff]
        %v2108 = vld [vmem:[#allocation3 + $0x28] sm:$0xff]
        %v2109 = vld [vmem:[#allocation3 + $0x30] sm:$0xff]
        %v2110 = vld [vmem:[#allocation3 + $0x38] sm:$0xff]
        %v2111 = vld [vmem:[#allocation3 + $0x40] sm:$0xff]
        %v2112 = vld [vmem:[#allocation3 + $0x48] sm:$0xff]
        %v2113 = vld [vmem:[#allocation3 + $0x50] sm:$0xff]
        %v2114 = vld [vmem:[#allocation3 + $0x58] sm:$0xff]
        %v2115 = vld [vmem:[#allocation3 + $0x60] sm:$0xff]
        %v2116 = vld [vmem:[#allocation3 + $0x68] sm:$0xff]
        %v2117 = vld [vmem:[#allocation3 + $0x70] sm:$0xff]
        %v2118 = vld [vmem:[#allocation3 + $0x78] sm:$0xff]
        %v2119 = vld [vmem:[#allocation3 + $0x80] sm:$0xff]
        %v2120 = vld [vmem:[#allocation3 + $0x88] sm:$0xff]
        %v2121 = vld [vmem:[#allocation3 + $0x90] sm:$0xff]
        %v2122 = vld [vmem:[#allocation3 + $0x98] sm:$0xff]
        %v2123 = vld [vmem:[#allocation3 + $0xa0] sm:$0xff]
        %v2124 = vld [vmem:[#allocation3 + $0xa8] sm:$0xff]
        %v2125 = vld [vmem:[#allocation3 + $0xb0] sm:$0xff]
        %v2126 = vld [vmem:[#allocation3 + $0xb8] sm:$0xff]
        %v2127 = vld [vmem:[#allocation3 + $0xc0] sm:$0xff]
        %v2128 = vld [vmem:[#allocation3 + $0xc8] sm:$0xff]
        %v2129 = vld [vmem:[#allocation3 + $0xd0] sm:$0xff]
        %v2130 = vld [vmem:[#allocation3 + $0xd8] sm:$0xff]
        %v2131 = vld [vmem:[#allocation3 + $0xe0] sm:$0xff]
        %v2132 = vld [vmem:[#allocation3 + $0xe8] sm:$0xff]
        %v2133 = vld [vmem:[#allocation3 + $0xf0] sm:$0xff]
        %v2134 = vld [vmem:[#allocation3 + $0xf8] sm:$0xff]
        %v2135 = vld [vmem:[#allocation3 + $0x100] sm:$0xff]
        %v2136 = vld [vmem:[#allocation3 + $0x108] sm:$0xff]
        %v2137 = vld [vmem:[#allocation3 + $0x110] sm:$0xff]
        %v2138 = vld [vmem:[#allocation3 + $0x118] sm:$0xff]
        %v2139 = vld [vmem:[#allocation3 + $0x120] sm:$0xff]
        %v2140 = vld [vmem:[#allocation3 + $0x128] sm:$0xff]
        %v2141 = vld [vmem:[#allocation3 + $0x130] sm:$0xff]
        %v2142 = vld [vmem:[#allocation3 + $0x138] sm:$0xff]
        %v2143 = vld [vmem:[#allocation3 + $0x140] sm:$0xff]
        %v2144 = vld [vmem:[#allocation3 + $0x148] sm:$0xff]
        %v2145 = vld [vmem:[#allocation3 + $0x150] sm:$0xff]
        %v2146 = vld [vmem:[#allocation3 + $0x158] sm:$0xff]
        %v2147 = vld [vmem:[#allocation3 + $0x160] sm:$0xff]
        %v2148 = vld [vmem:[#allocation3 + $0x168] sm:$0xff]
        %v2149 = vld [vmem:[#allocation3 + $0x170] sm:$0xff]
        %v2150 = vld [vmem:[#allocation3 + $0x178] sm:$0xff]
        %v2151 = vrot.slane %v2103, 7
        %v2152 = vrot.slane %v2106, 7
        %v2153 = vrot.slane %v2109, 7
        %v2154 = vrot.slane %v2112, 7
        %v2155 = vrot.slane %v2115, 7
        %v2156 = vrot.slane %v2118, 7
        %v2157 = vrot.slane %v2121, 7
        %v2158 = vrot.slane %v2124, 7
        %v2159 = vrot.slane %v2127, 7
        %v2160 = vrot.slane %v2130, 7
        %v2161 = vrot.slane %v2133, 7
        %v2162 = vrot.slane %v2136, 7
        %v2163 = vrot.slane %v2139, 7
        %v2164 = vrot.slane %v2142, 7
        %v2165 = vrot.slane %v2145, 7
        %v2166 = vrot.slane %v2148, 7
        %v2167 = vrot.slane %v2104, 7
        %v2168 = vrot.slane %v2107, 7
        %v2169 = vrot.slane %v2110, 7
        %v2170 = vrot.slane %v2113, 7
        %v2171 = vrot.slane %v2116, 7
        %v2172 = vrot.slane %v2119, 7
        %v2173 = vrot.slane %v2122, 7
        %v2174 = vrot.slane %v2125, 7
        %v2175 = vrot.slane %v2128, 7
        %v2176 = vrot.slane %v2131, 7
        %v2177 = vrot.slane %v2134, 7
        %v2178 = vrot.slane %v2137, 7
        %v2179 = vrot.slane %v2140, 7
        %v2180 = vrot.slane %v2143, 7
        %v2181 = vrot.slane %v2146, 7
        %v2182 = vrot.slane %v2149, 7
        %v2183 = vrot.slane %v2105, 7
        %v2184 = vrot.slane %v2108, 7
        %v2185 = vrot.slane %v2111, 7
        %v2186 = vrot.slane %v2114, 7
        %v2187 = vrot.slane %v2117, 7
        %v2188 = vrot.slane %v2120, 7
        %v2189 = vrot.slane %v2123, 7
        %v2190 = vrot.slane %v2126, 7
        %v2191 = vrot.slane %v2129, 7
        %v2192 = vrot.slane %v2132, 7
        %v2193 = vrot.slane %v2135, 7
        %v2194 = vrot.slane %v2138, 7
        %v2195 = vrot.slane %v2141, 7
        %v2196 = vrot.slane %v2144, 7
        %v2197 = vrot.slane %v2147, 7
        %v2198 = vrot.slane %v2150, 7
        %v2199 = vsel %vm641, %v2151, %v2167
        %v2200 = vsel %vm641, %v2152, %v2168
        %v2201 = vsel %vm641, %v2153, %v2169
        %v2202 = vsel %vm641, %v2154, %v2170
        %v2203 = vsel %vm641, %v2155, %v2171
        %v2204 = vsel %vm641, %v2156, %v2172
        %v2205 = vsel %vm641, %v2157, %v2173
        %v2206 = vsel %vm641, %v2158, %v2174
        %v2207 = vsel %vm641, %v2159, %v2175
        %v2208 = vsel %vm641, %v2160, %v2176
        %v2209 = vsel %vm641, %v2161, %v2177
        %v2210 = vsel %vm641, %v2162, %v2178
        %v2211 = vsel %vm641, %v2163, %v2179
        %v2212 = vsel %vm641, %v2164, %v2180
        %v2213 = vsel %vm641, %v2165, %v2181
        %v2214 = vsel %vm641, %v2166, %v2182
        %v2215 = vsel %vm641, %v2183, %v2151
        %v2216 = vsel %vm641, %v2184, %v2152
        %v2217 = vsel %vm641, %v2185, %v2153
        %v2218 = vsel %vm641, %v2186, %v2154
        %v2219 = vsel %vm641, %v2187, %v2155
        %v2220 = vsel %vm641, %v2188, %v2156
        %v2221 = vsel %vm641, %v2189, %v2157
        %v2222 = vsel %vm641, %v2190, %v2158
        %v2223 = vsel %vm641, %v2191, %v2159
        %v2224 = vsel %vm641, %v2192, %v2160
        %v2225 = vsel %vm641, %v2193, %v2161
        %v2226 = vsel %vm641, %v2194, %v2162
        %v2227 = vsel %vm641, %v2195, %v2163
        %v2228 = vsel %vm641, %v2196, %v2164
        %v2229 = vsel %vm641, %v2197, %v2165
        %v2230 = vsel %vm641, %v2198, %v2166
        %v2231 = vrot.slane %v2103, 1
        %v2232 = vrot.slane %v2106, 1
        %v2233 = vrot.slane %v2109, 1
        %v2234 = vrot.slane %v2112, 1
        %v2235 = vrot.slane %v2115, 1
        %v2236 = vrot.slane %v2118, 1
        %v2237 = vrot.slane %v2121, 1
        %v2238 = vrot.slane %v2124, 1
        %v2239 = vrot.slane %v2127, 1
        %v2240 = vrot.slane %v2130, 1
        %v2241 = vrot.slane %v2133, 1
        %v2242 = vrot.slane %v2136, 1
        %v2243 = vrot.slane %v2139, 1
        %v2244 = vrot.slane %v2142, 1
        %v2245 = vrot.slane %v2145, 1
        %v2246 = vrot.slane %v2148, 1
        %v2247 = vrot.slane %v2104, 1
        %v2248 = vrot.slane %v2107, 1
        %v2249 = vrot.slane %v2110, 1
        %v2250 = vrot.slane %v2113, 1
        %v2251 = vrot.slane %v2116, 1
        %v2252 = vrot.slane %v2119, 1
        %v2253 = vrot.slane %v2122, 1
        %v2254 = vrot.slane %v2125, 1
        %v2255 = vrot.slane %v2128, 1
        %v2256 = vrot.slane %v2131, 1
        %v2257 = vrot.slane %v2134, 1
        %v2258 = vrot.slane %v2137, 1
        %v2259 = vrot.slane %v2140, 1
        %v2260 = vrot.slane %v2143, 1
        %v2261 = vrot.slane %v2146, 1
        %v2262 = vrot.slane %v2149, 1
        %v2263 = vrot.slane %v2105, 1
        %v2264 = vrot.slane %v2108, 1
        %v2265 = vrot.slane %v2111, 1
        %v2266 = vrot.slane %v2114, 1
        %v2267 = vrot.slane %v2117, 1
        %v2268 = vrot.slane %v2120, 1
        %v2269 = vrot.slane %v2123, 1
        %v2270 = vrot.slane %v2126, 1
        %v2271 = vrot.slane %v2129, 1
        %v2272 = vrot.slane %v2132, 1
        %v2273 = vrot.slane %v2135, 1
        %v2274 = vrot.slane %v2138, 1
        %v2275 = vrot.slane %v2141, 1
        %v2276 = vrot.slane %v2144, 1
        %v2277 = vrot.slane %v2147, 1
        %v2278 = vrot.slane %v2150, 1
        %v2279 = vsel %vm722, %v2247, %v2263
        %v2280 = vsel %vm722, %v2248, %v2264
        %v2281 = vsel %vm722, %v2249, %v2265
        %v2282 = vsel %vm722, %v2250, %v2266
        %v2283 = vsel %vm722, %v2251, %v2267
        %v2284 = vsel %vm722, %v2252, %v2268
        %v2285 = vsel %vm722, %v2253, %v2269
        %v2286 = vsel %vm722, %v2254, %v2270
        %v2287 = vsel %vm722, %v2255, %v2271
        %v2288 = vsel %vm722, %v2256, %v2272
        %v2289 = vsel %vm722, %v2257, %v2273
        %v2290 = vsel %vm722, %v2258, %v2274
        %v2291 = vsel %vm722, %v2259, %v2275
        %v2292 = vsel %vm722, %v2260, %v2276
        %v2293 = vsel %vm722, %v2261, %v2277
        %v2294 = vsel %vm722, %v2262, %v2278
        %v2295 = vsel %vm722, %v2231, %v2247
        %v2296 = vsel %vm722, %v2232, %v2248
        %v2297 = vsel %vm722, %v2233, %v2249
        %v2298 = vsel %vm722, %v2234, %v2250
        %v2299 = vsel %vm722, %v2235, %v2251
        %v2300 = vsel %vm722, %v2236, %v2252
        %v2301 = vsel %vm722, %v2237, %v2253
        %v2302 = vsel %vm722, %v2238, %v2254
        %v2303 = vsel %vm722, %v2239, %v2255
        %v2304 = vsel %vm722, %v2240, %v2256
        %v2305 = vsel %vm722, %v2241, %v2257
        %v2306 = vsel %vm722, %v2242, %v2258
        %v2307 = vsel %vm722, %v2243, %v2259
        %v2308 = vsel %vm722, %v2244, %v2260
        %v2309 = vsel %vm722, %v2245, %v2261
        %v2310 = vsel %vm722, %v2246, %v2262
        %v2311 = vlaneseq
        %v2312 = vshrl.u32 %v2311, 7
        %v2313 = vsub.s32 0, %v2312
        %v2314 = vrot.slane %v2101, %v2313
        %v2315 = vmul.f32 %v2215, %v2314
        %v2316 = vmul.f32 %v2199, %v2314
        %v2317 = vmul.f32 %v2216, %v2314
        %v2318 = vmul.f32 %v2200, %v2314
        %v2319 = vmul.f32 %v2217, %v2314
        %v2320 = vmul.f32 %v2201, %v2314
        %v2321 = vmul.f32 %v2218, %v2314
        %v2322 = vmul.f32 %v2202, %v2314
        %v2323 = vmul.f32 %v2219, %v2314
        %v2324 = vmul.f32 %v2203, %v2314
        %v2325 = vmul.f32 %v2220, %v2314
        %v2326 = vmul.f32 %v2204, %v2314
        %v2327 = vmul.f32 %v2221, %v2314
        %v2328 = vmul.f32 %v2205, %v2314
        %v2329 = vmul.f32 %v2222, %v2314
        %v2330 = vmul.f32 %v2206, %v2314
        %v2331 = vmul.f32 %v2223, %v2314
        %v2332 = vmul.f32 %v2207, %v2314
        %v2333 = vmul.f32 %v2224, %v2314
        %v2334 = vmul.f32 %v2208, %v2314
        %v2335 = vmul.f32 %v2225, %v2314
        %v2336 = vmul.f32 %v2209, %v2314
        %v2337 = vmul.f32 %v2226, %v2314
        %v2338 = vmul.f32 %v2210, %v2314
        %v2339 = vmul.f32 %v2227, %v2314
        %v2340 = vmul.f32 %v2211, %v2314
        %v2341 = vmul.f32 %v2228, %v2314
        %v2342 = vmul.f32 %v2212, %v2314
        %v2343 = vmul.f32 %v2229, %v2314
        %v2344 = vmul.f32 %v2213, %v2314
        %v2345 = vmul.f32 %v2230, %v2314
        %v2346 = vmul.f32 %v2214, %v2314
        %v2347 = vlaneseq
        %v2348 = vshrl.u32 %v2347, 7
        %v2349 = vsub.s32 1, %v2348
        %v2350 = vrot.slane %v2101, %v2349
        %v2351 = vmul.f32 %v2103, %v2350
        %v2352 = vmul.f32 %v2104, %v2350
        %v2353 = vmul.f32 %v2106, %v2350
        %v2354 = vmul.f32 %v2107, %v2350
        %v2355 = vmul.f32 %v2109, %v2350
        %v2356 = vmul.f32 %v2110, %v2350
        %v2357 = vmul.f32 %v2112, %v2350
        %v2358 = vmul.f32 %v2113, %v2350
        %v2359 = vmul.f32 %v2115, %v2350
        %v2360 = vmul.f32 %v2116, %v2350
        %v2361 = vmul.f32 %v2118, %v2350
        %v2362 = vmul.f32 %v2119, %v2350
        %v2363 = vmul.f32 %v2121, %v2350
        %v2364 = vmul.f32 %v2122, %v2350
        %v2365 = vmul.f32 %v2124, %v2350
        %v2366 = vmul.f32 %v2125, %v2350
        %v2367 = vmul.f32 %v2127, %v2350
        %v2368 = vmul.f32 %v2128, %v2350
        %v2369 = vmul.f32 %v2130, %v2350
        %v2370 = vmul.f32 %v2131, %v2350
        %v2371 = vmul.f32 %v2133, %v2350
        %v2372 = vmul.f32 %v2134, %v2350
        %v2373 = vmul.f32 %v2136, %v2350
        %v2374 = vmul.f32 %v2137, %v2350
        %v2375 = vmul.f32 %v2139, %v2350
        %v2376 = vmul.f32 %v2140, %v2350
        %v2377 = vmul.f32 %v2142, %v2350
        %v2378 = vmul.f32 %v2143, %v2350
        %v2379 = vmul.f32 %v2145, %v2350
        %v2380 = vmul.f32 %v2146, %v2350
        %v2381 = vmul.f32 %v2148, %v2350
        %v2382 = vmul.f32 %v2149, %v2350
        %v2383 = vadd.f32 %v2315, %v2351
        %v2384 = vadd.f32 %v2316, %v2352
        %v2385 = vadd.f32 %v2317, %v2353
        %v2386 = vadd.f32 %v2318, %v2354
        %v2387 = vadd.f32 %v2319, %v2355
        %v2388 = vadd.f32 %v2320, %v2356
        %v2389 = vadd.f32 %v2321, %v2357
        %v2390 = vadd.f32 %v2322, %v2358
        %v2391 = vadd.f32 %v2323, %v2359
        %v2392 = vadd.f32 %v2324, %v2360
        %v2393 = vadd.f32 %v2325, %v2361
        %v2394 = vadd.f32 %v2326, %v2362
        %v2395 = vadd.f32 %v2327, %v2363
        %v2396 = vadd.f32 %v2328, %v2364
        %v2397 = vadd.f32 %v2329, %v2365
        %v2398 = vadd.f32 %v2330, %v2366
        %v2399 = vadd.f32 %v2331, %v2367
        %v2400 = vadd.f32 %v2332, %v2368
        %v2401 = vadd.f32 %v2333, %v2369
        %v2402 = vadd.f32 %v2334, %v2370
        %v2403 = vadd.f32 %v2335, %v2371
        %v2404 = vadd.f32 %v2336, %v2372
        %v2405 = vadd.f32 %v2337, %v2373
        %v2406 = vadd.f32 %v2338, %v2374
        %v2407 = vadd.f32 %v2339, %v2375
        %v2408 = vadd.f32 %v2340, %v2376
        %v2409 = vadd.f32 %v2341, %v2377
        %v2410 = vadd.f32 %v2342, %v2378
        %v2411 = vadd.f32 %v2343, %v2379
        %v2412 = vadd.f32 %v2344, %v2380
        %v2413 = vadd.f32 %v2345, %v2381
        %v2414 = vadd.f32 %v2346, %v2382
        %v2415 = vlaneseq
        %v2416 = vshrl.u32 %v2415, 7
        %v2417 = vsub.s32 2, %v2416
        %v2418 = vrot.slane %v2101, %v2417
        %v2419 = vmul.f32 %v2295, %v2418
        %v2420 = vmul.f32 %v2279, %v2418
        %v2421 = vmul.f32 %v2296, %v2418
        %v2422 = vmul.f32 %v2280, %v2418
        %v2423 = vmul.f32 %v2297, %v2418
        %v2424 = vmul.f32 %v2281, %v2418
        %v2425 = vmul.f32 %v2298, %v2418
        %v2426 = vmul.f32 %v2282, %v2418
        %v2427 = vmul.f32 %v2299, %v2418
        %v2428 = vmul.f32 %v2283, %v2418
        %v2429 = vmul.f32 %v2300, %v2418
        %v2430 = vmul.f32 %v2284, %v2418
        %v2431 = vmul.f32 %v2301, %v2418
        %v2432 = vmul.f32 %v2285, %v2418
        %v2433 = vmul.f32 %v2302, %v2418
        %v2434 = vmul.f32 %v2286, %v2418
        %v2435 = vmul.f32 %v2303, %v2418
        %v2436 = vmul.f32 %v2287, %v2418
        %v2437 = vmul.f32 %v2304, %v2418
        %v2438 = vmul.f32 %v2288, %v2418
        %v2439 = vmul.f32 %v2305, %v2418
        %v2440 = vmul.f32 %v2289, %v2418
        %v2441 = vmul.f32 %v2306, %v2418
        %v2442 = vmul.f32 %v2290, %v2418
        %v2443 = vmul.f32 %v2307, %v2418
        %v2444 = vmul.f32 %v2291, %v2418
        %v2445 = vmul.f32 %v2308, %v2418
        %v2446 = vmul.f32 %v2292, %v2418
        %v2447 = vmul.f32 %v2309, %v2418
        %v2448 = vmul.f32 %v2293, %v2418
        %v2449 = vmul.f32 %v2310, %v2418
        %v2450 = vmul.f32 %v2294, %v2418
        %v2451 = vadd.f32 %v2383, %v2419
        %v2452 = vadd.f32 %v2384, %v2420
        %v2453 = vadd.f32 %v2385, %v2421
        %v2454 = vadd.f32 %v2386, %v2422
        %v2455 = vadd.f32 %v2387, %v2423
        %v2456 = vadd.f32 %v2388, %v2424
        %v2457 = vadd.f32 %v2389, %v2425
        %v2458 = vadd.f32 %v2390, %v2426
        %v2459 = vadd.f32 %v2391, %v2427
        %v2460 = vadd.f32 %v2392, %v2428
        %v2461 = vadd.f32 %v2393, %v2429
        %v2462 = vadd.f32 %v2394, %v2430
        %v2463 = vadd.f32 %v2395, %v2431
        %v2464 = vadd.f32 %v2396, %v2432
        %v2465 = vadd.f32 %v2397, %v2433
        %v2466 = vadd.f32 %v2398, %v2434
        %v2467 = vadd.f32 %v2399, %v2435
        %v2468 = vadd.f32 %v2400, %v2436
        %v2469 = vadd.f32 %v2401, %v2437
        %v2470 = vadd.f32 %v2402, %v2438
        %v2471 = vadd.f32 %v2403, %v2439
        %v2472 = vadd.f32 %v2404, %v2440
        %v2473 = vadd.f32 %v2405, %v2441
        %v2474 = vadd.f32 %v2406, %v2442
        %v2475 = vadd.f32 %v2407, %v2443
        %v2476 = vadd.f32 %v2408, %v2444
        %v2477 = vadd.f32 %v2409, %v2445
        %v2478 = vadd.f32 %v2410, %v2446
        %v2479 = vadd.f32 %v2411, %v2447
        %v2480 = vadd.f32 %v2412, %v2448
        %v2481 = vadd.f32 %v2413, %v2449
        %v2482 = vadd.f32 %v2414, %v2450
        %v2483 = vld [vmem:[%s2068] sm:$0xff]
        %v2484 = vld [vmem:[%s2068 + $0x8] sm:$0xff]
        %v2485 = vld [vmem:[%s2068 + $0x10] sm:$0xff]
        %v2486 = vld [vmem:[%s2068 + $0x18] sm:$0xff]
        %v2487 = vld [vmem:[%s2068 + $0x20] sm:$0xff]
        %v2488 = vld [vmem:[%s2068 + $0x28] sm:$0xff]
        %v2489 = vld [vmem:[%s2068 + $0x30] sm:$0xff]
        %v2490 = vld [vmem:[%s2068 + $0x38] sm:$0xff]
        %v2491 = vld [vmem:[%s2068 + $0x40] sm:$0xff]
        %v2492 = vld [vmem:[%s2068 + $0x48] sm:$0xff]
        %v2493 = vld [vmem:[%s2068 + $0x50] sm:$0xff]
        %v2494 = vld [vmem:[%s2068 + $0x58] sm:$0xff]
        %v2495 = vld [vmem:[%s2068 + $0x60] sm:$0xff]
        %v2496 = vld [vmem:[%s2068 + $0x68] sm:$0xff]
        %v2497 = vld [vmem:[%s2068 + $0x70] sm:$0xff]
        %v2498 = vld [vmem:[%s2068 + $0x78] sm:$0xff]
        %v2499 = vld [vmem:[%s2068 + $0x80] sm:$0xff]
        %v2500 = vld [vmem:[%s2068 + $0x88] sm:$0xff]
        %v2501 = vld [vmem:[%s2068 + $0x90] sm:$0xff]
        %v2502 = vld [vmem:[%s2068 + $0x98] sm:$0xff]
        %v2503 = vld [vmem:[%s2068 + $0xa0] sm:$0xff]
        %v2504 = vld [vmem:[%s2068 + $0xa8] sm:$0xff]
        %v2505 = vld [vmem:[%s2068 + $0xb0] sm:$0xff]
        %v2506 = vld [vmem:[%s2068 + $0xb8] sm:$0xff]
        %v2507 = vld [vmem:[%s2068 + $0xc0] sm:$0xff]
        %v2508 = vld [vmem:[%s2068 + $0xc8] sm:$0xff]
        %v2509 = vld [vmem:[%s2068 + $0xd0] sm:$0xff]
        %v2510 = vld [vmem:[%s2068 + $0xd8] sm:$0xff]
        %v2511 = vld [vmem:[%s2068 + $0xe0] sm:$0xff]
        %v2512 = vld [vmem:[%s2068 + $0xe8] sm:$0xff]
        %v2513 = vld [vmem:[%s2068 + $0xf0] sm:$0xff]
        %v2514 = vld [vmem:[%s2068 + $0xf8] sm:$0xff]
        %v2515 = vld [vmem:[%s2068 + $0x100] sm:$0xff]
        %v2516 = vld [vmem:[%s2068 + $0x108] sm:$0xff]
        %v2517 = vld [vmem:[%s2068 + $0x110] sm:$0xff]
        %v2518 = vld [vmem:[%s2068 + $0x118] sm:$0xff]
        %v2519 = vld [vmem:[%s2068 + $0x120] sm:$0xff]
        %v2520 = vld [vmem:[%s2068 + $0x128] sm:$0xff]
        %v2521 = vld [vmem:[%s2068 + $0x130] sm:$0xff]
        %v2522 = vld [vmem:[%s2068 + $0x138] sm:$0xff]
        %v2523 = vld [vmem:[%s2068 + $0x140] sm:$0xff]
        %v2524 = vld [vmem:[%s2068 + $0x148] sm:$0xff]
        %v2525 = vld [vmem:[%s2068 + $0x150] sm:$0xff]
        %v2526 = vld [vmem:[%s2068 + $0x158] sm:$0xff]
        %v2527 = vld [vmem:[%s2068 + $0x160] sm:$0xff]
        %v2528 = vld [vmem:[%s2068 + $0x168] sm:$0xff]
        %v2529 = vld [vmem:[%s2068 + $0x170] sm:$0xff]
        %v2530 = vld [vmem:[%s2068 + $0x178] sm:$0xff]
        %v2531 = vrot.slane %v2483, 7
        %v2532 = vrot.slane %v2486, 7
        %v2533 = vrot.slane %v2489, 7
        %v2534 = vrot.slane %v2492, 7
        %v2535 = vrot.slane %v2495, 7
        %v2536 = vrot.slane %v2498, 7
        %v2537 = vrot.slane %v2501, 7
        %v2538 = vrot.slane %v2504, 7
        %v2539 = vrot.slane %v2507, 7
        %v2540 = vrot.slane %v2510, 7
        %v2541 = vrot.slane %v2513, 7
        %v2542 = vrot.slane %v2516, 7
        %v2543 = vrot.slane %v2519, 7
        %v2544 = vrot.slane %v2522, 7
        %v2545 = vrot.slane %v2525, 7
        %v2546 = vrot.slane %v2528, 7
        %v2547 = vrot.slane %v2484, 7
        %v2548 = vrot.slane %v2487, 7
        %v2549 = vrot.slane %v2490, 7
        %v2550 = vrot.slane %v2493, 7
        %v2551 = vrot.slane %v2496, 7
        %v2552 = vrot.slane %v2499, 7
        %v2553 = vrot.slane %v2502, 7
        %v2554 = vrot.slane %v2505, 7
        %v2555 = vrot.slane %v2508, 7
        %v2556 = vrot.slane %v2511, 7
        %v2557 = vrot.slane %v2514, 7
        %v2558 = vrot.slane %v2517, 7
        %v2559 = vrot.slane %v2520, 7
        %v2560 = vrot.slane %v2523, 7
        %v2561 = vrot.slane %v2526, 7
        %v2562 = vrot.slane %v2529, 7
        %v2563 = vrot.slane %v2485, 7
        %v2564 = vrot.slane %v2488, 7
        %v2565 = vrot.slane %v2491, 7
        %v2566 = vrot.slane %v2494, 7
        %v2567 = vrot.slane %v2497, 7
        %v2568 = vrot.slane %v2500, 7
        %v2569 = vrot.slane %v2503, 7
        %v2570 = vrot.slane %v2506, 7
        %v2571 = vrot.slane %v2509, 7
        %v2572 = vrot.slane %v2512, 7
        %v2573 = vrot.slane %v2515, 7
        %v2574 = vrot.slane %v2518, 7
        %v2575 = vrot.slane %v2521, 7
        %v2576 = vrot.slane %v2524, 7
        %v2577 = vrot.slane %v2527, 7
        %v2578 = vrot.slane %v2530, 7
        %v2579 = vsel %vm641, %v2531, %v2547
        %v2580 = vsel %vm641, %v2532, %v2548
        %v2581 = vsel %vm641, %v2533, %v2549
        %v2582 = vsel %vm641, %v2534, %v2550
        %v2583 = vsel %vm641, %v2535, %v2551
        %v2584 = vsel %vm641, %v2536, %v2552
        %v2585 = vsel %vm641, %v2537, %v2553
        %v2586 = vsel %vm641, %v2538, %v2554
        %v2587 = vsel %vm641, %v2539, %v2555
        %v2588 = vsel %vm641, %v2540, %v2556
        %v2589 = vsel %vm641, %v2541, %v2557
        %v2590 = vsel %vm641, %v2542, %v2558
        %v2591 = vsel %vm641, %v2543, %v2559
        %v2592 = vsel %vm641, %v2544, %v2560
        %v2593 = vsel %vm641, %v2545, %v2561
        %v2594 = vsel %vm641, %v2546, %v2562
        %v2595 = vsel %vm641, %v2563, %v2531
        %v2596 = vsel %vm641, %v2564, %v2532
        %v2597 = vsel %vm641, %v2565, %v2533
        %v2598 = vsel %vm641, %v2566, %v2534
        %v2599 = vsel %vm641, %v2567, %v2535
        %v2600 = vsel %vm641, %v2568, %v2536
        %v2601 = vsel %vm641, %v2569, %v2537
        %v2602 = vsel %vm641, %v2570, %v2538
        %v2603 = vsel %vm641, %v2571, %v2539
        %v2604 = vsel %vm641, %v2572, %v2540
        %v2605 = vsel %vm641, %v2573, %v2541
        %v2606 = vsel %vm641, %v2574, %v2542
        %v2607 = vsel %vm641, %v2575, %v2543
        %v2608 = vsel %vm641, %v2576, %v2544
        %v2609 = vsel %vm641, %v2577, %v2545
        %v2610 = vsel %vm641, %v2578, %v2546
        %v2611 = vrot.slane %v2483, 1
        %v2612 = vrot.slane %v2486, 1
        %v2613 = vrot.slane %v2489, 1
        %v2614 = vrot.slane %v2492, 1
        %v2615 = vrot.slane %v2495, 1
        %v2616 = vrot.slane %v2498, 1
        %v2617 = vrot.slane %v2501, 1
        %v2618 = vrot.slane %v2504, 1
        %v2619 = vrot.slane %v2507, 1
        %v2620 = vrot.slane %v2510, 1
        %v2621 = vrot.slane %v2513, 1
        %v2622 = vrot.slane %v2516, 1
        %v2623 = vrot.slane %v2519, 1
        %v2624 = vrot.slane %v2522, 1
        %v2625 = vrot.slane %v2525, 1
        %v2626 = vrot.slane %v2528, 1
        %v2627 = vrot.slane %v2484, 1
        %v2628 = vrot.slane %v2487, 1
        %v2629 = vrot.slane %v2490, 1
        %v2630 = vrot.slane %v2493, 1
        %v2631 = vrot.slane %v2496, 1
        %v2632 = vrot.slane %v2499, 1
        %v2633 = vrot.slane %v2502, 1
        %v2634 = vrot.slane %v2505, 1
        %v2635 = vrot.slane %v2508, 1
        %v2636 = vrot.slane %v2511, 1
        %v2637 = vrot.slane %v2514, 1
        %v2638 = vrot.slane %v2517, 1
        %v2639 = vrot.slane %v2520, 1
        %v2640 = vrot.slane %v2523, 1
        %v2641 = vrot.slane %v2526, 1
        %v2642 = vrot.slane %v2529, 1
        %v2643 = vrot.slane %v2485, 1
        %v2644 = vrot.slane %v2488, 1
        %v2645 = vrot.slane %v2491, 1
        %v2646 = vrot.slane %v2494, 1
        %v2647 = vrot.slane %v2497, 1
        %v2648 = vrot.slane %v2500, 1
        %v2649 = vrot.slane %v2503, 1
        %v2650 = vrot.slane %v2506, 1
        %v2651 = vrot.slane %v2509, 1
        %v2652 = vrot.slane %v2512, 1
        %v2653 = vrot.slane %v2515, 1
        %v2654 = vrot.slane %v2518, 1
        %v2655 = vrot.slane %v2521, 1
        %v2656 = vrot.slane %v2524, 1
        %v2657 = vrot.slane %v2527, 1
        %v2658 = vrot.slane %v2530, 1
        %v2659 = vsel %vm722, %v2627, %v2643
        %v2660 = vsel %vm722, %v2628, %v2644
        %v2661 = vsel %vm722, %v2629, %v2645
        %v2662 = vsel %vm722, %v2630, %v2646
        %v2663 = vsel %vm722, %v2631, %v2647
        %v2664 = vsel %vm722, %v2632, %v2648
        %v2665 = vsel %vm722, %v2633, %v2649
        %v2666 = vsel %vm722, %v2634, %v2650
        %v2667 = vsel %vm722, %v2635, %v2651
        %v2668 = vsel %vm722, %v2636, %v2652
        %v2669 = vsel %vm722, %v2637, %v2653
        %v2670 = vsel %vm722, %v2638, %v2654
        %v2671 = vsel %vm722, %v2639, %v2655
        %v2672 = vsel %vm722, %v2640, %v2656
        %v2673 = vsel %vm722, %v2641, %v2657
        %v2674 = vsel %vm722, %v2642, %v2658
        %v2675 = vsel %vm722, %v2611, %v2627
        %v2676 = vsel %vm722, %v2612, %v2628
        %v2677 = vsel %vm722, %v2613, %v2629
        %v2678 = vsel %vm722, %v2614, %v2630
        %v2679 = vsel %vm722, %v2615, %v2631
        %v2680 = vsel %vm722, %v2616, %v2632
        %v2681 = vsel %vm722, %v2617, %v2633
        %v2682 = vsel %vm722, %v2618, %v2634
        %v2683 = vsel %vm722, %v2619, %v2635
        %v2684 = vsel %vm722, %v2620, %v2636
        %v2685 = vsel %vm722, %v2621, %v2637
        %v2686 = vsel %vm722, %v2622, %v2638
        %v2687 = vsel %vm722, %v2623, %v2639
        %v2688 = vsel %vm722, %v2624, %v2640
        %v2689 = vsel %vm722, %v2625, %v2641
        %v2690 = vsel %vm722, %v2626, %v2642
        %v2691 = vlaneseq
        %v2692 = vshrl.u32 %v2691, 7
        %v2693 = vsub.s32 3, %v2692
        %v2694 = vrot.slane %v2101, %v2693
        %v2695 = vmul.f32 %v2595, %v2694
        %v2696 = vmul.f32 %v2579, %v2694
        %v2697 = vmul.f32 %v2596, %v2694
        %v2698 = vmul.f32 %v2580, %v2694
        %v2699 = vmul.f32 %v2597, %v2694
        %v2700 = vmul.f32 %v2581, %v2694
        %v2701 = vmul.f32 %v2598, %v2694
        %v2702 = vmul.f32 %v2582, %v2694
        %v2703 = vmul.f32 %v2599, %v2694
        %v2704 = vmul.f32 %v2583, %v2694
        %v2705 = vmul.f32 %v2600, %v2694
        %v2706 = vmul.f32 %v2584, %v2694
        %v2707 = vmul.f32 %v2601, %v2694
        %v2708 = vmul.f32 %v2585, %v2694
        %v2709 = vmul.f32 %v2602, %v2694
        %v2710 = vmul.f32 %v2586, %v2694
        %v2711 = vmul.f32 %v2603, %v2694
        %v2712 = vmul.f32 %v2587, %v2694
        %v2713 = vmul.f32 %v2604, %v2694
        %v2714 = vmul.f32 %v2588, %v2694
        %v2715 = vmul.f32 %v2605, %v2694
        %v2716 = vmul.f32 %v2589, %v2694
        %v2717 = vmul.f32 %v2606, %v2694
        %v2718 = vmul.f32 %v2590, %v2694
        %v2719 = vmul.f32 %v2607, %v2694
        %v2720 = vmul.f32 %v2591, %v2694
        %v2721 = vmul.f32 %v2608, %v2694
        %v2722 = vmul.f32 %v2592, %v2694
        %v2723 = vmul.f32 %v2609, %v2694
        %v2724 = vmul.f32 %v2593, %v2694
        %v2725 = vmul.f32 %v2610, %v2694
        %v2726 = vmul.f32 %v2594, %v2694
        %v2727 = vadd.f32 %v2451, %v2695
        %v2728 = vadd.f32 %v2452, %v2696
        %v2729 = vadd.f32 %v2453, %v2697
        %v2730 = vadd.f32 %v2454, %v2698
        %v2731 = vadd.f32 %v2455, %v2699
        %v2732 = vadd.f32 %v2456, %v2700
        %v2733 = vadd.f32 %v2457, %v2701
        %v2734 = vadd.f32 %v2458, %v2702
        %v2735 = vadd.f32 %v2459, %v2703
        %v2736 = vadd.f32 %v2460, %v2704
        %v2737 = vadd.f32 %v2461, %v2705
        %v2738 = vadd.f32 %v2462, %v2706
        %v2739 = vadd.f32 %v2463, %v2707
        %v2740 = vadd.f32 %v2464, %v2708
        %v2741 = vadd.f32 %v2465, %v2709
        %v2742 = vadd.f32 %v2466, %v2710
        %v2743 = vadd.f32 %v2467, %v2711
        %v2744 = vadd.f32 %v2468, %v2712
        %v2745 = vadd.f32 %v2469, %v2713
        %v2746 = vadd.f32 %v2470, %v2714
        %v2747 = vadd.f32 %v2471, %v2715
        %v2748 = vadd.f32 %v2472, %v2716
        %v2749 = vadd.f32 %v2473, %v2717
        %v2750 = vadd.f32 %v2474, %v2718
        %v2751 = vadd.f32 %v2475, %v2719
        %v2752 = vadd.f32 %v2476, %v2720
        %v2753 = vadd.f32 %v2477, %v2721
        %v2754 = vadd.f32 %v2478, %v2722
        %v2755 = vadd.f32 %v2479, %v2723
        %v2756 = vadd.f32 %v2480, %v2724
        %v2757 = vadd.f32 %v2481, %v2725
        %v2758 = vadd.f32 %v2482, %v2726
        %v2759 = vlaneseq
        %v2760 = vshrl.u32 %v2759, 7
        %v2761 = vsub.s32 4, %v2760
        %v2762 = vrot.slane %v2101, %v2761
        %v2763 = vmul.f32 %v2483, %v2762
        %v2764 = vmul.f32 %v2484, %v2762
        %v2765 = vmul.f32 %v2486, %v2762
        %v2766 = vmul.f32 %v2487, %v2762
        %v2767 = vmul.f32 %v2489, %v2762
        %v2768 = vmul.f32 %v2490, %v2762
        %v2769 = vmul.f32 %v2492, %v2762
        %v2770 = vmul.f32 %v2493, %v2762
        %v2771 = vmul.f32 %v2495, %v2762
        %v2772 = vmul.f32 %v2496, %v2762
        %v2773 = vmul.f32 %v2498, %v2762
        %v2774 = vmul.f32 %v2499, %v2762
        %v2775 = vmul.f32 %v2501, %v2762
        %v2776 = vmul.f32 %v2502, %v2762
        %v2777 = vmul.f32 %v2504, %v2762
        %v2778 = vmul.f32 %v2505, %v2762
        %v2779 = vmul.f32 %v2507, %v2762
        %v2780 = vmul.f32 %v2508, %v2762
        %v2781 = vmul.f32 %v2510, %v2762
        %v2782 = vmul.f32 %v2511, %v2762
        %v2783 = vmul.f32 %v2513, %v2762
        %v2784 = vmul.f32 %v2514, %v2762
        %v2785 = vmul.f32 %v2516, %v2762
        %v2786 = vmul.f32 %v2517, %v2762
        %v2787 = vmul.f32 %v2519, %v2762
        %v2788 = vmul.f32 %v2520, %v2762
        %v2789 = vmul.f32 %v2522, %v2762
        %v2790 = vmul.f32 %v2523, %v2762
        %v2791 = vmul.f32 %v2525, %v2762
        %v2792 = vmul.f32 %v2526, %v2762
        %v2793 = vmul.f32 %v2528, %v2762
        %v2794 = vmul.f32 %v2529, %v2762
        %v2795 = vadd.f32 %v2727, %v2763
        %v2796 = vadd.f32 %v2728, %v2764
        %v2797 = vadd.f32 %v2729, %v2765
        %v2798 = vadd.f32 %v2730, %v2766
        %v2799 = vadd.f32 %v2731, %v2767
        %v2800 = vadd.f32 %v2732, %v2768
        %v2801 = vadd.f32 %v2733, %v2769
        %v2802 = vadd.f32 %v2734, %v2770
        %v2803 = vadd.f32 %v2735, %v2771
        %v2804 = vadd.f32 %v2736, %v2772
        %v2805 = vadd.f32 %v2737, %v2773
        %v2806 = vadd.f32 %v2738, %v2774
        %v2807 = vadd.f32 %v2739, %v2775
        %v2808 = vadd.f32 %v2740, %v2776
        %v2809 = vadd.f32 %v2741, %v2777
        %v2810 = vadd.f32 %v2742, %v2778
        %v2811 = vadd.f32 %v2743, %v2779
        %v2812 = vadd.f32 %v2744, %v2780
        %v2813 = vadd.f32 %v2745, %v2781
        %v2814 = vadd.f32 %v2746, %v2782
        %v2815 = vadd.f32 %v2747, %v2783
        %v2816 = vadd.f32 %v2748, %v2784
        %v2817 = vadd.f32 %v2749, %v2785
        %v2818 = vadd.f32 %v2750, %v2786
        %v2819 = vadd.f32 %v2751, %v2787
        %v2820 = vadd.f32 %v2752, %v2788
        %v2821 = vadd.f32 %v2753, %v2789
        %v2822 = vadd.f32 %v2754, %v2790
        %v2823 = vadd.f32 %v2755, %v2791
        %v2824 = vadd.f32 %v2756, %v2792
        %v2825 = vadd.f32 %v2757, %v2793
        %v2826 = vadd.f32 %v2758, %v2794
        %v2827 = vlaneseq
        %v2828 = vshrl.u32 %v2827, 7
        %v2829 = vsub.s32 5, %v2828
        %v2830 = vrot.slane %v2101, %v2829
        %v2831 = vmul.f32 %v2675, %v2830
        %v2832 = vmul.f32 %v2659, %v2830
        %v2833 = vmul.f32 %v2676, %v2830
        %v2834 = vmul.f32 %v2660, %v2830
        %v2835 = vmul.f32 %v2677, %v2830
        %v2836 = vmul.f32 %v2661, %v2830
        %v2837 = vmul.f32 %v2678, %v2830
        %v2838 = vmul.f32 %v2662, %v2830
        %v2839 = vmul.f32 %v2679, %v2830
        %v2840 = vmul.f32 %v2663, %v2830
        %v2841 = vmul.f32 %v2680, %v2830
        %v2842 = vmul.f32 %v2664, %v2830
        %v2843 = vmul.f32 %v2681, %v2830
        %v2844 = vmul.f32 %v2665, %v2830
        %v2845 = vmul.f32 %v2682, %v2830
        %v2846 = vmul.f32 %v2666, %v2830
        %v2847 = vmul.f32 %v2683, %v2830
        %v2848 = vmul.f32 %v2667, %v2830
        %v2849 = vmul.f32 %v2684, %v2830
        %v2850 = vmul.f32 %v2668, %v2830
        %v2851 = vmul.f32 %v2685, %v2830
        %v2852 = vmul.f32 %v2669, %v2830
        %v2853 = vmul.f32 %v2686, %v2830
        %v2854 = vmul.f32 %v2670, %v2830
        %v2855 = vmul.f32 %v2687, %v2830
        %v2856 = vmul.f32 %v2671, %v2830
        %v2857 = vmul.f32 %v2688, %v2830
        %v2858 = vmul.f32 %v2672, %v2830
        %v2859 = vmul.f32 %v2689, %v2830
        %v2860 = vmul.f32 %v2673, %v2830
        %v2861 = vmul.f32 %v2690, %v2830
        %v2862 = vmul.f32 %v2674, %v2830
        %v2863 = vadd.f32 %v2795, %v2831
        %v2864 = vadd.f32 %v2796, %v2832
        %v2865 = vadd.f32 %v2797, %v2833
        %v2866 = vadd.f32 %v2798, %v2834
        %v2867 = vadd.f32 %v2799, %v2835
        %v2868 = vadd.f32 %v2800, %v2836
        %v2869 = vadd.f32 %v2801, %v2837
        %v2870 = vadd.f32 %v2802, %v2838
        %v2871 = vadd.f32 %v2803, %v2839
        %v2872 = vadd.f32 %v2804, %v2840
        %v2873 = vadd.f32 %v2805, %v2841
        %v2874 = vadd.f32 %v2806, %v2842
        %v2875 = vadd.f32 %v2807, %v2843
        %v2876 = vadd.f32 %v2808, %v2844
        %v2877 = vadd.f32 %v2809, %v2845
        %v2878 = vadd.f32 %v2810, %v2846
        %v2879 = vadd.f32 %v2811, %v2847
        %v2880 = vadd.f32 %v2812, %v2848
        %v2881 = vadd.f32 %v2813, %v2849
        %v2882 = vadd.f32 %v2814, %v2850
        %v2883 = vadd.f32 %v2815, %v2851
        %v2884 = vadd.f32 %v2816, %v2852
        %v2885 = vadd.f32 %v2817, %v2853
        %v2886 = vadd.f32 %v2818, %v2854
        %v2887 = vadd.f32 %v2819, %v2855
        %v2888 = vadd.f32 %v2820, %v2856
        %v2889 = vadd.f32 %v2821, %v2857
        %v2890 = vadd.f32 %v2822, %v2858
        %v2891 = vadd.f32 %v2823, %v2859
        %v2892 = vadd.f32 %v2824, %v2860
        %v2893 = vadd.f32 %v2825, %v2861
        %v2894 = vadd.f32 %v2826, %v2862
        %s2895 = scalar_lea.vmem [#allocation3], 48
        %v2896 = vld [vmem:[%s2895] sm:$0xff]
        %v2897 = vld [vmem:[%s2895 + $0x8] sm:$0xff]
        %v2898 = vld [vmem:[%s2895 + $0x10] sm:$0xff]
        %v2899 = vld [vmem:[%s2895 + $0x18] sm:$0xff]
        %v2900 = vld [vmem:[%s2895 + $0x20] sm:$0xff]
        %v2901 = vld [vmem:[%s2895 + $0x28] sm:$0xff]
        %v2902 = vld [vmem:[%s2895 + $0x30] sm:$0xff]
        %v2903 = vld [vmem:[%s2895 + $0x38] sm:$0xff]
        %v2904 = vld [vmem:[%s2895 + $0x40] sm:$0xff]
        %v2905 = vld [vmem:[%s2895 + $0x48] sm:$0xff]
        %v2906 = vld [vmem:[%s2895 + $0x50] sm:$0xff]
        %v2907 = vld [vmem:[%s2895 + $0x58] sm:$0xff]
        %v2908 = vld [vmem:[%s2895 + $0x60] sm:$0xff]
        %v2909 = vld [vmem:[%s2895 + $0x68] sm:$0xff]
        %v2910 = vld [vmem:[%s2895 + $0x70] sm:$0xff]
        %v2911 = vld [vmem:[%s2895 + $0x78] sm:$0xff]
        %v2912 = vld [vmem:[%s2895 + $0x80] sm:$0xff]
        %v2913 = vld [vmem:[%s2895 + $0x88] sm:$0xff]
        %v2914 = vld [vmem:[%s2895 + $0x90] sm:$0xff]
        %v2915 = vld [vmem:[%s2895 + $0x98] sm:$0xff]
        %v2916 = vld [vmem:[%s2895 + $0xa0] sm:$0xff]
        %v2917 = vld [vmem:[%s2895 + $0xa8] sm:$0xff]
        %v2918 = vld [vmem:[%s2895 + $0xb0] sm:$0xff]
        %v2919 = vld [vmem:[%s2895 + $0xb8] sm:$0xff]
        %v2920 = vld [vmem:[%s2895 + $0xc0] sm:$0xff]
        %v2921 = vld [vmem:[%s2895 + $0xc8] sm:$0xff]
        %v2922 = vld [vmem:[%s2895 + $0xd0] sm:$0xff]
        %v2923 = vld [vmem:[%s2895 + $0xd8] sm:$0xff]
        %v2924 = vld [vmem:[%s2895 + $0xe0] sm:$0xff]
        %v2925 = vld [vmem:[%s2895 + $0xe8] sm:$0xff]
        %v2926 = vld [vmem:[%s2895 + $0xf0] sm:$0xff]
        %v2927 = vld [vmem:[%s2895 + $0xf8] sm:$0xff]
        %v2928 = vld [vmem:[%s2895 + $0x100] sm:$0xff]
        %v2929 = vld [vmem:[%s2895 + $0x108] sm:$0xff]
        %v2930 = vld [vmem:[%s2895 + $0x110] sm:$0xff]
        %v2931 = vld [vmem:[%s2895 + $0x118] sm:$0xff]
        %v2932 = vld [vmem:[%s2895 + $0x120] sm:$0xff]
        %v2933 = vld [vmem:[%s2895 + $0x128] sm:$0xff]
        %v2934 = vld [vmem:[%s2895 + $0x130] sm:$0xff]
        %v2935 = vld [vmem:[%s2895 + $0x138] sm:$0xff]
        %v2936 = vld [vmem:[%s2895 + $0x140] sm:$0xff]
        %v2937 = vld [vmem:[%s2895 + $0x148] sm:$0xff]
        %v2938 = vld [vmem:[%s2895 + $0x150] sm:$0xff]
        %v2939 = vld [vmem:[%s2895 + $0x158] sm:$0xff]
        %v2940 = vld [vmem:[%s2895 + $0x160] sm:$0xff]
        %v2941 = vld [vmem:[%s2895 + $0x168] sm:$0xff]
        %v2942 = vld [vmem:[%s2895 + $0x170] sm:$0xff]
        %v2943 = vld [vmem:[%s2895 + $0x178] sm:$0xff]
        %v2944 = vrot.slane %v2896, 7
        %v2945 = vrot.slane %v2899, 7
        %v2946 = vrot.slane %v2902, 7
        %v2947 = vrot.slane %v2905, 7
        %v2948 = vrot.slane %v2908, 7
        %v2949 = vrot.slane %v2911, 7
        %v2950 = vrot.slane %v2914, 7
        %v2951 = vrot.slane %v2917, 7
        %v2952 = vrot.slane %v2920, 7
        %v2953 = vrot.slane %v2923, 7
        %v2954 = vrot.slane %v2926, 7
        %v2955 = vrot.slane %v2929, 7
        %v2956 = vrot.slane %v2932, 7
        %v2957 = vrot.slane %v2935, 7
        %v2958 = vrot.slane %v2938, 7
        %v2959 = vrot.slane %v2941, 7
        %v2960 = vrot.slane %v2897, 7
        %v2961 = vrot.slane %v2900, 7
        %v2962 = vrot.slane %v2903, 7
        %v2963 = vrot.slane %v2906, 7
        %v2964 = vrot.slane %v2909, 7
        %v2965 = vrot.slane %v2912, 7
        %v2966 = vrot.slane %v2915, 7
        %v2967 = vrot.slane %v2918, 7
        %v2968 = vrot.slane %v2921, 7
        %v2969 = vrot.slane %v2924, 7
        %v2970 = vrot.slane %v2927, 7
        %v2971 = vrot.slane %v2930, 7
        %v2972 = vrot.slane %v2933, 7
        %v2973 = vrot.slane %v2936, 7
        %v2974 = vrot.slane %v2939, 7
        %v2975 = vrot.slane %v2942, 7
        %v2976 = vrot.slane %v2898, 7
        %v2977 = vrot.slane %v2901, 7
        %v2978 = vrot.slane %v2904, 7
        %v2979 = vrot.slane %v2907, 7
        %v2980 = vrot.slane %v2910, 7
        %v2981 = vrot.slane %v2913, 7
        %v2982 = vrot.slane %v2916, 7
        %v2983 = vrot.slane %v2919, 7
        %v2984 = vrot.slane %v2922, 7
        %v2985 = vrot.slane %v2925, 7
        %v2986 = vrot.slane %v2928, 7
        %v2987 = vrot.slane %v2931, 7
        %v2988 = vrot.slane %v2934, 7
        %v2989 = vrot.slane %v2937, 7
        %v2990 = vrot.slane %v2940, 7
        %v2991 = vrot.slane %v2943, 7
        %v2992 = vsel %vm641, %v2944, %v2960
        %v2993 = vsel %vm641, %v2945, %v2961
        %v2994 = vsel %vm641, %v2946, %v2962
        %v2995 = vsel %vm641, %v2947, %v2963
        %v2996 = vsel %vm641, %v2948, %v2964
        %v2997 = vsel %vm641, %v2949, %v2965
        %v2998 = vsel %vm641, %v2950, %v2966
        %v2999 = vsel %vm641, %v2951, %v2967
        %v3000 = vsel %vm641, %v2952, %v2968
        %v3001 = vsel %vm641, %v2953, %v2969
        %v3002 = vsel %vm641, %v2954, %v2970
        %v3003 = vsel %vm641, %v2955, %v2971
        %v3004 = vsel %vm641, %v2956, %v2972
        %v3005 = vsel %vm641, %v2957, %v2973
        %v3006 = vsel %vm641, %v2958, %v2974
        %v3007 = vsel %vm641, %v2959, %v2975
        %v3008 = vsel %vm641, %v2976, %v2944
        %v3009 = vsel %vm641, %v2977, %v2945
        %v3010 = vsel %vm641, %v2978, %v2946
        %v3011 = vsel %vm641, %v2979, %v2947
        %v3012 = vsel %vm641, %v2980, %v2948
        %v3013 = vsel %vm641, %v2981, %v2949
        %v3014 = vsel %vm641, %v2982, %v2950
        %v3015 = vsel %vm641, %v2983, %v2951
        %v3016 = vsel %vm641, %v2984, %v2952
        %v3017 = vsel %vm641, %v2985, %v2953
        %v3018 = vsel %vm641, %v2986, %v2954
        %v3019 = vsel %vm641, %v2987, %v2955
        %v3020 = vsel %vm641, %v2988, %v2956
        %v3021 = vsel %vm641, %v2989, %v2957
        %v3022 = vsel %vm641, %v2990, %v2958
        %v3023 = vsel %vm641, %v2991, %v2959
        %v3024 = vrot.slane %v2896, 1
        %v3025 = vrot.slane %v2899, 1
        %v3026 = vrot.slane %v2902, 1
        %v3027 = vrot.slane %v2905, 1
        %v3028 = vrot.slane %v2908, 1
        %v3029 = vrot.slane %v2911, 1
        %v3030 = vrot.slane %v2914, 1
        %v3031 = vrot.slane %v2917, 1
        %v3032 = vrot.slane %v2920, 1
        %v3033 = vrot.slane %v2923, 1
        %v3034 = vrot.slane %v2926, 1
        %v3035 = vrot.slane %v2929, 1
        %v3036 = vrot.slane %v2932, 1
        %v3037 = vrot.slane %v2935, 1
        %v3038 = vrot.slane %v2938, 1
        %v3039 = vrot.slane %v2941, 1
        %v3040 = vrot.slane %v2897, 1
        %v3041 = vrot.slane %v2900, 1
        %v3042 = vrot.slane %v2903, 1
        %v3043 = vrot.slane %v2906, 1
        %v3044 = vrot.slane %v2909, 1
        %v3045 = vrot.slane %v2912, 1
        %v3046 = vrot.slane %v2915, 1
        %v3047 = vrot.slane %v2918, 1
        %v3048 = vrot.slane %v2921, 1
        %v3049 = vrot.slane %v2924, 1
        %v3050 = vrot.slane %v2927, 1
        %v3051 = vrot.slane %v2930, 1
        %v3052 = vrot.slane %v2933, 1
        %v3053 = vrot.slane %v2936, 1
        %v3054 = vrot.slane %v2939, 1
        %v3055 = vrot.slane %v2942, 1
        %v3056 = vrot.slane %v2898, 1
        %v3057 = vrot.slane %v2901, 1
        %v3058 = vrot.slane %v2904, 1
        %v3059 = vrot.slane %v2907, 1
        %v3060 = vrot.slane %v2910, 1
        %v3061 = vrot.slane %v2913, 1
        %v3062 = vrot.slane %v2916, 1
        %v3063 = vrot.slane %v2919, 1
        %v3064 = vrot.slane %v2922, 1
        %v3065 = vrot.slane %v2925, 1
        %v3066 = vrot.slane %v2928, 1
        %v3067 = vrot.slane %v2931, 1
        %v3068 = vrot.slane %v2934, 1
        %v3069 = vrot.slane %v2937, 1
        %v3070 = vrot.slane %v2940, 1
        %v3071 = vrot.slane %v2943, 1
        %v3072 = vsel %vm722, %v3040, %v3056
        %v3073 = vsel %vm722, %v3041, %v3057
        %v3074 = vsel %vm722, %v3042, %v3058
        %v3075 = vsel %vm722, %v3043, %v3059
        %v3076 = vsel %vm722, %v3044, %v3060
        %v3077 = vsel %vm722, %v3045, %v3061
        %v3078 = vsel %vm722, %v3046, %v3062
        %v3079 = vsel %vm722, %v3047, %v3063
        %v3080 = vsel %vm722, %v3048, %v3064
        %v3081 = vsel %vm722, %v3049, %v3065
        %v3082 = vsel %vm722, %v3050, %v3066
        %v3083 = vsel %vm722, %v3051, %v3067
        %v3084 = vsel %vm722, %v3052, %v3068
        %v3085 = vsel %vm722, %v3053, %v3069
        %v3086 = vsel %vm722, %v3054, %v3070
        %v3087 = vsel %vm722, %v3055, %v3071
        %v3088 = vsel %vm722, %v3024, %v3040
        %v3089 = vsel %vm722, %v3025, %v3041
        %v3090 = vsel %vm722, %v3026, %v3042
        %v3091 = vsel %vm722, %v3027, %v3043
        %v3092 = vsel %vm722, %v3028, %v3044
        %v3093 = vsel %vm722, %v3029, %v3045
        %v3094 = vsel %vm722, %v3030, %v3046
        %v3095 = vsel %vm722, %v3031, %v3047
        %v3096 = vsel %vm722, %v3032, %v3048
        %v3097 = vsel %vm722, %v3033, %v3049
        %v3098 = vsel %vm722, %v3034, %v3050
        %v3099 = vsel %vm722, %v3035, %v3051
        %v3100 = vsel %vm722, %v3036, %v3052
        %v3101 = vsel %vm722, %v3037, %v3053
        %v3102 = vsel %vm722, %v3038, %v3054
        %v3103 = vsel %vm722, %v3039, %v3055
        %v3104 = vlaneseq
        %v3105 = vshrl.u32 %v3104, 7
        %v3106 = vsub.s32 6, %v3105
        %v3107 = vrot.slane %v2101, %v3106
        %v3108 = vmul.f32 %v3008, %v3107
        %v3109 = vmul.f32 %v2992, %v3107
        %v3110 = vmul.f32 %v3009, %v3107
        %v3111 = vmul.f32 %v2993, %v3107
        %v3112 = vmul.f32 %v3010, %v3107
        %v3113 = vmul.f32 %v2994, %v3107
        %v3114 = vmul.f32 %v3011, %v3107
        %v3115 = vmul.f32 %v2995, %v3107
        %v3116 = vmul.f32 %v3012, %v3107
        %v3117 = vmul.f32 %v2996, %v3107
        %v3118 = vmul.f32 %v3013, %v3107
        %v3119 = vmul.f32 %v2997, %v3107
        %v3120 = vmul.f32 %v3014, %v3107
        %v3121 = vmul.f32 %v2998, %v3107
        %v3122 = vmul.f32 %v3015, %v3107
        %v3123 = vmul.f32 %v2999, %v3107
        %v3124 = vmul.f32 %v3016, %v3107
        %v3125 = vmul.f32 %v3000, %v3107
        %v3126 = vmul.f32 %v3017, %v3107
        %v3127 = vmul.f32 %v3001, %v3107
        %v3128 = vmul.f32 %v3018, %v3107
        %v3129 = vmul.f32 %v3002, %v3107
        %v3130 = vmul.f32 %v3019, %v3107
        %v3131 = vmul.f32 %v3003, %v3107
        %v3132 = vmul.f32 %v3020, %v3107
        %v3133 = vmul.f32 %v3004, %v3107
        %v3134 = vmul.f32 %v3021, %v3107
        %v3135 = vmul.f32 %v3005, %v3107
        %v3136 = vmul.f32 %v3022, %v3107
        %v3137 = vmul.f32 %v3006, %v3107
        %v3138 = vmul.f32 %v3023, %v3107
        %v3139 = vmul.f32 %v3007, %v3107
        %v3140 = vadd.f32 %v2863, %v3108
        %v3141 = vadd.f32 %v2864, %v3109
        %v3142 = vadd.f32 %v2865, %v3110
        %v3143 = vadd.f32 %v2866, %v3111
        %v3144 = vadd.f32 %v2867, %v3112
        %v3145 = vadd.f32 %v2868, %v3113
        %v3146 = vadd.f32 %v2869, %v3114
        %v3147 = vadd.f32 %v2870, %v3115
        %v3148 = vadd.f32 %v2871, %v3116
        %v3149 = vadd.f32 %v2872, %v3117
        %v3150 = vadd.f32 %v2873, %v3118
        %v3151 = vadd.f32 %v2874, %v3119
        %v3152 = vadd.f32 %v2875, %v3120
        %v3153 = vadd.f32 %v2876, %v3121
        %v3154 = vadd.f32 %v2877, %v3122
        %v3155 = vadd.f32 %v2878, %v3123
        %v3156 = vadd.f32 %v2879, %v3124
        %v3157 = vadd.f32 %v2880, %v3125
        %v3158 = vadd.f32 %v2881, %v3126
        %v3159 = vadd.f32 %v2882, %v3127
        %v3160 = vadd.f32 %v2883, %v3128
        %v3161 = vadd.f32 %v2884, %v3129
        %v3162 = vadd.f32 %v2885, %v3130
        %v3163 = vadd.f32 %v2886, %v3131
        %v3164 = vadd.f32 %v2887, %v3132
        %v3165 = vadd.f32 %v2888, %v3133
        %v3166 = vadd.f32 %v2889, %v3134
        %v3167 = vadd.f32 %v2890, %v3135
        %v3168 = vadd.f32 %v2891, %v3136
        %v3169 = vadd.f32 %v2892, %v3137
        %v3170 = vadd.f32 %v2893, %v3138
        %v3171 = vadd.f32 %v2894, %v3139
        %v3172 = vlaneseq
        %v3173 = vshrl.u32 %v3172, 7
        %v3174 = vsub.s32 7, %v3173
        %v3175 = vrot.slane %v2101, %v3174
        %v3176 = vmul.f32 %v2896, %v3175
        %v3177 = vmul.f32 %v2897, %v3175
        %v3178 = vmul.f32 %v2899, %v3175
        %v3179 = vmul.f32 %v2900, %v3175
        %v3180 = vmul.f32 %v2902, %v3175
        %v3181 = vmul.f32 %v2903, %v3175
        %v3182 = vmul.f32 %v2905, %v3175
        %v3183 = vmul.f32 %v2906, %v3175
        %v3184 = vmul.f32 %v2908, %v3175
        %v3185 = vmul.f32 %v2909, %v3175
        %v3186 = vmul.f32 %v2911, %v3175
        %v3187 = vmul.f32 %v2912, %v3175
        %v3188 = vmul.f32 %v2914, %v3175
        %v3189 = vmul.f32 %v2915, %v3175
        %v3190 = vmul.f32 %v2917, %v3175
        %v3191 = vmul.f32 %v2918, %v3175
        %v3192 = vmul.f32 %v2920, %v3175
        %v3193 = vmul.f32 %v2921, %v3175
        %v3194 = vmul.f32 %v2923, %v3175
        %v3195 = vmul.f32 %v2924, %v3175
        %v3196 = vmul.f32 %v2926, %v3175
        %v3197 = vmul.f32 %v2927, %v3175
        %v3198 = vmul.f32 %v2929, %v3175
        %v3199 = vmul.f32 %v2930, %v3175
        %v3200 = vmul.f32 %v2932, %v3175
        %v3201 = vmul.f32 %v2933, %v3175
        %v3202 = vmul.f32 %v2935, %v3175
        %v3203 = vmul.f32 %v2936, %v3175
        %v3204 = vmul.f32 %v2938, %v3175
        %v3205 = vmul.f32 %v2939, %v3175
        %v3206 = vmul.f32 %v2941, %v3175
        %v3207 = vmul.f32 %v2942, %v3175
        %v3208 = vadd.f32 %v3140, %v3176
        %v3209 = vadd.f32 %v3141, %v3177
        %v3210 = vadd.f32 %v3142, %v3178
        %v3211 = vadd.f32 %v3143, %v3179
        %v3212 = vadd.f32 %v3144, %v3180
        %v3213 = vadd.f32 %v3145, %v3181
        %v3214 = vadd.f32 %v3146, %v3182
        %v3215 = vadd.f32 %v3147, %v3183
        %v3216 = vadd.f32 %v3148, %v3184
        %v3217 = vadd.f32 %v3149, %v3185
        %v3218 = vadd.f32 %v3150, %v3186
        %v3219 = vadd.f32 %v3151, %v3187
        %v3220 = vadd.f32 %v3152, %v3188
        %v3221 = vadd.f32 %v3153, %v3189
        %v3222 = vadd.f32 %v3154, %v3190
        %v3223 = vadd.f32 %v3155, %v3191
        %v3224 = vadd.f32 %v3156, %v3192
        %v3225 = vadd.f32 %v3157, %v3193
        %v3226 = vadd.f32 %v3158, %v3194
        %v3227 = vadd.f32 %v3159, %v3195
        %v3228 = vadd.f32 %v3160, %v3196
        %v3229 = vadd.f32 %v3161, %v3197
        %v3230 = vadd.f32 %v3162, %v3198
        %v3231 = vadd.f32 %v3163, %v3199
        %v3232 = vadd.f32 %v3164, %v3200
        %v3233 = vadd.f32 %v3165, %v3201
        %v3234 = vadd.f32 %v3166, %v3202
        %v3235 = vadd.f32 %v3167, %v3203
        %v3236 = vadd.f32 %v3168, %v3204
        %v3237 = vadd.f32 %v3169, %v3205
        %v3238 = vadd.f32 %v3170, %v3206
        %v3239 = vadd.f32 %v3171, %v3207
        %v3240 = vlaneseq
        %v3241 = vshrl.u32 %v3240, 7
        %v3242 = vsub.s32 0, %v3241
        %v3243 = vrot.slane %v2102, %v3242
        %v3244 = vmul.f32 %v3088, %v3243
        %v3245 = vmul.f32 %v3072, %v3243
        %v3246 = vmul.f32 %v3089, %v3243
        %v3247 = vmul.f32 %v3073, %v3243
        %v3248 = vmul.f32 %v3090, %v3243
        %v3249 = vmul.f32 %v3074, %v3243
        %v3250 = vmul.f32 %v3091, %v3243
        %v3251 = vmul.f32 %v3075, %v3243
        %v3252 = vmul.f32 %v3092, %v3243
        %v3253 = vmul.f32 %v3076, %v3243
        %v3254 = vmul.f32 %v3093, %v3243
        %v3255 = vmul.f32 %v3077, %v3243
        %v3256 = vmul.f32 %v3094, %v3243
        %v3257 = vmul.f32 %v3078, %v3243
        %v3258 = vmul.f32 %v3095, %v3243
        %v3259 = vmul.f32 %v3079, %v3243
        %v3260 = vmul.f32 %v3096, %v3243
        %v3261 = vmul.f32 %v3080, %v3243
        %v3262 = vmul.f32 %v3097, %v3243
        %v3263 = vmul.f32 %v3081, %v3243
        %v3264 = vmul.f32 %v3098, %v3243
        %v3265 = vmul.f32 %v3082, %v3243
        %v3266 = vmul.f32 %v3099, %v3243
        %v3267 = vmul.f32 %v3083, %v3243
        %v3268 = vmul.f32 %v3100, %v3243
        %v3269 = vmul.f32 %v3084, %v3243
        %v3270 = vmul.f32 %v3101, %v3243
        %v3271 = vmul.f32 %v3085, %v3243
        %v3272 = vmul.f32 %v3102, %v3243
        %v3273 = vmul.f32 %v3086, %v3243
        %v3274 = vmul.f32 %v3103, %v3243
        %v3275 = vmul.f32 %v3087, %v3243
        %v3276 = vadd.f32 %v3208, %v3244
        %v3277 = vadd.f32 %v3209, %v3245
        %v3278 = vadd.f32 %v3210, %v3246
        %v3279 = vadd.f32 %v3211, %v3247
        %v3280 = vadd.f32 %v3212, %v3248
        %v3281 = vadd.f32 %v3213, %v3249
        %v3282 = vadd.f32 %v3214, %v3250
        %v3283 = vadd.f32 %v3215, %v3251
        %v3284 = vadd.f32 %v3216, %v3252
        %v3285 = vadd.f32 %v3217, %v3253
        %v3286 = vadd.f32 %v3218, %v3254
        %v3287 = vadd.f32 %v3219, %v3255
        %v3288 = vadd.f32 %v3220, %v3256
        %v3289 = vadd.f32 %v3221, %v3257
        %v3290 = vadd.f32 %v3222, %v3258
        %v3291 = vadd.f32 %v3223, %v3259
        %v3292 = vadd.f32 %v3224, %v3260
        %v3293 = vadd.f32 %v3225, %v3261
        %v3294 = vadd.f32 %v3226, %v3262
        %v3295 = vadd.f32 %v3227, %v3263
        %v3296 = vadd.f32 %v3228, %v3264
        %v3297 = vadd.f32 %v3229, %v3265
        %v3298 = vadd.f32 %v3230, %v3266
        %v3299 = vadd.f32 %v3231, %v3267
        %v3300 = vadd.f32 %v3232, %v3268
        %v3301 = vadd.f32 %v3233, %v3269
        %v3302 = vadd.f32 %v3234, %v3270
        %v3303 = vadd.f32 %v3235, %v3271
        %v3304 = vadd.f32 %v3236, %v3272
        %v3305 = vadd.f32 %v3237, %v3273
        %v3306 = vadd.f32 %v3238, %v3274
        %v3307 = vadd.f32 %v3239, %v3275
        %v3308 = vlaneseq
        %v3309 = vshrl.u32 %v3308, 7
        %v3310 = vsub.s32 1, %v3309
        %v3311 = vrot.slane %v2102, %v3310
        %v3312 = vadd.f32 %v3276, %v3311
        %v3313 = vadd.f32 %v3277, %v3311
        %v3314 = vadd.f32 %v3278, %v3311
        %v3315 = vadd.f32 %v3279, %v3311
        %v3316 = vadd.f32 %v3280, %v3311
        %v3317 = vadd.f32 %v3281, %v3311
        %v3318 = vadd.f32 %v3282, %v3311
        %v3319 = vadd.f32 %v3283, %v3311
        %v3320 = vadd.f32 %v3284, %v3311
        %v3321 = vadd.f32 %v3285, %v3311
        %v3322 = vadd.f32 %v3286, %v3311
        %v3323 = vadd.f32 %v3287, %v3311
        %v3324 = vadd.f32 %v3288, %v3311
        %v3325 = vadd.f32 %v3289, %v3311
        %v3326 = vadd.f32 %v3290, %v3311
        %v3327 = vadd.f32 %v3291, %v3311
        %v3328 = vadd.f32 %v3292, %v3311
        %v3329 = vadd.f32 %v3293, %v3311
        %v3330 = vadd.f32 %v3294, %v3311
        %v3331 = vadd.f32 %v3295, %v3311
        %v3332 = vadd.f32 %v3296, %v3311
        %v3333 = vadd.f32 %v3297, %v3311
        %v3334 = vadd.f32 %v3298, %v3311
        %v3335 = vadd.f32 %v3299, %v3311
        %v3336 = vadd.f32 %v3300, %v3311
        %v3337 = vadd.f32 %v3301, %v3311
        %v3338 = vadd.f32 %v3302, %v3311
        %v3339 = vadd.f32 %v3303, %v3311
        %v3340 = vadd.f32 %v3304, %v3311
        %v3341 = vadd.f32 %v3305, %v3311
        %v3342 = vadd.f32 %v3306, %v3311
        %v3343 = vadd.f32 %v3307, %v3311
        %v3344 = vpack.c.bf16 %v3313, %v3312
        %v3345 = vpack.c.bf16 %v3315, %v3314
        %v3346 = vpack.c.bf16 %v3317, %v3316
        %v3347 = vpack.c.bf16 %v3319, %v3318
        %v3348 = vpack.c.bf16 %v3321, %v3320
        %v3349 = vpack.c.bf16 %v3323, %v3322
        %v3350 = vpack.c.bf16 %v3325, %v3324
        %v3351 = vpack.c.bf16 %v3327, %v3326
        %v3352 = vpack.c.bf16 %v3329, %v3328
        %v3353 = vpack.c.bf16 %v3331, %v3330
        %v3354 = vpack.c.bf16 %v3333, %v3332
        %v3355 = vpack.c.bf16 %v3335, %v3334
        %v3356 = vpack.c.bf16 %v3337, %v3336
        %v3357 = vpack.c.bf16 %v3339, %v3338
        %v3358 = vpack.c.bf16 %v3341, %v3340
        %v3359 = vpack.c.bf16 %v3343, %v3342
        %v3360 = vld [vmem:[%s5] sm:$0xf]
        %v3361 = vld [vmem:[%s5 + $0x4] sm:$0xf]
        %v3362 = vld [vmem:[%s5 + $0x8] sm:$0xf]
        %v3363 = vld [vmem:[%s5 + $0xc] sm:$0xf]
        %v3364 = vld [vmem:[%s5 + $0x10] sm:$0xf]
        %v3365 = vld [vmem:[%s5 + $0x14] sm:$0xf]
        %v3366 = vld [vmem:[%s5 + $0x18] sm:$0xf]
        %v3367 = vld [vmem:[%s5 + $0x1c] sm:$0xf]
        %v3368 = vld [vmem:[%s6] sm:$0x1]
        %v3370 = vlaneseq
        %v3371 = vshrl.u32 %v3370, 7
        %v3372 = vsub.s32 0, %v3371
        %v3373 = vrot.slane %v3368, %v3372
        %v3383 = vunpack.c.l.b16 %v3360
        %v3384 = vunpack.c.l.b16 %v3361
        %v3385 = vunpack.c.l.b16 %v3362
        %v3386 = vunpack.c.l.b16 %v3363
        %v3387 = vunpack.c.l.b16 %v3364
        %v3388 = vunpack.c.l.b16 %v3365
        %v3389 = vunpack.c.l.b16 %v3366
        %v3390 = vunpack.c.l.b16 %v3367
        %v3391 = vpack.c.b16 %v3384, %v3383
        %v3392 = vpack.c.b16 %v3386, %v3385
        %v3393 = vpack.c.b16 %v3388, %v3387
        %v3394 = vpack.c.b16 %v3390, %v3389
        %v3400 = vsel %vm429, %v3344, 0
        %v3403 = vsel %vm429, %v3345, 0
        %v3406 = vsel %vm429, %v3346, 0
        %v3409 = vsel %vm429, %v3347, 0
        %v3412 = vsel %vm429, %v3348, 0
        %v3415 = vsel %vm429, %v3349, 0
        %v3418 = vsel %vm429, %v3350, 0
        %v3421 = vsel %vm429, %v3351, 0
        %v3424 = vsel %vm429, %v3352, 0
        %v3427 = vsel %vm429, %v3353, 0
        %v3430 = vsel %vm429, %v3354, 0
        %v3433 = vsel %vm429, %v3355, 0
        %v3436 = vsel %vm429, %v3356, 0
        %v3439 = vsel %vm429, %v3357, 0
        %v3442 = vsel %vm429, %v3358, 0
        %v3445 = vsel %vm429, %v3359, 0
        %3447 = vmatprep.subr.bf16.mxu0 0
        %3448 = vmatpush1.bf16.msra.mxu0 %v3391
        %3449 = vmatprep.subr.bf16.mxu0 0
        %3450 = vmatpush1.bf16.msra.mxu0 %v3392
        %3451 = vmatprep.subr.bf16.mxu0 0
        %3452 = vmatpush1.bf16.msra.mxu0 %v3393
        %3453 = vmatprep.subr.bf16.mxu0 0
        %3454 = vmatpush1.bf16.msra.mxu0 %v3394
        %3455 = vmatprep.subr.bf16.mxu0 0
        %3456 = vmatpush1.bf16.msra.mxu0 0
        %3457 = vmatprep.subr.bf16.mxu0 0
        %3458 = vmatpush1.bf16.msra.mxu0 0
        %3459 = vmatprep.subr.bf16.mxu0 0
        %3460 = vmatpush1.bf16.msra.mxu0 0
        %3461 = vmatprep.subr.bf16.mxu0 0
        %3462 = vmatpush1.bf16.msra.mxu0 0
        %3463 = vmatprep.subr.bf16.mxu0 0
        %3464 = vmatpush1.bf16.msra.mxu0 0
        %3465 = vmatprep.subr.bf16.mxu0 0
        %3466 = vmatpush1.bf16.msra.mxu0 0
        %3467 = vmatprep.subr.bf16.mxu0 0
        %3468 = vmatpush1.bf16.msra.mxu0 0
        %3469 = vmatprep.subr.bf16.mxu0 0
        %3470 = vmatpush1.bf16.msra.mxu0 0
        %3471 = vmatprep.subr.bf16.mxu0 0
        %3472 = vmatpush1.bf16.msra.mxu0 0
        %3473 = vmatprep.subr.bf16.mxu0 0
        %3474 = vmatpush1.bf16.msra.mxu0 0
        %3475 = vmatprep.subr.bf16.mxu0 0
        %3476 = vmatpush1.bf16.msra.mxu0 0
        %3477 = vmatprep.subr.bf16.mxu0 0
        %3478 = vmatpush1.bf16.msra.mxu0 0
        %3479 = vmatprep.mubr.bf16.mxu0 0
        %3480 = vmatmul.mubr.bf16.gmra.mrb[0].mxu0 %v3400
        %v3481 = vpop.f32.mrb[0].mxu0
        %v3482 = vadd.f32 %v3373, %v3481
        %v3483 = vpop.f32.mrb[0].mxu0
        %v3484 = vpop.f32.mrb[0].mxu0
        %v3485 = vadd.f32 %v3373, %v3484
        %v3486 = vpop.f32.mrb[0].mxu0
        %3487 = vmatprep.mubr.bf16.mxu0 0
        %3488 = vmatmul.mubr.bf16.gmra.mrb[0].mxu0 %v3403
        %v3489 = vpop.f32.mrb[0].mxu0
        %v3490 = vadd.f32 %v3373, %v3489
        %v3491 = vpop.f32.mrb[0].mxu0
        %v3492 = vpop.f32.mrb[0].mxu0
        %v3493 = vadd.f32 %v3373, %v3492
        %v3494 = vpop.f32.mrb[0].mxu0
        %3495 = vmatprep.mubr.bf16.mxu0 0
        %3496 = vmatmul.mubr.bf16.gmra.mrb[0].mxu0 %v3406
        %v3497 = vpop.f32.mrb[0].mxu0
        %v3498 = vadd.f32 %v3373, %v3497
        %v3499 = vpop.f32.mrb[0].mxu0
        %v3500 = vpop.f32.mrb[0].mxu0
        %v3501 = vadd.f32 %v3373, %v3500
        %v3502 = vpop.f32.mrb[0].mxu0
        %3503 = vmatprep.mubr.bf16.mxu0 0
        %3504 = vmatmul.mubr.bf16.gmra.mrb[0].mxu0 %v3409
        %v3505 = vpop.f32.mrb[0].mxu0
        %v3506 = vadd.f32 %v3373, %v3505
        %v3507 = vpop.f32.mrb[0].mxu0
        %v3508 = vpop.f32.mrb[0].mxu0
        %v3509 = vadd.f32 %v3373, %v3508
        %v3510 = vpop.f32.mrb[0].mxu0
        %3511 = vmatprep.mubr.bf16.mxu0 0
        %3512 = vmatmul.mubr.bf16.gmra.mrb[0].mxu0 %v3412
        %v3513 = vpop.f32.mrb[0].mxu0
        %v3514 = vadd.f32 %v3373, %v3513
        %v3515 = vpop.f32.mrb[0].mxu0
        %v3516 = vpop.f32.mrb[0].mxu0
        %v3517 = vadd.f32 %v3373, %v3516
        %v3518 = vpop.f32.mrb[0].mxu0
        %3519 = vmatprep.mubr.bf16.mxu0 0
        %3520 = vmatmul.mubr.bf16.gmra.mrb[0].mxu0 %v3415
        %v3521 = vpop.f32.mrb[0].mxu0
        %v3522 = vadd.f32 %v3373, %v3521
        %v3523 = vpop.f32.mrb[0].mxu0
        %v3524 = vpop.f32.mrb[0].mxu0
        %v3525 = vadd.f32 %v3373, %v3524
        %v3526 = vpop.f32.mrb[0].mxu0
        %3527 = vmatprep.mubr.bf16.mxu0 0
        %3528 = vmatmul.mubr.bf16.gmra.mrb[0].mxu0 %v3418
        %v3529 = vpop.f32.mrb[0].mxu0
        %v3530 = vadd.f32 %v3373, %v3529
        %v3531 = vpop.f32.mrb[0].mxu0
        %v3532 = vpop.f32.mrb[0].mxu0
        %v3533 = vadd.f32 %v3373, %v3532
        %v3534 = vpop.f32.mrb[0].mxu0
        %3535 = vmatprep.mubr.bf16.mxu0 0
        %3536 = vmatmul.mubr.bf16.gmra.mrb[0].mxu0 %v3421
        %v3537 = vpop.f32.mrb[0].mxu0
        %v3538 = vadd.f32 %v3373, %v3537
        %v3539 = vpop.f32.mrb[0].mxu0
        %v3540 = vpop.f32.mrb[0].mxu0
        %v3541 = vadd.f32 %v3373, %v3540
        %v3542 = vpop.f32.mrb[0].mxu0
        %3543 = vmatprep.mubr.bf16.mxu0 0
        %3544 = vmatmul.mubr.bf16.gmra.mrb[0].mxu0 %v3424
        %v3545 = vpop.f32.mrb[0].mxu0
        %v3546 = vadd.f32 %v3373, %v3545
        %v3547 = vpop.f32.mrb[0].mxu0
        %v3548 = vpop.f32.mrb[0].mxu0
        %v3549 = vadd.f32 %v3373, %v3548
        %v3550 = vpop.f32.mrb[0].mxu0
        %3551 = vmatprep.mubr.bf16.mxu0 0
        %3552 = vmatmul.mubr.bf16.gmra.mrb[0].mxu0 %v3427
        %v3553 = vpop.f32.mrb[0].mxu0
        %v3554 = vadd.f32 %v3373, %v3553
        %v3555 = vpop.f32.mrb[0].mxu0
        %v3556 = vpop.f32.mrb[0].mxu0
        %v3557 = vadd.f32 %v3373, %v3556
        %v3558 = vpop.f32.mrb[0].mxu0
        %3559 = vmatprep.mubr.bf16.mxu0 0
        %3560 = vmatmul.mubr.bf16.gmra.mrb[0].mxu0 %v3430
        %v3561 = vpop.f32.mrb[0].mxu0
        %v3562 = vadd.f32 %v3373, %v3561
        %v3563 = vpop.f32.mrb[0].mxu0
        %v3564 = vpop.f32.mrb[0].mxu0
        %v3565 = vadd.f32 %v3373, %v3564
        %v3566 = vpop.f32.mrb[0].mxu0
        %3567 = vmatprep.mubr.bf16.mxu0 0
        %3568 = vmatmul.mubr.bf16.gmra.mrb[0].mxu0 %v3433
        %v3569 = vpop.f32.mrb[0].mxu0
        %v3570 = vadd.f32 %v3373, %v3569
        %v3571 = vpop.f32.mrb[0].mxu0
        %v3572 = vpop.f32.mrb[0].mxu0
        %v3573 = vadd.f32 %v3373, %v3572
        %v3574 = vpop.f32.mrb[0].mxu0
        %3575 = vmatprep.mubr.bf16.mxu0 0
        %3576 = vmatmul.mubr.bf16.gmra.mrb[0].mxu0 %v3436
        %v3577 = vpop.f32.mrb[0].mxu0
        %v3578 = vadd.f32 %v3373, %v3577
        %v3579 = vpop.f32.mrb[0].mxu0
        %v3580 = vpop.f32.mrb[0].mxu0
        %v3581 = vadd.f32 %v3373, %v3580
        %v3582 = vpop.f32.mrb[0].mxu0
        %3583 = vmatprep.mubr.bf16.mxu0 0
        %3584 = vmatmul.mubr.bf16.gmra.mrb[0].mxu0 %v3439
        %v3585 = vpop.f32.mrb[0].mxu0
        %v3586 = vadd.f32 %v3373, %v3585
        %v3587 = vpop.f32.mrb[0].mxu0
        %v3588 = vpop.f32.mrb[0].mxu0
        %v3589 = vadd.f32 %v3373, %v3588
        %v3590 = vpop.f32.mrb[0].mxu0
        %3591 = vmatprep.mubr.bf16.mxu0 0
        %3592 = vmatmul.mubr.bf16.gmra.mrb[0].mxu0 %v3442
        %v3593 = vpop.f32.mrb[0].mxu0
        %v3594 = vadd.f32 %v3373, %v3593
        %v3595 = vpop.f32.mrb[0].mxu0
        %v3596 = vpop.f32.mrb[0].mxu0
        %v3597 = vadd.f32 %v3373, %v3596
        %v3598 = vpop.f32.mrb[0].mxu0
        %3599 = vmatprep.mubr.bf16.mxu0 0
        %3600 = vmatmul.mubr.bf16.gmra.mrb[0].mxu0 %v3445
        %v3601 = vpop.f32.mrb[0].mxu0
        %v3602 = vadd.f32 %v3373, %v3601
        %v3603 = vpop.f32.mrb[0].mxu0
        %v3604 = vpop.f32.mrb[0].mxu0
        %v3605 = vadd.f32 %v3373, %v3604
        %v3606 = vpop.f32.mrb[0].mxu0
        %3607 = vdwg.mxu0
        %v3608 = vmax.f32 %v3482, 0.0
        %v3609 = vmax.f32 %v3485, 0.0
        %v3610 = vmax.f32 %v3490, 0.0
        %v3611 = vmax.f32 %v3493, 0.0
        %v3612 = vmax.f32 %v3498, 0.0
        %v3613 = vmax.f32 %v3501, 0.0
        %v3614 = vmax.f32 %v3506, 0.0
        %v3615 = vmax.f32 %v3509, 0.0
        %v3616 = vmax.f32 %v3514, 0.0
        %v3617 = vmax.f32 %v3517, 0.0
        %v3618 = vmax.f32 %v3522, 0.0
        %v3619 = vmax.f32 %v3525, 0.0
        %v3620 = vmax.f32 %v3530, 0.0
        %v3621 = vmax.f32 %v3533, 0.0
        %v3622 = vmax.f32 %v3538, 0.0
        %v3623 = vmax.f32 %v3541, 0.0
        %v3624 = vmax.f32 %v3546, 0.0
        %v3625 = vmax.f32 %v3549, 0.0
        %v3626 = vmax.f32 %v3554, 0.0
        %v3627 = vmax.f32 %v3557, 0.0
        %v3628 = vmax.f32 %v3562, 0.0
        %v3629 = vmax.f32 %v3565, 0.0
        %v3630 = vmax.f32 %v3570, 0.0
        %v3631 = vmax.f32 %v3573, 0.0
        %v3632 = vmax.f32 %v3578, 0.0
        %v3633 = vmax.f32 %v3581, 0.0
        %v3634 = vmax.f32 %v3586, 0.0
        %v3635 = vmax.f32 %v3589, 0.0
        %v3636 = vmax.f32 %v3594, 0.0
        %v3637 = vmax.f32 %v3597, 0.0
        %v3638 = vmax.f32 %v3602, 0.0
        %v3639 = vmax.f32 %v3605, 0.0
        %s3640 = scalar_lea.vmem [#allocation4], 24
        %3641 = vst.msk [vmem:[%s3640] sm:$0xff] %vm429, %v3608
        %3642 = vst.msk [vmem:[%s3640 + $0x8] sm:$0xff] %vm429, %v3609
        %3643 = vst.msk [vmem:[%s3640 + $0x18] sm:$0xff] %vm429, %v3610
        %3644 = vst.msk [vmem:[%s3640 + $0x20] sm:$0xff] %vm429, %v3611
        %3645 = vst.msk [vmem:[%s3640 + $0x30] sm:$0xff] %vm429, %v3612
        %3646 = vst.msk [vmem:[%s3640 + $0x38] sm:$0xff] %vm429, %v3613
        %3647 = vst.msk [vmem:[%s3640 + $0x48] sm:$0xff] %vm429, %v3614
        %3648 = vst.msk [vmem:[%s3640 + $0x50] sm:$0xff] %vm429, %v3615
        %3649 = vst.msk [vmem:[%s3640 + $0x60] sm:$0xff] %vm429, %v3616
        %3650 = vst.msk [vmem:[%s3640 + $0x68] sm:$0xff] %vm429, %v3617
        %3651 = vst.msk [vmem:[%s3640 + $0x78] sm:$0xff] %vm429, %v3618
        %3652 = vst.msk [vmem:[%s3640 + $0x80] sm:$0xff] %vm429, %v3619
        %3653 = vst.msk [vmem:[%s3640 + $0x90] sm:$0xff] %vm429, %v3620
        %3654 = vst.msk [vmem:[%s3640 + $0x98] sm:$0xff] %vm429, %v3621
        %3655 = vst.msk [vmem:[%s3640 + $0xa8] sm:$0xff] %vm429, %v3622
        %3656 = vst.msk [vmem:[%s3640 + $0xb0] sm:$0xff] %vm429, %v3623
        %3657 = vst.msk [vmem:[%s3640 + $0xc0] sm:$0xff] %vm429, %v3624
        %3658 = vst.msk [vmem:[%s3640 + $0xc8] sm:$0xff] %vm429, %v3625
        %3659 = vst.msk [vmem:[%s3640 + $0xd8] sm:$0xff] %vm429, %v3626
        %3660 = vst.msk [vmem:[%s3640 + $0xe0] sm:$0xff] %vm429, %v3627
        %3661 = vst.msk [vmem:[%s3640 + $0xf0] sm:$0xff] %vm429, %v3628
        %3662 = vst.msk [vmem:[%s3640 + $0xf8] sm:$0xff] %vm429, %v3629
        %3663 = vst.msk [vmem:[%s3640 + $0x108] sm:$0xff] %vm429, %v3630
        %3664 = vst.msk [vmem:[%s3640 + $0x110] sm:$0xff] %vm429, %v3631
        %3665 = vst.msk [vmem:[%s3640 + $0x120] sm:$0xff] %vm429, %v3632
        %3666 = vst.msk [vmem:[%s3640 + $0x128] sm:$0xff] %vm429, %v3633
        %3667 = vst.msk [vmem:[%s3640 + $0x138] sm:$0xff] %vm429, %v3634
        %3668 = vst.msk [vmem:[%s3640 + $0x140] sm:$0xff] %vm429, %v3635
        %3669 = vst.msk [vmem:[%s3640 + $0x150] sm:$0xff] %vm429, %v3636
        %3670 = vst.msk [vmem:[%s3640 + $0x158] sm:$0xff] %vm429, %v3637
        %3671 = vst.msk [vmem:[%s3640 + $0x168] sm:$0xff] %vm429, %v3638
        %3672 = vst.msk [vmem:[%s3640 + $0x170] sm:$0xff] %vm429, %v3639
        %v3673 = vld [vmem:[%s7] sm:$0xff]
        %v3674 = vld [vmem:[%s7 + $0x8] sm:$0x3]
        %v3675 = vld [vmem:[#allocation4] sm:$0xff]
        %v3676 = vld [vmem:[#allocation4 + $0x8] sm:$0xff]
        %v3677 = vld [vmem:[#allocation4 + $0x10] sm:$0xff]
        %v3678 = vld [vmem:[#allocation4 + $0x30] sm:$0xff]
        %v3679 = vld [vmem:[#allocation4 + $0x38] sm:$0xff]
        %v3680 = vld [vmem:[#allocation4 + $0x40] sm:$0xff]
        %v3681 = vld [vmem:[#allocation4 + $0x60] sm:$0xff]
        %v3682 = vld [vmem:[#allocation4 + $0x68] sm:$0xff]
        %v3683 = vld [vmem:[#allocation4 + $0x70] sm:$0xff]
        %v3684 = vld [vmem:[#allocation4 + $0x90] sm:$0xff]
        %v3685 = vld [vmem:[#allocation4 + $0x98] sm:$0xff]
        %v3686 = vld [vmem:[#allocation4 + $0xa0] sm:$0xff]
        %v3687 = vld [vmem:[#allocation4 + $0xc0] sm:$0xff]
        %v3688 = vld [vmem:[#allocation4 + $0xc8] sm:$0xff]
        %v3689 = vld [vmem:[#allocation4 + $0xd0] sm:$0xff]
        %v3690 = vld [vmem:[#allocation4 + $0xf0] sm:$0xff]
        %v3691 = vld [vmem:[#allocation4 + $0xf8] sm:$0xff]
        %v3692 = vld [vmem:[#allocation4 + $0x100] sm:$0xff]
        %v3693 = vld [vmem:[#allocation4 + $0x120] sm:$0xff]
        %v3694 = vld [vmem:[#allocation4 + $0x128] sm:$0xff]
        %v3695 = vld [vmem:[#allocation4 + $0x130] sm:$0xff]
        %v3696 = vld [vmem:[#allocation4 + $0x150] sm:$0xff]
        %v3697 = vld [vmem:[#allocation4 + $0x158] sm:$0xff]
        %v3698 = vld [vmem:[#allocation4 + $0x160] sm:$0xff]
        %v3699 = vrot.slane %v3675, 7
        %v3700 = vrot.slane %v3678, 7
        %v3701 = vrot.slane %v3681, 7
        %v3702 = vrot.slane %v3684, 7
        %v3703 = vrot.slane %v3687, 7
        %v3704 = vrot.slane %v3690, 7
        %v3705 = vrot.slane %v3693, 7
        %v3706 = vrot.slane %v3696, 7
        %v3707 = vrot.slane %v3676, 7
        %v3708 = vrot.slane %v3679, 7
        %v3709 = vrot.slane %v3682, 7
        %v3710 = vrot.slane %v3685, 7
        %v3711 = vrot.slane %v3688, 7
        %v3712 = vrot.slane %v3691, 7
        %v3713 = vrot.slane %v3694, 7
        %v3714 = vrot.slane %v3697, 7
        %v3715 = vrot.slane %v3677, 7
        %v3716 = vrot.slane %v3680, 7
        %v3717 = vrot.slane %v3683, 7
        %v3718 = vrot.slane %v3686, 7
        %v3719 = vrot.slane %v3689, 7
        %v3720 = vrot.slane %v3692, 7
        %v3721 = vrot.slane %v3695, 7
        %v3722 = vrot.slane %v3698, 7
        %v3723 = vsel %vm641, %v3699, %v3707
        %v3724 = vsel %vm641, %v3700, %v3708
        %v3725 = vsel %vm641, %v3701, %v3709
        %v3726 = vsel %vm641, %v3702, %v3710
        %v3727 = vsel %vm641, %v3703, %v3711
        %v3728 = vsel %vm641, %v3704, %v3712
        %v3729 = vsel %vm641, %v3705, %v3713
        %v3730 = vsel %vm641, %v3706, %v3714
        %v3731 = vsel %vm641, %v3715, %v3699
        %v3732 = vsel %vm641, %v3716, %v3700
        %v3733 = vsel %vm641, %v3717, %v3701
        %v3734 = vsel %vm641, %v3718, %v3702
        %v3735 = vsel %vm641, %v3719, %v3703
        %v3736 = vsel %vm641, %v3720, %v3704
        %v3737 = vsel %vm641, %v3721, %v3705
        %v3738 = vsel %vm641, %v3722, %v3706
        %v3739 = vrot.slane %v3675, 1
        %v3740 = vrot.slane %v3678, 1
        %v3741 = vrot.slane %v3681, 1
        %v3742 = vrot.slane %v3684, 1
        %v3743 = vrot.slane %v3687, 1
        %v3744 = vrot.slane %v3690, 1
        %v3745 = vrot.slane %v3693, 1
        %v3746 = vrot.slane %v3696, 1
        %v3747 = vrot.slane %v3676, 1
        %v3748 = vrot.slane %v3679, 1
        %v3749 = vrot.slane %v3682, 1
        %v3750 = vrot.slane %v3685, 1
        %v3751 = vrot.slane %v3688, 1
        %v3752 = vrot.slane %v3691, 1
        %v3753 = vrot.slane %v3694, 1
        %v3754 = vrot.slane %v3697, 1
        %v3755 = vrot.slane %v3677, 1
        %v3756 = vrot.slane %v3680, 1
        %v3757 = vrot.slane %v3683, 1
        %v3758 = vrot.slane %v3686, 1
        %v3759 = vrot.slane %v3689, 1
        %v3760 = vrot.slane %v3692, 1
        %v3761 = vrot.slane %v3695, 1
        %v3762 = vrot.slane %v3698, 1
        %v3763 = vsel %vm722, %v3747, %v3755
        %v3764 = vsel %vm722, %v3748, %v3756
        %v3765 = vsel %vm722, %v3749, %v3757
        %v3766 = vsel %vm722, %v3750, %v3758
        %v3767 = vsel %vm722, %v3751, %v3759
        %v3768 = vsel %vm722, %v3752, %v3760
        %v3769 = vsel %vm722, %v3753, %v3761
        %v3770 = vsel %vm722, %v3754, %v3762
        %v3771 = vsel %vm722, %v3739, %v3747
        %v3772 = vsel %vm722, %v3740, %v3748
        %v3773 = vsel %vm722, %v3741, %v3749
        %v3774 = vsel %vm722, %v3742, %v3750
        %v3775 = vsel %vm722, %v3743, %v3751
        %v3776 = vsel %vm722, %v3744, %v3752
        %v3777 = vsel %vm722, %v3745, %v3753
        %v3778 = vsel %vm722, %v3746, %v3754
        %v3779 = vlaneseq
        %v3780 = vshrl.u32 %v3779, 7
        %v3781 = vsub.s32 0, %v3780
        %v3782 = vrot.slane %v3673, %v3781
        %v3783 = vmul.f32 %v3731, %v3782
        %v3784 = vmul.f32 %v3723, %v3782
        %v3785 = vmul.f32 %v3732, %v3782
        %v3786 = vmul.f32 %v3724, %v3782
        %v3787 = vmul.f32 %v3733, %v3782
        %v3788 = vmul.f32 %v3725, %v3782
        %v3789 = vmul.f32 %v3734, %v3782
        %v3790 = vmul.f32 %v3726, %v3782
        %v3791 = vmul.f32 %v3735, %v3782
        %v3792 = vmul.f32 %v3727, %v3782
        %v3793 = vmul.f32 %v3736, %v3782
        %v3794 = vmul.f32 %v3728, %v3782
        %v3795 = vmul.f32 %v3737, %v3782
        %v3796 = vmul.f32 %v3729, %v3782
        %v3797 = vmul.f32 %v3738, %v3782
        %v3798 = vmul.f32 %v3730, %v3782
        %v3799 = vlaneseq
        %v3800 = vshrl.u32 %v3799, 7
        %v3801 = vsub.s32 1, %v3800
        %v3802 = vrot.slane %v3673, %v3801
        %v3803 = vmul.f32 %v3675, %v3802
        %v3804 = vmul.f32 %v3676, %v3802
        %v3805 = vmul.f32 %v3678, %v3802
        %v3806 = vmul.f32 %v3679, %v3802
        %v3807 = vmul.f32 %v3681, %v3802
        %v3808 = vmul.f32 %v3682, %v3802
        %v3809 = vmul.f32 %v3684, %v3802
        %v3810 = vmul.f32 %v3685, %v3802
        %v3811 = vmul.f32 %v3687, %v3802
        %v3812 = vmul.f32 %v3688, %v3802
        %v3813 = vmul.f32 %v3690, %v3802
        %v3814 = vmul.f32 %v3691, %v3802
        %v3815 = vmul.f32 %v3693, %v3802
        %v3816 = vmul.f32 %v3694, %v3802
        %v3817 = vmul.f32 %v3696, %v3802
        %v3818 = vmul.f32 %v3697, %v3802
        %v3819 = vadd.f32 %v3783, %v3803
        %v3820 = vadd.f32 %v3784, %v3804
        %v3821 = vadd.f32 %v3785, %v3805
        %v3822 = vadd.f32 %v3786, %v3806
        %v3823 = vadd.f32 %v3787, %v3807
        %v3824 = vadd.f32 %v3788, %v3808
        %v3825 = vadd.f32 %v3789, %v3809
        %v3826 = vadd.f32 %v3790, %v3810
        %v3827 = vadd.f32 %v3791, %v3811
        %v3828 = vadd.f32 %v3792, %v3812
        %v3829 = vadd.f32 %v3793, %v3813
        %v3830 = vadd.f32 %v3794, %v3814
        %v3831 = vadd.f32 %v3795, %v3815
        %v3832 = vadd.f32 %v3796, %v3816
        %v3833 = vadd.f32 %v3797, %v3817
        %v3834 = vadd.f32 %v3798, %v3818
        %v3835 = vlaneseq
        %v3836 = vshrl.u32 %v3835, 7
        %v3837 = vsub.s32 2, %v3836
        %v3838 = vrot.slane %v3673, %v3837
        %v3839 = vmul.f32 %v3771, %v3838
        %v3840 = vmul.f32 %v3763, %v3838
        %v3841 = vmul.f32 %v3772, %v3838
        %v3842 = vmul.f32 %v3764, %v3838
        %v3843 = vmul.f32 %v3773, %v3838
        %v3844 = vmul.f32 %v3765, %v3838
        %v3845 = vmul.f32 %v3774, %v3838
        %v3846 = vmul.f32 %v3766, %v3838
        %v3847 = vmul.f32 %v3775, %v3838
        %v3848 = vmul.f32 %v3767, %v3838
        %v3849 = vmul.f32 %v3776, %v3838
        %v3850 = vmul.f32 %v3768, %v3838
        %v3851 = vmul.f32 %v3777, %v3838
        %v3852 = vmul.f32 %v3769, %v3838
        %v3853 = vmul.f32 %v3778, %v3838
        %v3854 = vmul.f32 %v3770, %v3838
        %v3855 = vadd.f32 %v3819, %v3839
        %v3856 = vadd.f32 %v3820, %v3840
        %v3857 = vadd.f32 %v3821, %v3841
        %v3858 = vadd.f32 %v3822, %v3842
        %v3859 = vadd.f32 %v3823, %v3843
        %v3860 = vadd.f32 %v3824, %v3844
        %v3861 = vadd.f32 %v3825, %v3845
        %v3862 = vadd.f32 %v3826, %v3846
        %v3863 = vadd.f32 %v3827, %v3847
        %v3864 = vadd.f32 %v3828, %v3848
        %v3865 = vadd.f32 %v3829, %v3849
        %v3866 = vadd.f32 %v3830, %v3850
        %v3867 = vadd.f32 %v3831, %v3851
        %v3868 = vadd.f32 %v3832, %v3852
        %v3869 = vadd.f32 %v3833, %v3853
        %v3870 = vadd.f32 %v3834, %v3854
        %v3871 = vld [vmem:[%s3640] sm:$0xff]
        %v3872 = vld [vmem:[%s3640 + $0x8] sm:$0xff]
        %v3873 = vld [vmem:[%s3640 + $0x10] sm:$0xff]
        %v3874 = vld [vmem:[%s3640 + $0x30] sm:$0xff]
        %v3875 = vld [vmem:[%s3640 + $0x38] sm:$0xff]
        %v3876 = vld [vmem:[%s3640 + $0x40] sm:$0xff]
        %v3877 = vld [vmem:[%s3640 + $0x60] sm:$0xff]
        %v3878 = vld [vmem:[%s3640 + $0x68] sm:$0xff]
        %v3879 = vld [vmem:[%s3640 + $0x70] sm:$0xff]
        %v3880 = vld [vmem:[%s3640 + $0x90] sm:$0xff]
        %v3881 = vld [vmem:[%s3640 + $0x98] sm:$0xff]
        %v3882 = vld [vmem:[%s3640 + $0xa0] sm:$0xff]
        %v3883 = vld [vmem:[%s3640 + $0xc0] sm:$0xff]
        %v3884 = vld [vmem:[%s3640 + $0xc8] sm:$0xff]
        %v3885 = vld [vmem:[%s3640 + $0xd0] sm:$0xff]
        %v3886 = vld [vmem:[%s3640 + $0xf0] sm:$0xff]
        %v3887 = vld [vmem:[%s3640 + $0xf8] sm:$0xff]
        %v3888 = vld [vmem:[%s3640 + $0x100] sm:$0xff]
        %v3889 = vld [vmem:[%s3640 + $0x120] sm:$0xff]
        %v3890 = vld [vmem:[%s3640 + $0x128] sm:$0xff]
        %v3891 = vld [vmem:[%s3640 + $0x130] sm:$0xff]
        %v3892 = vld [vmem:[%s3640 + $0x150] sm:$0xff]
        %v3893 = vld [vmem:[%s3640 + $0x158] sm:$0xff]
        %v3894 = vld [vmem:[%s3640 + $0x160] sm:$0xff]
        %v3895 = vrot.slane %v3871, 7
        %v3896 = vrot.slane %v3874, 7
        %v3897 = vrot.slane %v3877, 7
        %v3898 = vrot.slane %v3880, 7
        %v3899 = vrot.slane %v3883, 7
        %v3900 = vrot.slane %v3886, 7
        %v3901 = vrot.slane %v3889, 7
        %v3902 = vrot.slane %v3892, 7
        %v3903 = vrot.slane %v3872, 7
        %v3904 = vrot.slane %v3875, 7
        %v3905 = vrot.slane %v3878, 7
        %v3906 = vrot.slane %v3881, 7
        %v3907 = vrot.slane %v3884, 7
        %v3908 = vrot.slane %v3887, 7
        %v3909 = vrot.slane %v3890, 7
        %v3910 = vrot.slane %v3893, 7
        %v3911 = vrot.slane %v3873, 7
        %v3912 = vrot.slane %v3876, 7
        %v3913 = vrot.slane %v3879, 7
        %v3914 = vrot.slane %v3882, 7
        %v3915 = vrot.slane %v3885, 7
        %v3916 = vrot.slane %v3888, 7
        %v3917 = vrot.slane %v3891, 7
        %v3918 = vrot.slane %v3894, 7
        %v3919 = vsel %vm641, %v3895, %v3903
        %v3920 = vsel %vm641, %v3896, %v3904
        %v3921 = vsel %vm641, %v3897, %v3905
        %v3922 = vsel %vm641, %v3898, %v3906
        %v3923 = vsel %vm641, %v3899, %v3907
        %v3924 = vsel %vm641, %v3900, %v3908
        %v3925 = vsel %vm641, %v3901, %v3909
        %v3926 = vsel %vm641, %v3902, %v3910
        %v3927 = vsel %vm641, %v3911, %v3895
        %v3928 = vsel %vm641, %v3912, %v3896
        %v3929 = vsel %vm641, %v3913, %v3897
        %v3930 = vsel %vm641, %v3914, %v3898
        %v3931 = vsel %vm641, %v3915, %v3899
        %v3932 = vsel %vm641, %v3916, %v3900
        %v3933 = vsel %vm641, %v3917, %v3901
        %v3934 = vsel %vm641, %v3918, %v3902
        %v3935 = vrot.slane %v3871, 1
        %v3936 = vrot.slane %v3874, 1
        %v3937 = vrot.slane %v3877, 1
        %v3938 = vrot.slane %v3880, 1
        %v3939 = vrot.slane %v3883, 1
        %v3940 = vrot.slane %v3886, 1
        %v3941 = vrot.slane %v3889, 1
        %v3942 = vrot.slane %v3892, 1
        %v3943 = vrot.slane %v3872, 1
        %v3944 = vrot.slane %v3875, 1
        %v3945 = vrot.slane %v3878, 1
        %v3946 = vrot.slane %v3881, 1
        %v3947 = vrot.slane %v3884, 1
        %v3948 = vrot.slane %v3887, 1
        %v3949 = vrot.slane %v3890, 1
        %v3950 = vrot.slane %v3893, 1
        %v3951 = vrot.slane %v3873, 1
        %v3952 = vrot.slane %v3876, 1
        %v3953 = vrot.slane %v3879, 1
        %v3954 = vrot.slane %v3882, 1
        %v3955 = vrot.slane %v3885, 1
        %v3956 = vrot.slane %v3888, 1
        %v3957 = vrot.slane %v3891, 1
        %v3958 = vrot.slane %v3894, 1
        %v3959 = vsel %vm722, %v3943, %v3951
        %v3960 = vsel %vm722, %v3944, %v3952
        %v3961 = vsel %vm722, %v3945, %v3953
        %v3962 = vsel %vm722, %v3946, %v3954
        %v3963 = vsel %vm722, %v3947, %v3955
        %v3964 = vsel %vm722, %v3948, %v3956
        %v3965 = vsel %vm722, %v3949, %v3957
        %v3966 = vsel %vm722, %v3950, %v3958
        %v3967 = vsel %vm722, %v3935, %v3943
        %v3968 = vsel %vm722, %v3936, %v3944
        %v3969 = vsel %vm722, %v3937, %v3945
        %v3970 = vsel %vm722, %v3938, %v3946
        %v3971 = vsel %vm722, %v3939, %v3947
        %v3972 = vsel %vm722, %v3940, %v3948
        %v3973 = vsel %vm722, %v3941, %v3949
        %v3974 = vsel %vm722, %v3942, %v3950
        %v3975 = vlaneseq
        %v3976 = vshrl.u32 %v3975, 7
        %v3977 = vsub.s32 3, %v3976
        %v3978 = vrot.slane %v3673, %v3977
        %v3979 = vmul.f32 %v3927, %v3978
        %v3980 = vmul.f32 %v3919, %v3978
        %v3981 = vmul.f32 %v3928, %v3978
        %v3982 = vmul.f32 %v3920, %v3978
        %v3983 = vmul.f32 %v3929, %v3978
        %v3984 = vmul.f32 %v3921, %v3978
        %v3985 = vmul.f32 %v3930, %v3978
        %v3986 = vmul.f32 %v3922, %v3978
        %v3987 = vmul.f32 %v3931, %v3978
        %v3988 = vmul.f32 %v3923, %v3978
        %v3989 = vmul.f32 %v3932, %v3978
        %v3990 = vmul.f32 %v3924, %v3978
        %v3991 = vmul.f32 %v3933, %v3978
        %v3992 = vmul.f32 %v3925, %v3978
        %v3993 = vmul.f32 %v3934, %v3978
        %v3994 = vmul.f32 %v3926, %v3978
        %v3995 = vadd.f32 %v3855, %v3979
        %v3996 = vadd.f32 %v3856, %v3980
        %v3997 = vadd.f32 %v3857, %v3981
        %v3998 = vadd.f32 %v3858, %v3982
        %v3999 = vadd.f32 %v3859, %v3983
        %v4000 = vadd.f32 %v3860, %v3984
        %v4001 = vadd.f32 %v3861, %v3985
        %v4002 = vadd.f32 %v3862, %v3986
        %v4003 = vadd.f32 %v3863, %v3987
        %v4004 = vadd.f32 %v3864, %v3988
        %v4005 = vadd.f32 %v3865, %v3989
        %v4006 = vadd.f32 %v3866, %v3990
        %v4007 = vadd.f32 %v3867, %v3991
        %v4008 = vadd.f32 %v3868, %v3992
        %v4009 = vadd.f32 %v3869, %v3993
        %v4010 = vadd.f32 %v3870, %v3994
        %v4011 = vlaneseq
        %v4012 = vshrl.u32 %v4011, 7
        %v4013 = vsub.s32 4, %v4012
        %v4014 = vrot.slane %v3673, %v4013
        %v4015 = vmul.f32 %v3871, %v4014
        %v4016 = vmul.f32 %v3872, %v4014
        %v4017 = vmul.f32 %v3874, %v4014
        %v4018 = vmul.f32 %v3875, %v4014
        %v4019 = vmul.f32 %v3877, %v4014
        %v4020 = vmul.f32 %v3878, %v4014
        %v4021 = vmul.f32 %v3880, %v4014
        %v4022 = vmul.f32 %v3881, %v4014
        %v4023 = vmul.f32 %v3883, %v4014
        %v4024 = vmul.f32 %v3884, %v4014
        %v4025 = vmul.f32 %v3886, %v4014
        %v4026 = vmul.f32 %v3887, %v4014
        %v4027 = vmul.f32 %v3889, %v4014
        %v4028 = vmul.f32 %v3890, %v4014
        %v4029 = vmul.f32 %v3892, %v4014
        %v4030 = vmul.f32 %v3893, %v4014
        %v4031 = vadd.f32 %v3995, %v4015
        %v4032 = vadd.f32 %v3996, %v4016
        %v4033 = vadd.f32 %v3997, %v4017
        %v4034 = vadd.f32 %v3998, %v4018
        %v4035 = vadd.f32 %v3999, %v4019
        %v4036 = vadd.f32 %v4000, %v4020
        %v4037 = vadd.f32 %v4001, %v4021
        %v4038 = vadd.f32 %v4002, %v4022
        %v4039 = vadd.f32 %v4003, %v4023
        %v4040 = vadd.f32 %v4004, %v4024
        %v4041 = vadd.f32 %v4005, %v4025
        %v4042 = vadd.f32 %v4006, %v4026
        %v4043 = vadd.f32 %v4007, %v4027
        %v4044 = vadd.f32 %v4008, %v4028
        %v4045 = vadd.f32 %v4009, %v4029
        %v4046 = vadd.f32 %v4010, %v4030
        %v4047 = vlaneseq
        %v4048 = vshrl.u32 %v4047, 7
        %v4049 = vsub.s32 5, %v4048
        %v4050 = vrot.slane %v3673, %v4049
        %v4051 = vmul.f32 %v3967, %v4050
        %v4052 = vmul.f32 %v3959, %v4050
        %v4053 = vmul.f32 %v3968, %v4050
        %v4054 = vmul.f32 %v3960, %v4050
        %v4055 = vmul.f32 %v3969, %v4050
        %v4056 = vmul.f32 %v3961, %v4050
        %v4057 = vmul.f32 %v3970, %v4050
        %v4058 = vmul.f32 %v3962, %v4050
        %v4059 = vmul.f32 %v3971, %v4050
        %v4060 = vmul.f32 %v3963, %v4050
        %v4061 = vmul.f32 %v3972, %v4050
        %v4062 = vmul.f32 %v3964, %v4050
        %v4063 = vmul.f32 %v3973, %v4050
        %v4064 = vmul.f32 %v3965, %v4050
        %v4065 = vmul.f32 %v3974, %v4050
        %v4066 = vmul.f32 %v3966, %v4050
        %v4067 = vadd.f32 %v4031, %v4051
        %v4068 = vadd.f32 %v4032, %v4052
        %v4069 = vadd.f32 %v4033, %v4053
        %v4070 = vadd.f32 %v4034, %v4054
        %v4071 = vadd.f32 %v4035, %v4055
        %v4072 = vadd.f32 %v4036, %v4056
        %v4073 = vadd.f32 %v4037, %v4057
        %v4074 = vadd.f32 %v4038, %v4058
        %v4075 = vadd.f32 %v4039, %v4059
        %v4076 = vadd.f32 %v4040, %v4060
        %v4077 = vadd.f32 %v4041, %v4061
        %v4078 = vadd.f32 %v4042, %v4062
        %v4079 = vadd.f32 %v4043, %v4063
        %v4080 = vadd.f32 %v4044, %v4064
        %v4081 = vadd.f32 %v4045, %v4065
        %v4082 = vadd.f32 %v4046, %v4066
        %s4083 = scalar_lea.vmem [#allocation4], 48
        %v4084 = vld [vmem:[%s4083] sm:$0xff]
        %v4085 = vld [vmem:[%s4083 + $0x8] sm:$0xff]
        %v4086 = vld [vmem:[%s4083 + $0x10] sm:$0xff]
        %v4087 = vld [vmem:[%s4083 + $0x30] sm:$0xff]
        %v4088 = vld [vmem:[%s4083 + $0x38] sm:$0xff]
        %v4089 = vld [vmem:[%s4083 + $0x40] sm:$0xff]
        %v4090 = vld [vmem:[%s4083 + $0x60] sm:$0xff]
        %v4091 = vld [vmem:[%s4083 + $0x68] sm:$0xff]
        %v4092 = vld [vmem:[%s4083 + $0x70] sm:$0xff]
        %v4093 = vld [vmem:[%s4083 + $0x90] sm:$0xff]
        %v4094 = vld [vmem:[%s4083 + $0x98] sm:$0xff]
        %v4095 = vld [vmem:[%s4083 + $0xa0] sm:$0xff]
        %v4096 = vld [vmem:[%s4083 + $0xc0] sm:$0xff]
        %v4097 = vld [vmem:[%s4083 + $0xc8] sm:$0xff]
        %v4098 = vld [vmem:[%s4083 + $0xd0] sm:$0xff]
        %v4099 = vld [vmem:[%s4083 + $0xf0] sm:$0xff]
        %v4100 = vld [vmem:[%s4083 + $0xf8] sm:$0xff]
        %v4101 = vld [vmem:[%s4083 + $0x100] sm:$0xff]
        %v4102 = vld [vmem:[%s4083 + $0x120] sm:$0xff]
        %v4103 = vld [vmem:[%s4083 + $0x128] sm:$0xff]
        %v4104 = vld [vmem:[%s4083 + $0x130] sm:$0xff]
        %v4105 = vld [vmem:[%s4083 + $0x150] sm:$0xff]
        %v4106 = vld [vmem:[%s4083 + $0x158] sm:$0xff]
        %v4107 = vld [vmem:[%s4083 + $0x160] sm:$0xff]
        %v4108 = vrot.slane %v4084, 7
        %v4109 = vrot.slane %v4087, 7
        %v4110 = vrot.slane %v4090, 7
        %v4111 = vrot.slane %v4093, 7
        %v4112 = vrot.slane %v4096, 7
        %v4113 = vrot.slane %v4099, 7
        %v4114 = vrot.slane %v4102, 7
        %v4115 = vrot.slane %v4105, 7
        %v4116 = vrot.slane %v4085, 7
        %v4117 = vrot.slane %v4088, 7
        %v4118 = vrot.slane %v4091, 7
        %v4119 = vrot.slane %v4094, 7
        %v4120 = vrot.slane %v4097, 7
        %v4121 = vrot.slane %v4100, 7
        %v4122 = vrot.slane %v4103, 7
        %v4123 = vrot.slane %v4106, 7
        %v4124 = vrot.slane %v4086, 7
        %v4125 = vrot.slane %v4089, 7
        %v4126 = vrot.slane %v4092, 7
        %v4127 = vrot.slane %v4095, 7
        %v4128 = vrot.slane %v4098, 7
        %v4129 = vrot.slane %v4101, 7
        %v4130 = vrot.slane %v4104, 7
        %v4131 = vrot.slane %v4107, 7
        %v4132 = vsel %vm641, %v4108, %v4116
        %v4133 = vsel %vm641, %v4109, %v4117
        %v4134 = vsel %vm641, %v4110, %v4118
        %v4135 = vsel %vm641, %v4111, %v4119
        %v4136 = vsel %vm641, %v4112, %v4120
        %v4137 = vsel %vm641, %v4113, %v4121
        %v4138 = vsel %vm641, %v4114, %v4122
        %v4139 = vsel %vm641, %v4115, %v4123
        %v4140 = vsel %vm641, %v4124, %v4108
        %v4141 = vsel %vm641, %v4125, %v4109
        %v4142 = vsel %vm641, %v4126, %v4110
        %v4143 = vsel %vm641, %v4127, %v4111
        %v4144 = vsel %vm641, %v4128, %v4112
        %v4145 = vsel %vm641, %v4129, %v4113
        %v4146 = vsel %vm641, %v4130, %v4114
        %v4147 = vsel %vm641, %v4131, %v4115
        %v4148 = vrot.slane %v4084, 1
        %v4149 = vrot.slane %v4087, 1
        %v4150 = vrot.slane %v4090, 1
        %v4151 = vrot.slane %v4093, 1
        %v4152 = vrot.slane %v4096, 1
        %v4153 = vrot.slane %v4099, 1
        %v4154 = vrot.slane %v4102, 1
        %v4155 = vrot.slane %v4105, 1
        %v4156 = vrot.slane %v4085, 1
        %v4157 = vrot.slane %v4088, 1
        %v4158 = vrot.slane %v4091, 1
        %v4159 = vrot.slane %v4094, 1
        %v4160 = vrot.slane %v4097, 1
        %v4161 = vrot.slane %v4100, 1
        %v4162 = vrot.slane %v4103, 1
        %v4163 = vrot.slane %v4106, 1
        %v4164 = vrot.slane %v4086, 1
        %v4165 = vrot.slane %v4089, 1
        %v4166 = vrot.slane %v4092, 1
        %v4167 = vrot.slane %v4095, 1
        %v4168 = vrot.slane %v4098, 1
        %v4169 = vrot.slane %v4101, 1
        %v4170 = vrot.slane %v4104, 1
        %v4171 = vrot.slane %v4107, 1
        %v4172 = vsel %vm722, %v4156, %v4164
        %v4173 = vsel %vm722, %v4157, %v4165
        %v4174 = vsel %vm722, %v4158, %v4166
        %v4175 = vsel %vm722, %v4159, %v4167
        %v4176 = vsel %vm722, %v4160, %v4168
        %v4177 = vsel %vm722, %v4161, %v4169
        %v4178 = vsel %vm722, %v4162, %v4170
        %v4179 = vsel %vm722, %v4163, %v4171
        %v4180 = vsel %vm722, %v4148, %v4156
        %v4181 = vsel %vm722, %v4149, %v4157
        %v4182 = vsel %vm722, %v4150, %v4158
        %v4183 = vsel %vm722, %v4151, %v4159
        %v4184 = vsel %vm722, %v4152, %v4160
        %v4185 = vsel %vm722, %v4153, %v4161
        %v4186 = vsel %vm722, %v4154, %v4162
        %v4187 = vsel %vm722, %v4155, %v4163
        %v4188 = vlaneseq
        %v4189 = vshrl.u32 %v4188, 7
        %v4190 = vsub.s32 6, %v4189
        %v4191 = vrot.slane %v3673, %v4190
        %v4192 = vmul.f32 %v4140, %v4191
        %v4193 = vmul.f32 %v4132, %v4191
        %v4194 = vmul.f32 %v4141, %v4191
        %v4195 = vmul.f32 %v4133, %v4191
        %v4196 = vmul.f32 %v4142, %v4191
        %v4197 = vmul.f32 %v4134, %v4191
        %v4198 = vmul.f32 %v4143, %v4191
        %v4199 = vmul.f32 %v4135, %v4191
        %v4200 = vmul.f32 %v4144, %v4191
        %v4201 = vmul.f32 %v4136, %v4191
        %v4202 = vmul.f32 %v4145, %v4191
        %v4203 = vmul.f32 %v4137, %v4191
        %v4204 = vmul.f32 %v4146, %v4191
        %v4205 = vmul.f32 %v4138, %v4191
        %v4206 = vmul.f32 %v4147, %v4191
        %v4207 = vmul.f32 %v4139, %v4191
        %v4208 = vadd.f32 %v4067, %v4192
        %v4209 = vadd.f32 %v4068, %v4193
        %v4210 = vadd.f32 %v4069, %v4194
        %v4211 = vadd.f32 %v4070, %v4195
        %v4212 = vadd.f32 %v4071, %v4196
        %v4213 = vadd.f32 %v4072, %v4197
        %v4214 = vadd.f32 %v4073, %v4198
        %v4215 = vadd.f32 %v4074, %v4199
        %v4216 = vadd.f32 %v4075, %v4200
        %v4217 = vadd.f32 %v4076, %v4201
        %v4218 = vadd.f32 %v4077, %v4202
        %v4219 = vadd.f32 %v4078, %v4203
        %v4220 = vadd.f32 %v4079, %v4204
        %v4221 = vadd.f32 %v4080, %v4205
        %v4222 = vadd.f32 %v4081, %v4206
        %v4223 = vadd.f32 %v4082, %v4207
        %v4224 = vlaneseq
        %v4225 = vshrl.u32 %v4224, 7
        %v4226 = vsub.s32 7, %v4225
        %v4227 = vrot.slane %v3673, %v4226
        %v4228 = vmul.f32 %v4084, %v4227
        %v4229 = vmul.f32 %v4085, %v4227
        %v4230 = vmul.f32 %v4087, %v4227
        %v4231 = vmul.f32 %v4088, %v4227
        %v4232 = vmul.f32 %v4090, %v4227
        %v4233 = vmul.f32 %v4091, %v4227
        %v4234 = vmul.f32 %v4093, %v4227
        %v4235 = vmul.f32 %v4094, %v4227
        %v4236 = vmul.f32 %v4096, %v4227
        %v4237 = vmul.f32 %v4097, %v4227
        %v4238 = vmul.f32 %v4099, %v4227
        %v4239 = vmul.f32 %v4100, %v4227
        %v4240 = vmul.f32 %v4102, %v4227
        %v4241 = vmul.f32 %v4103, %v4227
        %v4242 = vmul.f32 %v4105, %v4227
        %v4243 = vmul.f32 %v4106, %v4227
        %v4244 = vadd.f32 %v4208, %v4228
        %v4245 = vadd.f32 %v4209, %v4229
        %v4246 = vadd.f32 %v4210, %v4230
        %v4247 = vadd.f32 %v4211, %v4231
        %v4248 = vadd.f32 %v4212, %v4232
        %v4249 = vadd.f32 %v4213, %v4233
        %v4250 = vadd.f32 %v4214, %v4234
        %v4251 = vadd.f32 %v4215, %v4235
        %v4252 = vadd.f32 %v4216, %v4236
        %v4253 = vadd.f32 %v4217, %v4237
        %v4254 = vadd.f32 %v4218, %v4238
        %v4255 = vadd.f32 %v4219, %v4239
        %v4256 = vadd.f32 %v4220, %v4240
        %v4257 = vadd.f32 %v4221, %v4241
        %v4258 = vadd.f32 %v4222, %v4242
        %v4259 = vadd.f32 %v4223, %v4243
        %v4260 = vlaneseq
        %v4261 = vshrl.u32 %v4260, 7
        %v4262 = vsub.s32 0, %v4261
        %v4263 = vrot.slane %v3674, %v4262
        %v4264 = vmul.f32 %v4180, %v4263
        %v4265 = vmul.f32 %v4172, %v4263
        %v4266 = vmul.f32 %v4181, %v4263
        %v4267 = vmul.f32 %v4173, %v4263
        %v4268 = vmul.f32 %v4182, %v4263
        %v4269 = vmul.f32 %v4174, %v4263
        %v4270 = vmul.f32 %v4183, %v4263
        %v4271 = vmul.f32 %v4175, %v4263
        %v4272 = vmul.f32 %v4184, %v4263
        %v4273 = vmul.f32 %v4176, %v4263
        %v4274 = vmul.f32 %v4185, %v4263
        %v4275 = vmul.f32 %v4177, %v4263
        %v4276 = vmul.f32 %v4186, %v4263
        %v4277 = vmul.f32 %v4178, %v4263
        %v4278 = vmul.f32 %v4187, %v4263
        %v4279 = vmul.f32 %v4179, %v4263
        %v4280 = vadd.f32 %v4244, %v4264
        %v4281 = vadd.f32 %v4245, %v4265
        %v4282 = vadd.f32 %v4246, %v4266
        %v4283 = vadd.f32 %v4247, %v4267
        %v4284 = vadd.f32 %v4248, %v4268
        %v4285 = vadd.f32 %v4249, %v4269
        %v4286 = vadd.f32 %v4250, %v4270
        %v4287 = vadd.f32 %v4251, %v4271
        %v4288 = vadd.f32 %v4252, %v4272
        %v4289 = vadd.f32 %v4253, %v4273
        %v4290 = vadd.f32 %v4254, %v4274
        %v4291 = vadd.f32 %v4255, %v4275
        %v4292 = vadd.f32 %v4256, %v4276
        %v4293 = vadd.f32 %v4257, %v4277
        %v4294 = vadd.f32 %v4258, %v4278
        %v4295 = vadd.f32 %v4259, %v4279
        %v4296 = vlaneseq
        %v4297 = vshrl.u32 %v4296, 7
        %v4298 = vsub.s32 1, %v4297
        %v4299 = vrot.slane %v3674, %v4298
        %v4300 = vadd.f32 %v4280, %v4299
        %v4301 = vadd.f32 %v4281, %v4299
        %v4302 = vadd.f32 %v4282, %v4299
        %v4303 = vadd.f32 %v4283, %v4299
        %v4304 = vadd.f32 %v4284, %v4299
        %v4305 = vadd.f32 %v4285, %v4299
        %v4306 = vadd.f32 %v4286, %v4299
        %v4307 = vadd.f32 %v4287, %v4299
        %v4308 = vadd.f32 %v4288, %v4299
        %v4309 = vadd.f32 %v4289, %v4299
        %v4310 = vadd.f32 %v4290, %v4299
        %v4311 = vadd.f32 %v4291, %v4299
        %v4312 = vadd.f32 %v4292, %v4299
        %v4313 = vadd.f32 %v4293, %v4299
        %v4314 = vadd.f32 %v4294, %v4299
        %v4315 = vadd.f32 %v4295, %v4299
        %4316 = vst.msk [vmem:[#allocation5] sm:$0xff] %vm429, %v4300
        %4317 = vst.msk [vmem:[#allocation5 + $0x8] sm:$0xff] %vm429, %v4301
        %4318 = vst.msk [vmem:[#allocation5 + $0x10] sm:$0xff] %vm429, %v4302
        %4319 = vst.msk [vmem:[#allocation5 + $0x18] sm:$0xff] %vm429, %v4303
        %4320 = vst.msk [vmem:[#allocation5 + $0x20] sm:$0xff] %vm429, %v4304
        %4321 = vst.msk [vmem:[#allocation5 + $0x28] sm:$0xff] %vm429, %v4305
        %4322 = vst.msk [vmem:[#allocation5 + $0x30] sm:$0xff] %vm429, %v4306
        %4323 = vst.msk [vmem:[#allocation5 + $0x38] sm:$0xff] %vm429, %v4307
        %4324 = vst.msk [vmem:[#allocation5 + $0x40] sm:$0xff] %vm429, %v4308
        %4325 = vst.msk [vmem:[#allocation5 + $0x48] sm:$0xff] %vm429, %v4309
        %4326 = vst.msk [vmem:[#allocation5 + $0x50] sm:$0xff] %vm429, %v4310
        %4327 = vst.msk [vmem:[#allocation5 + $0x58] sm:$0xff] %vm429, %v4311
        %4328 = vst.msk [vmem:[#allocation5 + $0x60] sm:$0xff] %vm429, %v4312
        %4329 = vst.msk [vmem:[#allocation5 + $0x68] sm:$0xff] %vm429, %v4313
        %4330 = vst.msk [vmem:[#allocation5 + $0x70] sm:$0xff] %vm429, %v4314
        %4331 = vst.msk [vmem:[#allocation5 + $0x78] sm:$0xff] %vm429, %v4315
        %v4332 = vld [vmem:[#allocation5] ss:$2 sm:$0xff]
        %s4333 = scalar_lea.vmem [#allocation5], 16
        %v4334 = vld [vmem:[%s4333] ss:$2 sm:$0xff]
        %s4335 = scalar_lea.vmem [#allocation5], 32
        %v4336 = vld [vmem:[%s4335] ss:$2 sm:$0xff]
        %s4337 = scalar_lea.vmem [#allocation5], 48
        %v4338 = vld [vmem:[%s4337] ss:$2 sm:$0xff]
        %s4339 = scalar_lea.vmem [#allocation5], 64
        %v4340 = vld [vmem:[%s4339] ss:$2 sm:$0xff]
        %s4341 = scalar_lea.vmem [#allocation5], 80
        %v4342 = vld [vmem:[%s4341] ss:$2 sm:$0xff]
        %s4343 = scalar_lea.vmem [#allocation5], 96
        %v4344 = vld [vmem:[%s4343] ss:$2 sm:$0xff]
        %s4345 = scalar_lea.vmem [#allocation5], 112
        %v4346 = vld [vmem:[%s4345] ss:$2 sm:$0xff]
        %v4347 = vpack.c.bf16 %v4334, %v4332
        %v4348 = vpack.c.bf16 %v4338, %v4336
        %v4349 = vpack.c.bf16 %v4342, %v4340
        %v4350 = vpack.c.bf16 %v4346, %v4344
        %v4351 = vld [vmem:[%s8] sm:$0xff]
        %v4352 = vld [vmem:[%s8 + $0x8] sm:$0xff]
        %v4353 = vld [vmem:[%s8 + $0x10] sm:$0xff]
        %v4354 = vld [vmem:[%s8 + $0x18] sm:$0xff]
        %v4355 = vld [vmem:[%s8 + $0x20] sm:$0xff]
        %v4356 = vld [vmem:[%s8 + $0x28] sm:$0xff]
        %v4357 = vld [vmem:[%s8 + $0x30] sm:$0xff]
        %v4358 = vld [vmem:[%s8 + $0x38] sm:$0xff]
        %v4359 = vld [vmem:[%s9] sm:$0x3]
        %v4361 = vlaneseq
        %v4362 = vshrl.u32 %v4361, 7
        %v4363 = vsub.s32 0, %v4362
        %v4364 = vrot.slane %v4359, %v4363
        %v4365 = vlaneseq
        %v4366 = vshrl.u32 %v4365, 7
        %v4367 = vsub.s32 1, %v4366
        %v4368 = vrot.slane %v4359, %v4367
        %v4379 = vunpack.c.l.b16 %v4351
        %v4380 = vunpack.c.h.b16 %v4351
        %v4381 = vunpack.c.l.b16 %v4352
        %v4382 = vunpack.c.h.b16 %v4352
        %v4383 = vunpack.c.l.b16 %v4353
        %v4384 = vunpack.c.h.b16 %v4353
        %v4385 = vunpack.c.l.b16 %v4354
        %v4386 = vunpack.c.h.b16 %v4354
        %v4387 = vunpack.c.l.b16 %v4355
        %v4388 = vunpack.c.h.b16 %v4355
        %v4389 = vunpack.c.l.b16 %v4356
        %v4390 = vunpack.c.h.b16 %v4356
        %v4391 = vunpack.c.l.b16 %v4357
        %v4392 = vunpack.c.h.b16 %v4357
        %v4393 = vunpack.c.l.b16 %v4358
        %v4394 = vunpack.c.h.b16 %v4358
        %v4395 = vpack.c.b16 %v4381, %v4379
        %v4396 = vpack.c.b16 %v4382, %v4380
        %v4397 = vpack.c.b16 %v4385, %v4383
        %v4398 = vpack.c.b16 %v4386, %v4384
        %v4399 = vpack.c.b16 %v4389, %v4387
        %v4400 = vpack.c.b16 %v4390, %v4388
        %v4401 = vpack.c.b16 %v4393, %v4391
        %v4402 = vpack.c.b16 %v4394, %v4392
        %v4412 = vsel %vm429, %v4347, 0
        %v4415 = vsel %vm429, %v4348, 0
        %v4418 = vsel %vm429, %v4349, 0
        %v4421 = vsel %vm429, %v4350, 0
        %4423 = vmatprep.subr.bf16.mxu0 %v4396
        %4424 = vmatpush1.bf16.msra.mxu0 %v4395
        %4425 = vmatprep.subr.bf16.mxu0 %v4398
        %4426 = vmatpush1.bf16.msra.mxu0 %v4397
        %4427 = vmatprep.subr.bf16.mxu0 %v4400
        %4428 = vmatpush1.bf16.msra.mxu0 %v4399
        %4429 = vmatprep.subr.bf16.mxu0 %v4402
        %4430 = vmatpush1.bf16.msra.mxu0 %v4401
        %4431 = vmatprep.subr.bf16.mxu0 0
        %4432 = vmatpush1.bf16.msra.mxu0 0
        %4433 = vmatprep.subr.bf16.mxu0 0
        %4434 = vmatpush1.bf16.msra.mxu0 0
        %4435 = vmatprep.subr.bf16.mxu0 0
        %4436 = vmatpush1.bf16.msra.mxu0 0
        %4437 = vmatprep.subr.bf16.mxu0 0
        %4438 = vmatpush1.bf16.msra.mxu0 0
        %4439 = vmatprep.subr.bf16.mxu0 0
        %4440 = vmatpush1.bf16.msra.mxu0 0
        %4441 = vmatprep.subr.bf16.mxu0 0
        %4442 = vmatpush1.bf16.msra.mxu0 0
        %4443 = vmatprep.subr.bf16.mxu0 0
        %4444 = vmatpush1.bf16.msra.mxu0 0
        %4445 = vmatprep.subr.bf16.mxu0 0
        %4446 = vmatpush1.bf16.msra.mxu0 0
        %4447 = vmatprep.subr.bf16.mxu0 0
        %4448 = vmatpush1.bf16.msra.mxu0 0
        %4449 = vmatprep.subr.bf16.mxu0 0
        %4450 = vmatpush1.bf16.msra.mxu0 0
        %4451 = vmatprep.subr.bf16.mxu0 0
        %4452 = vmatpush1.bf16.msra.mxu0 0
        %4453 = vmatprep.subr.bf16.mxu0 0
        %4454 = vmatpush1.bf16.msra.mxu0 0
        %4455 = vmatprep.mubr.bf16.mxu0 0
        %4456 = vmatmul.mubr.bf16.gmra.mrb[0].mxu0 %v4412
        %v4457 = vpop.f32.mrb[0].mxu0
        %v4458 = vadd.f32 %v4364, %v4457
        %v4459 = vpop.f32.mrb[0].mxu0
        %v4460 = vadd.f32 %v4368, %v4459
        %v4461 = vpop.f32.mrb[0].mxu0
        %v4462 = vadd.f32 %v4364, %v4461
        %v4463 = vpop.f32.mrb[0].mxu0
        %v4464 = vadd.f32 %v4368, %v4463
        %4465 = vmatprep.mubr.bf16.mxu0 0
        %4466 = vmatmul.mubr.bf16.gmra.mrb[0].mxu0 %v4415
        %v4467 = vpop.f32.mrb[0].mxu0
        %v4468 = vadd.f32 %v4364, %v4467
        %v4469 = vpop.f32.mrb[0].mxu0
        %v4470 = vadd.f32 %v4368, %v4469
        %v4471 = vpop.f32.mrb[0].mxu0
        %v4472 = vadd.f32 %v4364, %v4471
        %v4473 = vpop.f32.mrb[0].mxu0
        %v4474 = vadd.f32 %v4368, %v4473
        %4475 = vmatprep.mubr.bf16.mxu0 0
        %4476 = vmatmul.mubr.bf16.gmra.mrb[0].mxu0 %v4418
        %v4477 = vpop.f32.mrb[0].mxu0
        %v4478 = vadd.f32 %v4364, %v4477
        %v4479 = vpop.f32.mrb[0].mxu0
        %v4480 = vadd.f32 %v4368, %v4479
        %v4481 = vpop.f32.mrb[0].mxu0
        %v4482 = vadd.f32 %v4364, %v4481
        %v4483 = vpop.f32.mrb[0].mxu0
        %v4484 = vadd.f32 %v4368, %v4483
        %4485 = vmatprep.mubr.bf16.mxu0 0
        %4486 = vmatmul.mubr.bf16.gmra.mrb[0].mxu0 %v4421
        %v4487 = vpop.f32.mrb[0].mxu0
        %v4488 = vadd.f32 %v4364, %v4487
        %v4489 = vpop.f32.mrb[0].mxu0
        %v4490 = vadd.f32 %v4368, %v4489
        %v4491 = vpop.f32.mrb[0].mxu0
        %v4492 = vadd.f32 %v4364, %v4491
        %v4493 = vpop.f32.mrb[0].mxu0
        %v4494 = vadd.f32 %v4368, %v4493
        %4495 = vdwg.mxu0
        %v4496 = vmax.f32 %v4458, 0.0
        %v4497 = vmax.f32 %v4460, 0.0
        %v4498 = vmax.f32 %v4462, 0.0
        %v4499 = vmax.f32 %v4464, 0.0
        %v4500 = vmax.f32 %v4468, 0.0
        %v4501 = vmax.f32 %v4470, 0.0
        %v4502 = vmax.f32 %v4472, 0.0
        %v4503 = vmax.f32 %v4474, 0.0
        %v4504 = vmax.f32 %v4478, 0.0
        %v4505 = vmax.f32 %v4480, 0.0
        %v4506 = vmax.f32 %v4482, 0.0
        %v4507 = vmax.f32 %v4484, 0.0
        %v4508 = vmax.f32 %v4488, 0.0
        %v4509 = vmax.f32 %v4490, 0.0
        %v4510 = vmax.f32 %v4492, 0.0
        %v4511 = vmax.f32 %v4494, 0.0
        %v4512 = vld [vmem:[%s508] ss:$2 sm:$0xff]
        %s4513 = scalar_lea.vmem %s508, 48 [#allocation2]
        %v4514 = vld [vmem:[%s4513] ss:$2 sm:$0xff]
        %s4515 = scalar_lea.vmem %s508, 96 [#allocation2]
        %v4516 = vld [vmem:[%s4515] ss:$2 sm:$0xff]
        %s4517 = scalar_lea.vmem %s508, 144 [#allocation2]
        %v4518 = vld [vmem:[%s4517] ss:$2 sm:$0xff]
        %s4519 = scalar_lea.vmem %s508, 192 [#allocation2]
        %v4520 = vld [vmem:[%s4519] ss:$2 sm:$0xff]
        %s4521 = scalar_lea.vmem %s508, 240 [#allocation2]
        %v4522 = vld [vmem:[%s4521] ss:$2 sm:$0xff]
        %s4523 = scalar_lea.vmem %s508, 288 [#allocation2]
        %v4524 = vld [vmem:[%s4523] ss:$2 sm:$0xff]
        %s4525 = scalar_lea.vmem %s508, 336 [#allocation2]
        %v4526 = vld [vmem:[%s4525] ss:$2 sm:$0xff]
        %v4527 = vpack.c.bf16 %v4514, %v4512
        %v4528 = vpack.c.bf16 %v4518, %v4516
        %v4529 = vpack.c.bf16 %v4522, %v4520
        %v4530 = vpack.c.bf16 %v4526, %v4524
        %v4531 = vld [vmem:[%s10] sm:$0xff]
        %v4532 = vld [vmem:[%s10 + $0x8] sm:$0xff]
        %v4533 = vld [vmem:[%s10 + $0x10] sm:$0xff]
        %v4534 = vld [vmem:[%s10 + $0x18] sm:$0xff]
        %v4535 = vld [vmem:[%s10 + $0x20] sm:$0xff]
        %v4536 = vld [vmem:[%s10 + $0x28] sm:$0xff]
        %v4537 = vld [vmem:[%s10 + $0x30] sm:$0xff]
        %v4538 = vld [vmem:[%s10 + $0x38] sm:$0xff]
        %v4539 = vld [vmem:[%s10 + $0x40] sm:$0xff]
        %v4540 = vld [vmem:[%s10 + $0x48] sm:$0xff]
        %v4541 = vld [vmem:[%s10 + $0x50] sm:$0xff]
        %v4542 = vld [vmem:[%s10 + $0x58] sm:$0xff]
        %v4543 = vld [vmem:[%s10 + $0x60] sm:$0xff]
        %v4544 = vld [vmem:[%s10 + $0x68] sm:$0xff]
        %v4545 = vld [vmem:[%s10 + $0x70] sm:$0xff]
        %v4546 = vld [vmem:[%s10 + $0x78] sm:$0xff]
        %v4563 = vunpack.c.l.b16 %v4531
        %v4564 = vunpack.c.h.b16 %v4531
        %v4565 = vunpack.c.l.b16 %v4532
        %v4566 = vunpack.c.h.b16 %v4532
        %v4567 = vunpack.c.l.b16 %v4533
        %v4568 = vunpack.c.h.b16 %v4533
        %v4569 = vunpack.c.l.b16 %v4534
        %v4570 = vunpack.c.h.b16 %v4534
        %v4571 = vunpack.c.l.b16 %v4535
        %v4572 = vunpack.c.h.b16 %v4535
        %v4573 = vunpack.c.l.b16 %v4536
        %v4574 = vunpack.c.h.b16 %v4536
        %v4575 = vunpack.c.l.b16 %v4537
        %v4576 = vunpack.c.h.b16 %v4537
        %v4577 = vunpack.c.l.b16 %v4538
        %v4578 = vunpack.c.h.b16 %v4538
        %v4579 = vunpack.c.l.b16 %v4539
        %v4580 = vunpack.c.h.b16 %v4539
        %v4581 = vunpack.c.l.b16 %v4540
        %v4582 = vunpack.c.h.b16 %v4540
        %v4583 = vunpack.c.l.b16 %v4541
        %v4584 = vunpack.c.h.b16 %v4541
        %v4585 = vunpack.c.l.b16 %v4542
        %v4586 = vunpack.c.h.b16 %v4542
        %v4587 = vunpack.c.l.b16 %v4543
        %v4588 = vunpack.c.h.b16 %v4543
        %v4589 = vunpack.c.l.b16 %v4544
        %v4590 = vunpack.c.h.b16 %v4544
        %v4591 = vunpack.c.l.b16 %v4545
        %v4592 = vunpack.c.h.b16 %v4545
        %v4593 = vunpack.c.l.b16 %v4546
        %v4594 = vunpack.c.h.b16 %v4546
        %v4595 = vpack.c.b16 %v4565, %v4563
        %v4596 = vpack.c.b16 %v4566, %v4564
        %v4597 = vpack.c.b16 %v4569, %v4567
        %v4598 = vpack.c.b16 %v4570, %v4568
        %v4599 = vpack.c.b16 %v4573, %v4571
        %v4600 = vpack.c.b16 %v4574, %v4572
        %v4601 = vpack.c.b16 %v4577, %v4575
        %v4602 = vpack.c.b16 %v4578, %v4576
        %v4603 = vpack.c.b16 %v4581, %v4579
        %v4604 = vpack.c.b16 %v4582, %v4580
        %v4605 = vpack.c.b16 %v4585, %v4583
        %v4606 = vpack.c.b16 %v4586, %v4584
        %v4607 = vpack.c.b16 %v4589, %v4587
        %v4608 = vpack.c.b16 %v4590, %v4588
        %v4609 = vpack.c.b16 %v4593, %v4591
        %v4610 = vpack.c.b16 %v4594, %v4592
        %4627 = vmatprep.subr.bf16.mxu0 %v4596
        %4628 = vmatpush1.bf16.msra.mxu0 %v4595
        %4629 = vmatprep.subr.bf16.mxu0 %v4598
        %4630 = vmatpush1.bf16.msra.mxu0 %v4597
        %4631 = vmatprep.subr.bf16.mxu0 %v4600
        %4632 = vmatpush1.bf16.msra.mxu0 %v4599
        %4633 = vmatprep.subr.bf16.mxu0 %v4602
        %4634 = vmatpush1.bf16.msra.mxu0 %v4601
        %4635 = vmatprep.subr.bf16.mxu0 %v4604
        %4636 = vmatpush1.bf16.msra.mxu0 %v4603
        %4637 = vmatprep.subr.bf16.mxu0 %v4606
        %4638 = vmatpush1.bf16.msra.mxu0 %v4605
        %4639 = vmatprep.subr.bf16.mxu0 %v4608
        %4640 = vmatpush1.bf16.msra.mxu0 %v4607
        %4641 = vmatprep.subr.bf16.mxu0 %v4610
        %4642 = vmatpush1.bf16.msra.mxu0 %v4609
        %4643 = vmatprep.subr.bf16.mxu0 0
        %4644 = vmatpush1.bf16.msra.mxu0 0
        %4645 = vmatprep.subr.bf16.mxu0 0
        %4646 = vmatpush1.bf16.msra.mxu0 0
        %4647 = vmatprep.subr.bf16.mxu0 0
        %4648 = vmatpush1.bf16.msra.mxu0 0
        %4649 = vmatprep.subr.bf16.mxu0 0
        %4650 = vmatpush1.bf16.msra.mxu0 0
        %4651 = vmatprep.subr.bf16.mxu0 0
        %4652 = vmatpush1.bf16.msra.mxu0 0
        %4653 = vmatprep.subr.bf16.mxu0 0
        %4654 = vmatpush1.bf16.msra.mxu0 0
        %4655 = vmatprep.subr.bf16.mxu0 0
        %4656 = vmatpush1.bf16.msra.mxu0 0
        %4657 = vmatprep.subr.bf16.mxu0 0
        %4658 = vmatpush1.bf16.msra.mxu0 0
        %4659 = vmatprep.mubr.bf16.mxu0 0
        %4660 = vmatmul.mubr.bf16.gmra.mrb[0].mxu0 %v4527
        %v4661 = vpop.f32.mrb[0].mxu0
        %v4662 = vadd.f32 0.0, %v4661
        %v4663 = vpop.f32.mrb[0].mxu0
        %v4664 = vadd.f32 0.0, %v4663
        %v4665 = vpop.f32.mrb[0].mxu0
        %v4666 = vadd.f32 0.0, %v4665
        %v4667 = vpop.f32.mrb[0].mxu0
        %v4668 = vadd.f32 0.0, %v4667
        %4669 = vmatprep.mubr.bf16.mxu0 0
        %4670 = vmatmul.mubr.bf16.gmra.mrb[0].mxu0 %v4528
        %v4671 = vpop.f32.mrb[0].mxu0
        %v4672 = vadd.f32 0.0, %v4671
        %v4673 = vpop.f32.mrb[0].mxu0
        %v4674 = vadd.f32 0.0, %v4673
        %v4675 = vpop.f32.mrb[0].mxu0
        %v4676 = vadd.f32 0.0, %v4675
        %v4677 = vpop.f32.mrb[0].mxu0
        %v4678 = vadd.f32 0.0, %v4677
        %4679 = vmatprep.mubr.bf16.mxu0 0
        %4680 = vmatmul.mubr.bf16.gmra.mrb[0].mxu0 %v4529
        %v4681 = vpop.f32.mrb[0].mxu0
        %v4682 = vadd.f32 0.0, %v4681
        %v4683 = vpop.f32.mrb[0].mxu0
        %v4684 = vadd.f32 0.0, %v4683
        %v4685 = vpop.f32.mrb[0].mxu0
        %v4686 = vadd.f32 0.0, %v4685
        %v4687 = vpop.f32.mrb[0].mxu0
        %v4688 = vadd.f32 0.0, %v4687
        %4689 = vmatprep.mubr.bf16.mxu0 0
        %4690 = vmatmul.mubr.bf16.gmra.mrb[0].mxu0 %v4530
        %v4691 = vpop.f32.mrb[0].mxu0
        %v4692 = vadd.f32 0.0, %v4691
        %v4693 = vpop.f32.mrb[0].mxu0
        %v4694 = vadd.f32 0.0, %v4693
        %v4695 = vpop.f32.mrb[0].mxu0
        %v4696 = vadd.f32 0.0, %v4695
        %v4697 = vpop.f32.mrb[0].mxu0
        %v4698 = vadd.f32 0.0, %v4697
        %4699 = vdwg.mxu0
        %v4700 = vadd.f32 %v4496, %v4662
        %v4701 = vadd.f32 %v4497, %v4664
        %v4702 = vadd.f32 %v4498, %v4666
        %v4703 = vadd.f32 %v4499, %v4668
        %v4704 = vadd.f32 %v4500, %v4672
        %v4705 = vadd.f32 %v4501, %v4674
        %v4706 = vadd.f32 %v4502, %v4676
        %v4707 = vadd.f32 %v4503, %v4678
        %v4708 = vadd.f32 %v4504, %v4682
        %v4709 = vadd.f32 %v4505, %v4684
        %v4710 = vadd.f32 %v4506, %v4686
        %v4711 = vadd.f32 %v4507, %v4688
        %v4712 = vadd.f32 %v4508, %v4692
        %v4713 = vadd.f32 %v4509, %v4694
        %v4714 = vadd.f32 %v4510, %v4696
        %v4715 = vadd.f32 %v4511, %v4698
        %4716 = vst [vmem:[%s404] sm:$0xff] %v4700
        %4717 = vst [vmem:[%s404 + $0x8] sm:$0xff] %v4701
        %4718 = vst [vmem:[%s404 + $0x10] sm:$0xff] %v4702
        %4719 = vst [vmem:[%s404 + $0x18] sm:$0xff] %v4703
        %4720 = vst [vmem:[%s404 + $0x20] sm:$0xff] %v4704
        %4721 = vst [vmem:[%s404 + $0x28] sm:$0xff] %v4705
        %4722 = vst [vmem:[%s404 + $0x30] sm:$0xff] %v4706
        %4723 = vst [vmem:[%s404 + $0x38] sm:$0xff] %v4707
        %4724 = vst [vmem:[%s404 + $0x40] sm:$0xff] %v4708
        %4725 = vst [vmem:[%s404 + $0x48] sm:$0xff] %v4709
        %4726 = vst [vmem:[%s404 + $0x50] sm:$0xff] %v4710
        %4727 = vst [vmem:[%s404 + $0x58] sm:$0xff] %v4711
        %4728 = vst [vmem:[%s404 + $0x60] sm:$0xff] %v4712
        %4729 = vst [vmem:[%s404 + $0x68] sm:$0xff] %v4713
        %4730 = vst [vmem:[%s404 + $0x70] sm:$0xff] %v4714
        %4731 = vst [vmem:[%s404 + $0x78] sm:$0xff] %v4715
        %s4732 = sand.u32 %s272, 1
        %s4733 = scalar_lea.sflag [#allocation8], %s4732
        %s4734 = sand.u32 %s272, 1
        %s4735 = smul.addr %s4734, 128
        %s4736 = scalar_lea.vmem [#allocation9], %s4735
        // Predicated region
        $region69: #{_lambda_.1} parent=63 // pred_check
          %p4737 = pneg %p282
        $region70: #{_lambda_.1} parent=63 // pred_check_branch
          %4739 = sbr.rel (%p4737) target = $region72
        $region71: #{_lambda_.1} parent=63 // pred_region
          %s4741 = ssub.s32 2048, 2048
          %4742 = vsyncadd %s4733, %s4741
          %s4743 = smul.addr %s28, 16
          %s4744 = smul.addr %s4743, 128
          %s4745 = scalar_lea.hbm %s11, %s4744
          %s4746 = sshll.u32 %s4736, 4
          %s4747 = int_to_ptr.vmem [resolvable:$true] %s4746
          %4752 = dma.vmem_to_hbm [thread:$0]  %s4747, 2048, %s4745, %s4733, 256, 256, 16
        $region72: #{_lambda_.1} parent=63 // pred_fallthru
          _
      $region64: #{_lambda_.1} parent=5 // pred_fallthru
        _
      %p4753 = scmp.le.s32.totalorder 2, %s23
      // Predicated region
      $region73: #{_lambda_.1} parent=5 // pred_check
        %p4754 = pneg %p4753
      $region74: #{_lambda_.1} parent=5 // pred_check_branch
        %4756 = sbr.rel (%p4754) target = $region76
      $region75: #{_lambda_.1} parent=5 // pred_region
        %s4757 = ssub.s32 %s23, 2
        // Predicated region
        $region77: #{_lambda_.1} parent=75 // pred_check
          %p4758 = pneg %p288
        $region78: #{_lambda_.1} parent=75 // pred_check_branch
          %4760 = sbr.rel (%p4758) target = $region80
        $region79: #{_lambda_.1} parent=75 // pred_region
          %s4761 = sand.u32 %s273, 1
          %s4762 = scalar_lea.sflag [#allocation8], %s4761
          %s4763 = sand.u32 %s273, 1
          %s4764 = smul.addr %s4763, 128
          %s4765 = scalar_lea.vmem [#allocation9], %s4764
          %4766 = dma.done %s4762, 2048
        $region80: #{_lambda_.1} parent=75 // pred_fallthru
          _
      $region76: #{_lambda_.1} parent=5 // pred_fallthru
        _
    $region6: #{_lambda_.1} parent=1 // loop_footer
      %s27 = sadd.s32 1, %s23
    $region7: #{_lambda_.1} parent=1 // loop_footer_branch
      %22 = sbr.rel target = $region3
    $region8: #{_lambda_.1} parent=1 // loop_exit
      _
    %4767 = vsyncpa [#allocation7], 1
    %s4768 = scalar_lea.sflag [#allocation7], 1
    %4769 = vsyncpa %s4768, 1
    %4770 = vsyncpa [#allocation8], 1
    %s4771 = scalar_lea.sflag [#allocation8], 1
    %4772 = vsyncpa %s4771, 1

</llo_original>
